<compile_context>
chip_gen: v5e
topology: v5e:2x2
jax: 0.10.0
libtpu: 0.0.40
codegen_flags: <defaults>
</compile_context>

<pallas_src>
import functools
import math

import jax
import jax.numpy as jnp
from jax import lax
from jax.experimental import pallas as pl
from jax.experimental.pallas import tpu as pltpu


# rows of the packed (13, d) vector-parameter table
_B_SA_O, _B_CA_Q, _B_CA_QP, _B_CA_KP, _B_CA_QS, _B_CA_O, _B_FF2 = range(7)
_G1, _BE1, _G2, _BE2, _G3, _BE3 = range(7, 13)
# planes of the packed (6, d, d) weight stack
_W_SA_O, _W_CA_Q, _W_CA_QP, _W_CA_KP, _W_CA_QS, _W_CA_O = range(6)


# ------------------------------ fused kernel --------------------------------

def _decoder_layer_kernel(
    tgt_ref, qpos_ref, mem_ref, pos_ref, qsine_ref, attn_mask_ref, pad_ref,
    w_dd_ref, b_d_ref,
    w_sat_ref, b_sat_ref, w_sap_ref, b_sap_ref,
    w_kcv_ref, b_kcv_ref, w_lvl_ref, b_lvl_ref,
    w_ff1_ref, b_ff1_ref, w_ff2_ref,
    out_ref, wret_ref,
    *, nhead, level_starts, level_sizes, use_qpos, eps):
  f32 = jnp.float32
  bf16 = jnp.bfloat16
  nq, d = tgt_ref.shape[1], tgt_ref.shape[2]
  hd = d // nhead
  inv_nhead = 1.0 / nhead

  def mm(a, w):  # a @ w with bf16 MXU operands, f32 accumulation
    return jnp.dot(a.astype(bf16), w.astype(bf16), preferred_element_type=f32)

  def mm_t(a, b):  # a @ b.T (contract last dims), bf16 operands, f32 acc
    return lax.dot_general(a.astype(bf16), b.astype(bf16),
                           (((1,), (1,)), ((), ())),
                           preferred_element_type=f32)

  def softmax_rows(s):
    m = jnp.max(s, axis=-1, keepdims=True)
    p = jnp.exp(s - m)
    return p * pl.reciprocal(jnp.sum(p, axis=-1, keepdims=True), approx=True)

  def bvec(i):
    return b_d_ref[i:i + 1, :]

  def layer_norm(x, gi, bi):
    mu = jnp.mean(x, axis=-1, keepdims=True)
    xc = x - mu
    var = jnp.mean(xc * xc, axis=-1, keepdims=True)
    return xc * lax.rsqrt(var + eps) * bvec(gi) + bvec(bi)

  x_t = tgt_ref[0]           # (nq, d) bf16
  x_qp = qpos_ref[0]         # (nq, d) bf16

  # -------- self-attention stage (packed projections) --------
  pt = mm(x_t, w_sat_ref[...]) + b_sat_ref[...]     # [q_content | k_content | v]
  pp = mm(x_qp, w_sap_ref[...]) + b_sap_ref[...]    # [q_pos | k_pos]
  q = pt[:, :d] + pp[:, :d]                          # (nq, d) f32, unscaled
  k = (pt[:, d:2 * d] + pp[:, d:2 * d]).astype(bf16)
  v = pt[:, 2 * d:3 * d].astype(bf16)

  # level attention weights from the (pre-norm1, unscaled) self-attn query
  lvl_w = softmax_rows(mm(q, w_lvl_ref[...]) + b_lvl_ref[...])   # (nq, nlvl)

  # scale folded into the query once
  q_sc = (q * (1.0 / math.sqrt(hd))).astype(bf16)

  # per-head attention -> concatenated context, then ONE K=d out-proj GEMM
  ctx_parts = []
  for h in range(nhead):                              # static unroll over heads
    sl = slice(h * hd, (h + 1) * hd)
    p = softmax_rows(mm_t(q_sc[:, sl], k[:, sl]))     # (nq, nq)
    ctx_parts.append(mm(p, v[:, sl]))                 # (nq, hd)
  ctx = jnp.concatenate(ctx_parts, axis=-1)           # (nq, d)
  tgt2 = mm(ctx, w_dd_ref[_W_SA_O]) + bvec(_B_SA_O)   # hoisted self_attn.out_proj
  # TODO(synk): tgt_mask / tgt_key_padding_mask (DN denoising-group self-attn
  # mask) are not supported; assumed None.
  tgt1 = layer_norm(x_t.astype(f32) + tgt2, _G1, _BE1)   # norm1(tgt + dropout1(tgt2))

  # -------- cross-attention stage --------
  ca_scale = 1.0 / math.sqrt(2 * hd)                  # embed dim is 2*d in cross-attn
  qc = mm(tgt1, w_dd_ref[_W_CA_Q]) + bvec(_B_CA_Q)
  kcv = mm(mem_ref[0], w_kcv_ref[...]) + b_kcv_ref[...]   # [k_content | v]  (hw, 2d)
  kp = mm(pos_ref[0], w_dd_ref[_W_CA_KP]) + bvec(_B_CA_KP)
  qs = ((mm(qsine_ref[0], w_dd_ref[_W_CA_QS]) + bvec(_B_CA_QS)) * ca_scale).astype(bf16)
  if use_qpos:                                        # static (is_first / keep_query_pos)
    qp2 = mm(x_qp, w_dd_ref[_W_CA_QP]) + bvec(_B_CA_QP)
    cq = ((qc + qp2) * ca_scale).astype(bf16)
    ck = (kcv[:, :d] + kp).astype(bf16)
  else:
    cq = (qc * ca_scale).astype(bf16)
    ck = kcv[:, :d].astype(bf16)
  cv = kcv[:, d:2 * d].astype(bf16)
  kp_b = kp.astype(bf16)

  attn_mask = attn_mask_ref[...]                      # (nq, hw) additive, batch-invariant
  pad_row = pad_ref[0]                                # (1, hw) additive padding bias

  ca_ctx = jnp.zeros((nq, d), f32)                    # level-weighted context accumulator
  for li, (st, ln) in enumerate(zip(level_starts, level_sizes)):   # static levels
    k_l = ck[st:st + ln, :]
    kp_l = kp_b[st:st + ln, :]
    v_l = cv[st:st + ln, :]
    bias_l = attn_mask[:, st:st + ln] + pad_row[:, st:st + ln]     # (nq, ln)
    parts = []
    for h in range(nhead):
      sl = slice(h * hd, (h + 1) * hd)
      # score of the concatenated [content | positional] head = sum of two dots
      s = mm_t(cq[:, sl], k_l[:, sl]) + mm_t(qs[:, sl], kp_l[:, sl]) + bias_l
      p = softmax_rows(s)
      if li == 0:                                     # averaged weights, level 0 only,
        pw = p * inv_nhead                            # accumulated straight into wret_ref
        if h == 0:
          wret_ref[0] = pw.astype(wret_ref.dtype)
        else:
          wret_ref[0] = wret_ref[0] + pw.astype(wret_ref.dtype)
      parts.append(mm(p, v_l[:, sl]))                 # (nq, hd)
    ctx_l = jnp.concatenate(parts, axis=-1)           # (nq, d)
    ca_ctx = ca_ctx + lvl_w[:, li:li + 1] * ctx_l

  # ONE hoisted ca_out_v_proj GEMM: sum_l w_l*(ctx_l@W + b) == (sum_l w_l*ctx_l)@W + b
  # because softmax level weights sum to 1 per query.
  ca_out = mm(ca_ctx, w_dd_ref[_W_CA_O]) + bvec(_B_CA_O)
  tgt2n = layer_norm(tgt1 + ca_out, _G2, _BE2)        # norm2

  # -------- FFN --------
  h1 = jnp.maximum(mm(tgt2n, w_ff1_ref[...]) + b_ff1_ref[...], 0.0)
  y2 = mm(h1, w_ff2_ref[...]) + bvec(_B_FF2)
  out_ref[0] = layer_norm(tgt2n + y2, _G3, _BE3).astype(out_ref.dtype)  # norm3
  # TODO(synk): flash-style key (hw) tiling of cross-attention for very large
  # multi-scale memories is not implemented; current kernel keeps the per-batch
  # (hw, d) memory/pos blocks resident (bf16) which is fine at typical DETR
  # sizes but should be tiled for hw >> 10k on v7x.


# --------------------------- parameter packing -------------------------------

def pack_params(params):
  """Pack per-module (in,out) weights into concatenated bf16 GEMM operands and
  stacked f32 bias / LayerNorm tables (done once, outside the forward)."""
  bf16, f32 = jnp.bfloat16, jnp.float32

  def cat_w(names):
    return jnp.concatenate([params[n][0] for n in names], axis=1).astype(bf16)

  def cat_b(names):
    return jnp.concatenate([params[n][1] for n in names])[None, :].astype(f32)

  return {
      'w_sat': cat_w(['sa_qcontent_proj', 'sa_kcontent_proj', 'sa_v_proj']),
      'b_sat': cat_b(['sa_qcontent_proj', 'sa_kcontent_proj', 'sa_v_proj']),
      'w_sap': cat_w(['sa_qpos_proj', 'sa_kpos_proj']),
      'b_sap': cat_b(['sa_qpos_proj', 'sa_kpos_proj']),
      'w_kcv': cat_w(['ca_kcontent_proj', 'ca_v_proj']),
      'b_kcv': cat_b(['ca_kcontent_proj', 'ca_v_proj']),
      'w_dd': jnp.stack([params[n][0] for n in
                         ['self_attn_out_proj', 'ca_qcontent_proj', 'ca_qpos_proj',
                          'ca_kpos_proj', 'ca_qpos_sine_proj', 'ca_out_v_proj']]
                        ).astype(bf16),
      'b_d': jnp.stack([params['self_attn_out_proj'][1], params['ca_qcontent_proj'][1],
                        params['ca_qpos_proj'][1], params['ca_kpos_proj'][1],
                        params['ca_qpos_sine_proj'][1], params['ca_out_v_proj'][1],
                        params['linear2'][1],
                        params['norm1'][0], params['norm1'][1],
                        params['norm2'][0], params['norm2'][1],
                        params['norm3'][0], params['norm3'][1]]).astype(f32),
      'w_lvl': params['lvl_attn'][0].astype(bf16),
      'b_lvl': params['lvl_attn'][1][None, :].astype(f32),
      'w_ff1': params['linear1'][0].astype(bf16),
      'b_ff1': params['linear1'][1][None, :].astype(f32),
      'w_ff2': params['linear2'][0].astype(bf16),
  }


# ------------------------------- forward pass --------------------------------

@functools.partial(
    jax.jit,
    static_argnames=('level_start_index', 'nhead', 'is_first', 'keep_query_pos'))
def multi_scale_decoder_layer_forward(packed, tgt, memory, memory_key_padding_mask,
                                      memory_mask_list, pos, query_pos,
                                      query_sine_embed, level_start_index, nhead,
                                      is_first=False, keep_query_pos=False):
  nq, bs, d = tgt.shape
  hw = memory.shape[0]
  nlvl = len(memory_mask_list)
  dff = packed['w_ff1'].shape[1]
  starts = tuple(int(s) for s in level_start_index)
  sizes = tuple((starts[i + 1] if i + 1 < nlvl else hw) - starts[i]
                for i in range(nlvl))
  use_qpos = bool(is_first or keep_query_pos)

  bf16 = jnp.bfloat16
  # sequence-major (L, B, D) -> batch-major (B, L, D); activations fed as bf16
  # (they are only used as MXU operands; LN/residual math is f32 in-kernel)
  tgt_b = jnp.transpose(tgt, (1, 0, 2)).astype(bf16)
  qpos_b = jnp.transpose(query_pos, (1, 0, 2)).astype(bf16)
  mem_b = jnp.transpose(memory, (1, 0, 2)).astype(bf16)
  pos_b = jnp.transpose(pos, (1, 0, 2)).astype(bf16)
  qsine_b = jnp.transpose(query_sine_embed, (1, 0, 2)).astype(bf16)

  # batch-invariant additive per-level attention mask, concatenated along keys.
  # TODO(synk): boolean attn masks (True = disallow) are not converted to -inf;
  # masks are assumed to already be additive float biases (as in the reference
  # call site that passes float memory_mask[idx]).
  attn_mask_full = jnp.concatenate(
      [m.astype(jnp.float32) for m in memory_mask_list], axis=1)        # (nq, hw)
  # per-batch key-padding additive bias (bs, 1, hw) — broadcast over q & heads in-kernel
  pad_bias = jnp.where(memory_key_padding_mask,
                       jnp.float32(-1e30), jnp.float32(0.0))[:, None, :]

  kernel = functools.partial(
      _decoder_layer_kernel, nhead=nhead, level_starts=starts, level_sizes=sizes,
      use_qpos=use_qpos, eps=1e-5)

  def dspec(L, D):
    return pl.BlockSpec((1, L, D), lambda b: (b, 0, 0))

  def wspec2(r, c):
    return pl.BlockSpec((r, c), lambda b: (0, 0))

  def wspec3(a, r, c):
    return pl.BlockSpec((a, r, c), lambda b: (0, 0, 0))

  in_specs = [
      dspec(nq, d), dspec(nq, d), dspec(hw, d), dspec(hw, d), dspec(nq, d),
      wspec2(nq, hw),                                   # additive level mask (batch-invariant)
      pl.BlockSpec((1, 1, hw), lambda b: (b, 0, 0)),    # key-padding bias
      wspec3(6, d, d), wspec2(13, d),
      wspec2(d, 3 * d), wspec2(1, 3 * d),
      wspec2(d, 2 * d), wspec2(1, 2 * d),
      wspec2(d, 2 * d), wspec2(1, 2 * d),
      wspec2(d, nlvl), wspec2(1, nlvl),
      wspec2(d, dff), wspec2(1, dff),
      wspec2(dff, d),
  ]
  out_specs = (dspec(nq, d), dspec(nq, sizes[0]))
  out_shape = (jax.ShapeDtypeStruct((bs, nq, d), jnp.float32),
               jax.ShapeDtypeStruct((bs, nq, sizes[0]), jnp.float32))

  args = (tgt_b, qpos_b, mem_b, pos_b, qsine_b, attn_mask_full, pad_bias,
          packed['w_dd'], packed['b_d'],
          packed['w_sat'], packed['b_sat'], packed['w_sap'], packed['b_sap'],
          packed['w_kcv'], packed['b_kcv'], packed['w_lvl'], packed['b_lvl'],
          packed['w_ff1'], packed['b_ff1'], packed['w_ff2'])

  # rough cost hint for XLA scheduling around the custom call
  hd = d // nhead
  flops = 2 * bs * (
      nq * d * (3 * d) + nq * d * (2 * d) + nq * d * nlvl
      + nhead * (2 * nq * nq * hd) + nq * d * d          # self-attn + out-proj
      + nq * d * d * (2 if use_qpos else 1)              # ca_q (+ ca_qpos)
      + hw * d * (2 * d) + hw * d * d + nq * d * d       # kcv, kpos, qsine projections
      + nhead * (3 * nq * hw * hd) + nq * d * d          # cross-attn + out-proj
      + 2 * nq * d * dff)                                # FFN
  transcendentals = bs * (nhead * nq * nq + nhead * nq * hw + nq * nlvl)
  bytes_accessed = sum(int(a.size) * a.dtype.itemsize for a in args)
  bytes_accessed += (bs * nq * d + bs * nq * sizes[0]) * 4

  out_b, weight_return = pl.pallas_call(
      kernel,
      grid=(bs,),
      in_specs=in_specs,
      out_specs=out_specs,
      out_shape=out_shape,
      compiler_params=pltpu.CompilerParams(
          dimension_semantics=("parallel",),
          vmem_limit_bytes=64 * 1024 * 1024),
      cost_estimate=pl.CostEstimate(flops=flops, transcendentals=transcendentals,
                                    bytes_accessed=bytes_accessed),
  )(*args)

  tgt_out = jnp.transpose(out_b, (1, 0, 2))    # back to (nq, bs, d)
  return tgt_out, weight_return


# ------------------------------ parameter init -------------------------------

def init_params(key, d_model, dff, nlvl):
  # weights stored as (in, out); bias as (out,)
  names = ['sa_qcontent_proj', 'sa_qpos_proj', 'sa_kcontent_proj', 'sa_kpos_proj',
           'sa_v_proj', 'self_attn_out_proj',
           'ca_qcontent_proj', 'ca_qpos_proj', 'ca_kcontent_proj', 'ca_kpos_proj',
           'ca_v_proj', 'ca_qpos_sine_proj', 'ca_out_v_proj']
  keys = jax.random.split(key, len(names) + 3)
  params = {}
  for n, k in zip(names, keys[:len(names)]):
    kw, kb = jax.random.split(k)
    params[n] = (0.05 * jax.random.normal(kw, (d_model, d_model), jnp.float32),
                 0.05 * jax.random.normal(kb, (d_model,), jnp.float32))
  # nn.init.constant_(self.ca_out_v_proj.bias, 0.0)
  params['ca_out_v_proj'] = (params['ca_out_v_proj'][0],
                             jnp.zeros((d_model,), jnp.float32))
  k_lvl, k_l1, k_l2 = keys[len(names):]
  params['lvl_attn'] = (0.05 * jax.random.normal(k_lvl, (d_model, nlvl), jnp.float32),
                        jnp.zeros((nlvl,), jnp.float32))
  params['linear1'] = (0.05 * jax.random.normal(k_l1, (d_model, dff), jnp.float32),
                       jnp.zeros((dff,), jnp.float32))
  params['linear2'] = (0.05 * jax.random.normal(k_l2, (dff, d_model), jnp.float32),
                       jnp.zeros((d_model,), jnp.float32))
  for n in ['norm1', 'norm2', 'norm3']:
    params[n] = (jnp.ones((d_model,), jnp.float32), jnp.zeros((d_model,), jnp.float32))
  return params


# ---------------------------------- main --------------------------------------

if __name__ == "__main__":
  d_model, nhead, dff, nlvl = 32, 4, 64, 2
  nq, bs = 8, 2
  level_sizes = (16, 8)
  hw = sum(level_sizes)
  level_start_index = (0, 16)

  root = jax.random.PRNGKey(0)
  kp, k1, k2, k3, k4, k5 = jax.random.split(root, 6)
  params = init_params(kp, d_model, dff, nlvl)
  packed = pack_params(params)

  tgt = jax.random.normal(k1, (nq, bs, d_model), jnp.float32)
  memory = jax.random.normal(k2, (hw, bs, d_model), jnp.float32)
  pos = jax.random.normal(k3, (hw, bs, d_model), jnp.float32)
  query_pos = jax.random.normal(k4, (nq, bs, d_model), jnp.float32)
  query_sine_embed = jax.random.normal(k5, (nq, bs, d_model), jnp.float32)

  # key padding mask: mask two keys of the first level for batch 1
  memory_key_padding_mask = jnp.zeros((bs, hw), jnp.bool_).at[1, 14:16].set(True)
  # per-level additive attention masks (zeros = no masking), matching memory_mask[idx]
  memory_mask_list = [jnp.zeros((nq, ls), jnp.float32) for ls in level_sizes]

  out, weight_return = multi_scale_decoder_layer_forward(
      packed, tgt, memory, memory_key_padding_mask, memory_mask_list,
      pos, query_pos, query_sine_embed,
      level_start_index=level_start_index, nhead=nhead,
      is_first=True, keep_query_pos=False)

  out = jax.block_until_ready(out)
  weight_return = jax.block_until_ready(weight_return)
  assert out.shape == (nq, bs, d_model)
  assert weight_return.shape == (bs, nq, level_sizes[0])
  assert bool(jnp.all(jnp.isfinite(out)))
  assert bool(jnp.all(jnp.isfinite(weight_return)))
  # TODO(synk): dropout layers are identity (inference mode); training-time RNG dropout not implemented.
  print("KERNEL_OK")
</pallas_src>

<mosaic_0001>
module attributes {stable_mosaic.version = 11 : i64} {
  func.func @_decoder_layer_kernel(%arg0: i32, %arg1: memref<1x8x32xbf16, #tpu.memory_space<vmem>>, %arg2: memref<1x8x32xbf16, #tpu.memory_space<vmem>>, %arg3: memref<1x24x32xbf16, #tpu.memory_space<vmem>>, %arg4: memref<1x24x32xbf16, #tpu.memory_space<vmem>>, %arg5: memref<1x8x32xbf16, #tpu.memory_space<vmem>>, %arg6: memref<8x24xf32, #tpu.memory_space<vmem>>, %arg7: memref<1x1x24xf32, #tpu.memory_space<vmem>>, %arg8: memref<6x32x32xbf16, #tpu.memory_space<vmem>>, %arg9: memref<13x32xf32, #tpu.memory_space<vmem>>, %arg10: memref<32x96xbf16, #tpu.memory_space<vmem>>, %arg11: memref<1x96xf32, #tpu.memory_space<vmem>>, %arg12: memref<32x64xbf16, #tpu.memory_space<vmem>>, %arg13: memref<1x64xf32, #tpu.memory_space<vmem>>, %arg14: memref<32x64xbf16, #tpu.memory_space<vmem>>, %arg15: memref<1x64xf32, #tpu.memory_space<vmem>>, %arg16: memref<32x2xbf16, #tpu.memory_space<vmem>>, %arg17: memref<1x2xf32, #tpu.memory_space<vmem>>, %arg18: memref<32x64xbf16, #tpu.memory_space<vmem>>, %arg19: memref<1x64xf32, #tpu.memory_space<vmem>>, %arg20: memref<64x32xbf16, #tpu.memory_space<vmem>>, %arg21: memref<1x8x32xf32, #tpu.memory_space<vmem>>, %arg22: memref<1x8x16xf32, #tpu.memory_space<vmem>>) attributes {dimension_semantics = [#tpu.dimension_semantics<parallel>], iteration_bounds = array<i64: 2>, scalar_prefetch = 0 : i64, scratch_operands = 0 : i64, tpu.core_type = #tpu.core_type<tc>, window_params = [{transform_indices = @transform_0, window_bounds = array<i64: 1, 8, 32>}, {transform_indices = @transform_1, window_bounds = array<i64: 1, 8, 32>}, {transform_indices = @transform_2, window_bounds = array<i64: 1, 24, 32>}, {transform_indices = @transform_3, window_bounds = array<i64: 1, 24, 32>}, {transform_indices = @transform_4, window_bounds = array<i64: 1, 8, 32>}, {pipeline_mode = #tpu.pipeline_mode<synchronous>, transform_indices = @transform_5, window_bounds = array<i64: 8, 24>}, {transform_indices = @transform_6, window_bounds = array<i64: 1, 1, 24>}, {pipeline_mode = #tpu.pipeline_mode<synchronous>, transform_indices = @transform_7, window_bounds = array<i64: 6, 32, 32>}, {pipeline_mode = #tpu.pipeline_mode<synchronous>, transform_indices = @transform_8, window_bounds = array<i64: 13, 32>}, {pipeline_mode = #tpu.pipeline_mode<synchronous>, transform_indices = @transform_9, window_bounds = array<i64: 32, 96>}, {pipeline_mode = #tpu.pipeline_mode<synchronous>, transform_indices = @transform_10, window_bounds = array<i64: 1, 96>}, {pipeline_mode = #tpu.pipeline_mode<synchronous>, transform_indices = @transform_11, window_bounds = array<i64: 32, 64>}, {pipeline_mode = #tpu.pipeline_mode<synchronous>, transform_indices = @transform_12, window_bounds = array<i64: 1, 64>}, {pipeline_mode = #tpu.pipeline_mode<synchronous>, transform_indices = @transform_13, window_bounds = array<i64: 32, 64>}, {pipeline_mode = #tpu.pipeline_mode<synchronous>, transform_indices = @transform_14, window_bounds = array<i64: 1, 64>}, {pipeline_mode = #tpu.pipeline_mode<synchronous>, transform_indices = @transform_15, window_bounds = array<i64: 32, 2>}, {pipeline_mode = #tpu.pipeline_mode<synchronous>, transform_indices = @transform_16, window_bounds = array<i64: 1, 2>}, {pipeline_mode = #tpu.pipeline_mode<synchronous>, transform_indices = @transform_17, window_bounds = array<i64: 32, 64>}, {pipeline_mode = #tpu.pipeline_mode<synchronous>, transform_indices = @transform_18, window_bounds = array<i64: 1, 64>}, {pipeline_mode = #tpu.pipeline_mode<synchronous>, transform_indices = @transform_19, window_bounds = array<i64: 64, 32>}, {transform_indices = @transform_20, window_bounds = array<i64: 1, 8, 32>}, {transform_indices = @transform_21, window_bounds = array<i64: 1, 8, 16>}]} {
    %c0 = arith.constant 0 : index
    %c0_0 = arith.constant 0 : index
    %c0_1 = arith.constant 0 : index
    %0 = vector.load %arg1[%c0, %c0_0, %c0_1] : memref<1x8x32xbf16, #tpu.memory_space<vmem>>, vector<1x8x32xbf16>
    %1 = vector.shape_cast %0 : vector<1x8x32xbf16> to vector<8x32xbf16>
    %c0_2 = arith.constant 0 : index
    %c0_3 = arith.constant 0 : index
    %c0_4 = arith.constant 0 : index
    %2 = vector.load %arg2[%c0_2, %c0_3, %c0_4] : memref<1x8x32xbf16, #tpu.memory_space<vmem>>, vector<1x8x32xbf16>
    %3 = vector.shape_cast %2 : vector<1x8x32xbf16> to vector<8x32xbf16>
    %c0_5 = arith.constant 0 : index
    %c0_6 = arith.constant 0 : index
    %4 = vector.load %arg10[%c0_5, %c0_6] : memref<32x96xbf16, #tpu.memory_space<vmem>>, vector<32x96xbf16>
    %cst = arith.constant dense<0.000000e+00> : vector<8x96xf32>
    %5 = tpu.matmul %1, %4, %cst {dimension_numbers = #tpu.dot_dimension_numbers<[1], [0], [0], [1], [0, 0, 1, 1], [], []>} : vector<8x32xbf16>, vector<32x96xbf16>, vector<8x96xf32> -> vector<8x96xf32>
    %c0_7 = arith.constant 0 : index
    %c0_8 = arith.constant 0 : index
    %6 = vector.load %arg11[%c0_7, %c0_8] : memref<1x96xf32, #tpu.memory_space<vmem>>, vector<1x96xf32>
    %7 = vector.broadcast %6 : vector<1x96xf32> to vector<8x96xf32>
    %8 = arith.addf %5, %7 : vector<8x96xf32>
    %c0_9 = arith.constant 0 : index
    %c0_10 = arith.constant 0 : index
    %9 = vector.load %arg12[%c0_9, %c0_10] : memref<32x64xbf16, #tpu.memory_space<vmem>>, vector<32x64xbf16>
    %cst_11 = arith.constant dense<0.000000e+00> : vector<8x64xf32>
    %10 = tpu.matmul %3, %9, %cst_11 {dimension_numbers = #tpu.dot_dimension_numbers<[1], [0], [0], [1], [0, 0, 1, 1], [], []>} : vector<8x32xbf16>, vector<32x64xbf16>, vector<8x64xf32> -> vector<8x64xf32>
    %c0_12 = arith.constant 0 : index
    %c0_13 = arith.constant 0 : index
    %11 = vector.load %arg13[%c0_12, %c0_13] : memref<1x64xf32, #tpu.memory_space<vmem>>, vector<1x64xf32>
    %12 = vector.broadcast %11 : vector<1x64xf32> to vector<8x64xf32>
    %13 = arith.addf %10, %12 : vector<8x64xf32>
    %14 = vector.extract_strided_slice %8 {offsets = [0, 0], sizes = [8, 32], strides = [1, 1]} : vector<8x96xf32> to vector<8x32xf32>
    %15 = vector.extract_strided_slice %13 {offsets = [0, 0], sizes = [8, 32], strides = [1, 1]} : vector<8x64xf32> to vector<8x32xf32>
    %16 = arith.addf %14, %15 : vector<8x32xf32>
    %17 = vector.extract_strided_slice %8 {offsets = [0, 32], sizes = [8, 32], strides = [1, 1]} : vector<8x96xf32> to vector<8x32xf32>
    %18 = vector.extract_strided_slice %13 {offsets = [0, 32], sizes = [8, 32], strides = [1, 1]} : vector<8x64xf32> to vector<8x32xf32>
    %19 = arith.addf %17, %18 : vector<8x32xf32>
    %20 = arith.truncf %19 : vector<8x32xf32> to vector<8x32xbf16>
    %21 = vector.extract_strided_slice %8 {offsets = [0, 64], sizes = [8, 32], strides = [1, 1]} : vector<8x96xf32> to vector<8x32xf32>
    %22 = arith.truncf %21 : vector<8x32xf32> to vector<8x32xbf16>
    %c0_14 = arith.constant 0 : index
    %c0_15 = arith.constant 0 : index
    %23 = vector.load %arg16[%c0_14, %c0_15] : memref<32x2xbf16, #tpu.memory_space<vmem>>, vector<32x2xbf16>
    %24 = arith.truncf %16 : vector<8x32xf32> to vector<8x32xbf16>
    %cst_16 = arith.constant dense<0.000000e+00> : vector<8x2xf32>
    %25 = tpu.matmul %24, %23, %cst_16 {dimension_numbers = #tpu.dot_dimension_numbers<[1], [0], [0], [1], [0, 0, 1, 1], [], []>} : vector<8x32xbf16>, vector<32x2xbf16>, vector<8x2xf32> -> vector<8x2xf32>
    %c0_17 = arith.constant 0 : index
    %c0_18 = arith.constant 0 : index
    %26 = vector.load %arg17[%c0_17, %c0_18] : memref<1x2xf32, #tpu.memory_space<vmem>>, vector<1x2xf32>
    %27 = vector.broadcast %26 : vector<1x2xf32> to vector<8x2xf32>
    %28 = arith.addf %25, %27 : vector<8x2xf32>
    %cst_19 = arith.constant dense<0xFF800000> : vector<8xf32>
    %29 = vector.multi_reduction <maximumf>, %28, %cst_19 [1] : vector<8x2xf32> to vector<8xf32>
    %30 = vector.shape_cast %29 : vector<8xf32> to vector<8x1xf32>
    %31 = vector.broadcast %30 : vector<8x1xf32> to vector<8x2xf32>
    %32 = arith.subf %28, %31 : vector<8x2xf32>
    %33 = math.exp %32 : vector<8x2xf32>
    %cst_20 = arith.constant dense<0.000000e+00> : vector<8xf32>
    %34 = vector.multi_reduction <add>, %33, %cst_20 [1] : vector<8x2xf32> to vector<8xf32>
    %35 = vector.shape_cast %34 : vector<8xf32> to vector<8x1xf32>
    %36 = tpu.reciprocal %35 {approx = true} : vector<8x1xf32> -> vector<8x1xf32>
    %37 = vector.broadcast %36 : vector<8x1xf32> to vector<8x2xf32>
    %38 = arith.mulf %33, %37 : vector<8x2xf32>
    %cst_21 = arith.constant 0.353553385 : f32
    %39 = vector.broadcast %cst_21 : f32 to vector<8x32xf32>
    %40 = arith.mulf %16, %39 : vector<8x32xf32>
    %41 = arith.truncf %40 : vector<8x32xf32> to vector<8x32xbf16>
    %42 = vector.extract_strided_slice %41 {offsets = [0, 0], sizes = [8, 8], strides = [1, 1]} : vector<8x32xbf16> to vector<8x8xbf16>
    %43 = vector.extract_strided_slice %20 {offsets = [0, 0], sizes = [8, 8], strides = [1, 1]} : vector<8x32xbf16> to vector<8x8xbf16>
    %cst_22 = arith.constant dense<0.000000e+00> : vector<8x8xf32>
    %44 = tpu.matmul %42, %43, %cst_22 {dimension_numbers = #tpu.dot_dimension_numbers<[1], [1], [0], [0], [0, 0, 1, 0], [], []>} : vector<8x8xbf16>, vector<8x8xbf16>, vector<8x8xf32> -> vector<8x8xf32>
    %cst_23 = arith.constant dense<0xFF800000> : vector<8xf32>
    %45 = vector.multi_reduction <maximumf>, %44, %cst_23 [1] : vector<8x8xf32> to vector<8xf32>
    %46 = vector.shape_cast %45 : vector<8xf32> to vector<8x1xf32>
    %47 = vector.broadcast %46 : vector<8x1xf32> to vector<8x8xf32>
    %48 = arith.subf %44, %47 : vector<8x8xf32>
    %49 = math.exp %48 : vector<8x8xf32>
    %cst_24 = arith.constant dense<0.000000e+00> : vector<8xf32>
    %50 = vector.multi_reduction <add>, %49, %cst_24 [1] : vector<8x8xf32> to vector<8xf32>
    %51 = vector.shape_cast %50 : vector<8xf32> to vector<8x1xf32>
    %52 = tpu.reciprocal %51 {approx = true} : vector<8x1xf32> -> vector<8x1xf32>
    %53 = vector.broadcast %52 : vector<8x1xf32> to vector<8x8xf32>
    %54 = arith.mulf %49, %53 : vector<8x8xf32>
    %55 = vector.extract_strided_slice %22 {offsets = [0, 0], sizes = [8, 8], strides = [1, 1]} : vector<8x32xbf16> to vector<8x8xbf16>
    %56 = arith.truncf %54 : vector<8x8xf32> to vector<8x8xbf16>
    %cst_25 = arith.constant dense<0.000000e+00> : vector<8x8xf32>
    %57 = tpu.matmul %56, %55, %cst_25 {dimension_numbers = #tpu.dot_dimension_numbers<[1], [0], [0], [1], [0, 0, 1, 1], [], []>} : vector<8x8xbf16>, vector<8x8xbf16>, vector<8x8xf32> -> vector<8x8xf32>
    %58 = vector.extract_strided_slice %41 {offsets = [0, 8], sizes = [8, 8], strides = [1, 1]} : vector<8x32xbf16> to vector<8x8xbf16>
    %59 = vector.extract_strided_slice %20 {offsets = [0, 8], sizes = [8, 8], strides = [1, 1]} : vector<8x32xbf16> to vector<8x8xbf16>
    %cst_26 = arith.constant dense<0.000000e+00> : vector<8x8xf32>
    %60 = tpu.matmul %58, %59, %cst_26 {dimension_numbers = #tpu.dot_dimension_numbers<[1], [1], [0], [0], [0, 0, 1, 0], [], []>} : vector<8x8xbf16>, vector<8x8xbf16>, vector<8x8xf32> -> vector<8x8xf32>
    %cst_27 = arith.constant dense<0xFF800000> : vector<8xf32>
    %61 = vector.multi_reduction <maximumf>, %60, %cst_27 [1] : vector<8x8xf32> to vector<8xf32>
    %62 = vector.shape_cast %61 : vector<8xf32> to vector<8x1xf32>
    %63 = vector.broadcast %62 : vector<8x1xf32> to vector<8x8xf32>
    %64 = arith.subf %60, %63 : vector<8x8xf32>
    %65 = math.exp %64 : vector<8x8xf32>
    %cst_28 = arith.constant dense<0.000000e+00> : vector<8xf32>
    %66 = vector.multi_reduction <add>, %65, %cst_28 [1] : vector<8x8xf32> to vector<8xf32>
    %67 = vector.shape_cast %66 : vector<8xf32> to vector<8x1xf32>
    %68 = tpu.reciprocal %67 {approx = true} : vector<8x1xf32> -> vector<8x1xf32>
    %69 = vector.broadcast %68 : vector<8x1xf32> to vector<8x8xf32>
    %70 = arith.mulf %65, %69 : vector<8x8xf32>
    %71 = vector.extract_strided_slice %22 {offsets = [0, 8], sizes = [8, 8], strides = [1, 1]} : vector<8x32xbf16> to vector<8x8xbf16>
    %72 = arith.truncf %70 : vector<8x8xf32> to vector<8x8xbf16>
    %cst_29 = arith.constant dense<0.000000e+00> : vector<8x8xf32>
    %73 = tpu.matmul %72, %71, %cst_29 {dimension_numbers = #tpu.dot_dimension_numbers<[1], [0], [0], [1], [0, 0, 1, 1], [], []>} : vector<8x8xbf16>, vector<8x8xbf16>, vector<8x8xf32> -> vector<8x8xf32>
    %74 = vector.extract_strided_slice %41 {offsets = [0, 16], sizes = [8, 8], strides = [1, 1]} : vector<8x32xbf16> to vector<8x8xbf16>
    %75 = vector.extract_strided_slice %20 {offsets = [0, 16], sizes = [8, 8], strides = [1, 1]} : vector<8x32xbf16> to vector<8x8xbf16>
    %cst_30 = arith.constant dense<0.000000e+00> : vector<8x8xf32>
    %76 = tpu.matmul %74, %75, %cst_30 {dimension_numbers = #tpu.dot_dimension_numbers<[1], [1], [0], [0], [0, 0, 1, 0], [], []>} : vector<8x8xbf16>, vector<8x8xbf16>, vector<8x8xf32> -> vector<8x8xf32>
    %cst_31 = arith.constant dense<0xFF800000> : vector<8xf32>
    %77 = vector.multi_reduction <maximumf>, %76, %cst_31 [1] : vector<8x8xf32> to vector<8xf32>
    %78 = vector.shape_cast %77 : vector<8xf32> to vector<8x1xf32>
    %79 = vector.broadcast %78 : vector<8x1xf32> to vector<8x8xf32>
    %80 = arith.subf %76, %79 : vector<8x8xf32>
    %81 = math.exp %80 : vector<8x8xf32>
    %cst_32 = arith.constant dense<0.000000e+00> : vector<8xf32>
    %82 = vector.multi_reduction <add>, %81, %cst_32 [1] : vector<8x8xf32> to vector<8xf32>
    %83 = vector.shape_cast %82 : vector<8xf32> to vector<8x1xf32>
    %84 = tpu.reciprocal %83 {approx = true} : vector<8x1xf32> -> vector<8x1xf32>
    %85 = vector.broadcast %84 : vector<8x1xf32> to vector<8x8xf32>
    %86 = arith.mulf %81, %85 : vector<8x8xf32>
    %87 = vector.extract_strided_slice %22 {offsets = [0, 16], sizes = [8, 8], strides = [1, 1]} : vector<8x32xbf16> to vector<8x8xbf16>
    %88 = arith.truncf %86 : vector<8x8xf32> to vector<8x8xbf16>
    %cst_33 = arith.constant dense<0.000000e+00> : vector<8x8xf32>
    %89 = tpu.matmul %88, %87, %cst_33 {dimension_numbers = #tpu.dot_dimension_numbers<[1], [0], [0], [1], [0, 0, 1, 1], [], []>} : vector<8x8xbf16>, vector<8x8xbf16>, vector<8x8xf32> -> vector<8x8xf32>
    %90 = vector.extract_strided_slice %41 {offsets = [0, 24], sizes = [8, 8], strides = [1, 1]} : vector<8x32xbf16> to vector<8x8xbf16>
    %91 = vector.extract_strided_slice %20 {offsets = [0, 24], sizes = [8, 8], strides = [1, 1]} : vector<8x32xbf16> to vector<8x8xbf16>
    %cst_34 = arith.constant dense<0.000000e+00> : vector<8x8xf32>
    %92 = tpu.matmul %90, %91, %cst_34 {dimension_numbers = #tpu.dot_dimension_numbers<[1], [1], [0], [0], [0, 0, 1, 0], [], []>} : vector<8x8xbf16>, vector<8x8xbf16>, vector<8x8xf32> -> vector<8x8xf32>
    %cst_35 = arith.constant dense<0xFF800000> : vector<8xf32>
    %93 = vector.multi_reduction <maximumf>, %92, %cst_35 [1] : vector<8x8xf32> to vector<8xf32>
    %94 = vector.shape_cast %93 : vector<8xf32> to vector<8x1xf32>
    %95 = vector.broadcast %94 : vector<8x1xf32> to vector<8x8xf32>
    %96 = arith.subf %92, %95 : vector<8x8xf32>
    %97 = math.exp %96 : vector<8x8xf32>
    %cst_36 = arith.constant dense<0.000000e+00> : vector<8xf32>
    %98 = vector.multi_reduction <add>, %97, %cst_36 [1] : vector<8x8xf32> to vector<8xf32>
    %99 = vector.shape_cast %98 : vector<8xf32> to vector<8x1xf32>
    %100 = tpu.reciprocal %99 {approx = true} : vector<8x1xf32> -> vector<8x1xf32>
    %101 = vector.broadcast %100 : vector<8x1xf32> to vector<8x8xf32>
    %102 = arith.mulf %97, %101 : vector<8x8xf32>
    %103 = vector.extract_strided_slice %22 {offsets = [0, 24], sizes = [8, 8], strides = [1, 1]} : vector<8x32xbf16> to vector<8x8xbf16>
    %104 = arith.truncf %102 : vector<8x8xf32> to vector<8x8xbf16>
    %cst_37 = arith.constant dense<0.000000e+00> : vector<8x8xf32>
    %105 = tpu.matmul %104, %103, %cst_37 {dimension_numbers = #tpu.dot_dimension_numbers<[1], [0], [0], [1], [0, 0, 1, 1], [], []>} : vector<8x8xbf16>, vector<8x8xbf16>, vector<8x8xf32> -> vector<8x8xf32>
    %106 = tpu.concatenate %57, %73, %89, %105 in 1 : vector<8x8xf32>, vector<8x8xf32>, vector<8x8xf32>, vector<8x8xf32> -> vector<8x32xf32>
    %c0_38 = arith.constant 0 : index
    %c0_39 = arith.constant 0 : index
    %c0_40 = arith.constant 0 : index
    %107 = vector.load %arg8[%c0_38, %c0_39, %c0_40] : memref<6x32x32xbf16, #tpu.memory_space<vmem>>, vector<1x32x32xbf16>
    %108 = vector.shape_cast %107 : vector<1x32x32xbf16> to vector<32x32xbf16>
    %109 = arith.truncf %106 : vector<8x32xf32> to vector<8x32xbf16>
    %cst_41 = arith.constant dense<0.000000e+00> : vector<8x32xf32>
    %110 = tpu.matmul %109, %108, %cst_41 {dimension_numbers = #tpu.dot_dimension_numbers<[1], [0], [0], [1], [0, 0, 1, 1], [], []>} : vector<8x32xbf16>, vector<32x32xbf16>, vector<8x32xf32> -> vector<8x32xf32>
    %c0_42 = arith.constant 0 : index
    %c0_43 = arith.constant 0 : index
    %111 = vector.load %arg9[%c0_42, %c0_43] : memref<13x32xf32, #tpu.memory_space<vmem>>, vector<1x32xf32>
    %112 = vector.broadcast %111 : vector<1x32xf32> to vector<8x32xf32>
    %113 = arith.addf %110, %112 : vector<8x32xf32>
    %114 = arith.extf %1 : vector<8x32xbf16> to vector<8x32xf32>
    %115 = arith.addf %114, %113 : vector<8x32xf32>
    %cst_44 = arith.constant dense<0.000000e+00> : vector<8xf32>
    %116 = vector.multi_reduction <add>, %115, %cst_44 [1] : vector<8x32xf32> to vector<8xf32>
    %117 = vector.shape_cast %116 : vector<8xf32> to vector<8x1xf32>
    %cst_45 = arith.constant 3.200000e+01 : f32
    %118 = vector.broadcast %cst_45 : f32 to vector<8x1xf32>
    %119 = arith.divf %117, %118 : vector<8x1xf32>
    %120 = vector.broadcast %119 : vector<8x1xf32> to vector<8x32xf32>
    %121 = arith.subf %115, %120 : vector<8x32xf32>
    %122 = arith.mulf %121, %121 : vector<8x32xf32>
    %cst_46 = arith.constant dense<0.000000e+00> : vector<8xf32>
    %123 = vector.multi_reduction <add>, %122, %cst_46 [1] : vector<8x32xf32> to vector<8xf32>
    %124 = vector.shape_cast %123 : vector<8xf32> to vector<8x1xf32>
    %cst_47 = arith.constant 3.200000e+01 : f32
    %125 = vector.broadcast %cst_47 : f32 to vector<8x1xf32>
    %126 = arith.divf %124, %125 : vector<8x1xf32>
    %cst_48 = arith.constant 9.99999974E-6 : f32
    %127 = vector.broadcast %cst_48 : f32 to vector<8x1xf32>
    %128 = arith.addf %126, %127 : vector<8x1xf32>
    %129 = math.rsqrt %128 : vector<8x1xf32>
    %130 = vector.broadcast %129 : vector<8x1xf32> to vector<8x32xf32>
    %131 = arith.mulf %121, %130 : vector<8x32xf32>
    %c7 = arith.constant 7 : index
    %c0_49 = arith.constant 0 : index
    %132 = vector.load %arg9[%c7, %c0_49] : memref<13x32xf32, #tpu.memory_space<vmem>>, vector<1x32xf32>
    %133 = vector.broadcast %132 : vector<1x32xf32> to vector<8x32xf32>
    %134 = arith.mulf %131, %133 : vector<8x32xf32>
    %c8 = arith.constant 8 : index
    %c0_50 = arith.constant 0 : index
    %135 = vector.load %arg9[%c8, %c0_50] : memref<13x32xf32, #tpu.memory_space<vmem>>, vector<1x32xf32>
    %136 = vector.broadcast %135 : vector<1x32xf32> to vector<8x32xf32>
    %137 = arith.addf %134, %136 : vector<8x32xf32>
    %c1 = arith.constant 1 : index
    %c0_51 = arith.constant 0 : index
    %c0_52 = arith.constant 0 : index
    %138 = vector.load %arg8[%c1, %c0_51, %c0_52] : memref<6x32x32xbf16, #tpu.memory_space<vmem>>, vector<1x32x32xbf16>
    %139 = vector.shape_cast %138 : vector<1x32x32xbf16> to vector<32x32xbf16>
    %140 = arith.truncf %137 : vector<8x32xf32> to vector<8x32xbf16>
    %cst_53 = arith.constant dense<0.000000e+00> : vector<8x32xf32>
    %141 = tpu.matmul %140, %139, %cst_53 {dimension_numbers = #tpu.dot_dimension_numbers<[1], [0], [0], [1], [0, 0, 1, 1], [], []>} : vector<8x32xbf16>, vector<32x32xbf16>, vector<8x32xf32> -> vector<8x32xf32>
    %c1_54 = arith.constant 1 : index
    %c0_55 = arith.constant 0 : index
    %142 = vector.load %arg9[%c1_54, %c0_55] : memref<13x32xf32, #tpu.memory_space<vmem>>, vector<1x32xf32>
    %143 = vector.broadcast %142 : vector<1x32xf32> to vector<8x32xf32>
    %144 = arith.addf %141, %143 : vector<8x32xf32>
    %c0_56 = arith.constant 0 : index
    %c0_57 = arith.constant 0 : index
    %c0_58 = arith.constant 0 : index
    %145 = vector.load %arg3[%c0_56, %c0_57, %c0_58] : memref<1x24x32xbf16, #tpu.memory_space<vmem>>, vector<1x24x32xbf16>
    %146 = vector.shape_cast %145 : vector<1x24x32xbf16> to vector<24x32xbf16>
    %c0_59 = arith.constant 0 : index
    %c0_60 = arith.constant 0 : index
    %147 = vector.load %arg14[%c0_59, %c0_60] : memref<32x64xbf16, #tpu.memory_space<vmem>>, vector<32x64xbf16>
    %cst_61 = arith.constant dense<0.000000e+00> : vector<24x64xf32>
    %148 = tpu.matmul %146, %147, %cst_61 {dimension_numbers = #tpu.dot_dimension_numbers<[1], [0], [0], [1], [0, 0, 1, 1], [], []>} : vector<24x32xbf16>, vector<32x64xbf16>, vector<24x64xf32> -> vector<24x64xf32>
    %c0_62 = arith.constant 0 : index
    %c0_63 = arith.constant 0 : index
    %149 = vector.load %arg15[%c0_62, %c0_63] : memref<1x64xf32, #tpu.memory_space<vmem>>, vector<1x64xf32>
    %150 = vector.broadcast %149 : vector<1x64xf32> to vector<24x64xf32>
    %151 = arith.addf %148, %150 : vector<24x64xf32>
    %c0_64 = arith.constant 0 : index
    %c0_65 = arith.constant 0 : index
    %c0_66 = arith.constant 0 : index
    %152 = vector.load %arg4[%c0_64, %c0_65, %c0_66] : memref<1x24x32xbf16, #tpu.memory_space<vmem>>, vector<1x24x32xbf16>
    %153 = vector.shape_cast %152 : vector<1x24x32xbf16> to vector<24x32xbf16>
    %c3 = arith.constant 3 : index
    %c0_67 = arith.constant 0 : index
    %c0_68 = arith.constant 0 : index
    %154 = vector.load %arg8[%c3, %c0_67, %c0_68] : memref<6x32x32xbf16, #tpu.memory_space<vmem>>, vector<1x32x32xbf16>
    %155 = vector.shape_cast %154 : vector<1x32x32xbf16> to vector<32x32xbf16>
    %cst_69 = arith.constant dense<0.000000e+00> : vector<24x32xf32>
    %156 = tpu.matmul %153, %155, %cst_69 {dimension_numbers = #tpu.dot_dimension_numbers<[1], [0], [0], [1], [0, 0, 1, 1], [], []>} : vector<24x32xbf16>, vector<32x32xbf16>, vector<24x32xf32> -> vector<24x32xf32>
    %c3_70 = arith.constant 3 : index
    %c0_71 = arith.constant 0 : index
    %157 = vector.load %arg9[%c3_70, %c0_71] : memref<13x32xf32, #tpu.memory_space<vmem>>, vector<1x32xf32>
    %158 = vector.broadcast %157 : vector<1x32xf32> to vector<24x32xf32>
    %159 = arith.addf %156, %158 : vector<24x32xf32>
    %c0_72 = arith.constant 0 : index
    %c0_73 = arith.constant 0 : index
    %c0_74 = arith.constant 0 : index
    %160 = vector.load %arg5[%c0_72, %c0_73, %c0_74] : memref<1x8x32xbf16, #tpu.memory_space<vmem>>, vector<1x8x32xbf16>
    %161 = vector.shape_cast %160 : vector<1x8x32xbf16> to vector<8x32xbf16>
    %c4 = arith.constant 4 : index
    %c0_75 = arith.constant 0 : index
    %c0_76 = arith.constant 0 : index
    %162 = vector.load %arg8[%c4, %c0_75, %c0_76] : memref<6x32x32xbf16, #tpu.memory_space<vmem>>, vector<1x32x32xbf16>
    %163 = vector.shape_cast %162 : vector<1x32x32xbf16> to vector<32x32xbf16>
    %cst_77 = arith.constant dense<0.000000e+00> : vector<8x32xf32>
    %164 = tpu.matmul %161, %163, %cst_77 {dimension_numbers = #tpu.dot_dimension_numbers<[1], [0], [0], [1], [0, 0, 1, 1], [], []>} : vector<8x32xbf16>, vector<32x32xbf16>, vector<8x32xf32> -> vector<8x32xf32>
    %c4_78 = arith.constant 4 : index
    %c0_79 = arith.constant 0 : index
    %165 = vector.load %arg9[%c4_78, %c0_79] : memref<13x32xf32, #tpu.memory_space<vmem>>, vector<1x32xf32>
    %166 = vector.broadcast %165 : vector<1x32xf32> to vector<8x32xf32>
    %167 = arith.addf %164, %166 : vector<8x32xf32>
    %cst_80 = arith.constant 2.500000e-01 : f32
    %168 = vector.broadcast %cst_80 : f32 to vector<8x32xf32>
    %169 = arith.mulf %167, %168 : vector<8x32xf32>
    %170 = arith.truncf %169 : vector<8x32xf32> to vector<8x32xbf16>
    %c2 = arith.constant 2 : index
    %c0_81 = arith.constant 0 : index
    %c0_82 = arith.constant 0 : index
    %171 = vector.load %arg8[%c2, %c0_81, %c0_82] : memref<6x32x32xbf16, #tpu.memory_space<vmem>>, vector<1x32x32xbf16>
    %172 = vector.shape_cast %171 : vector<1x32x32xbf16> to vector<32x32xbf16>
    %cst_83 = arith.constant dense<0.000000e+00> : vector<8x32xf32>
    %173 = tpu.matmul %3, %172, %cst_83 {dimension_numbers = #tpu.dot_dimension_numbers<[1], [0], [0], [1], [0, 0, 1, 1], [], []>} : vector<8x32xbf16>, vector<32x32xbf16>, vector<8x32xf32> -> vector<8x32xf32>
    %c2_84 = arith.constant 2 : index
    %c0_85 = arith.constant 0 : index
    %174 = vector.load %arg9[%c2_84, %c0_85] : memref<13x32xf32, #tpu.memory_space<vmem>>, vector<1x32xf32>
    %175 = vector.broadcast %174 : vector<1x32xf32> to vector<8x32xf32>
    %176 = arith.addf %173, %175 : vector<8x32xf32>
    %177 = arith.addf %144, %176 : vector<8x32xf32>
    %cst_86 = arith.constant 2.500000e-01 : f32
    %178 = vector.broadcast %cst_86 : f32 to vector<8x32xf32>
    %179 = arith.mulf %177, %178 : vector<8x32xf32>
    %180 = arith.truncf %179 : vector<8x32xf32> to vector<8x32xbf16>
    %181 = vector.extract_strided_slice %151 {offsets = [0, 0], sizes = [24, 32], strides = [1, 1]} : vector<24x64xf32> to vector<24x32xf32>
    %182 = arith.addf %181, %159 : vector<24x32xf32>
    %183 = arith.truncf %182 : vector<24x32xf32> to vector<24x32xbf16>
    %184 = vector.extract_strided_slice %151 {offsets = [0, 32], sizes = [24, 32], strides = [1, 1]} : vector<24x64xf32> to vector<24x32xf32>
    %185 = arith.truncf %184 : vector<24x32xf32> to vector<24x32xbf16>
    %186 = arith.truncf %159 : vector<24x32xf32> to vector<24x32xbf16>
    %c0_87 = arith.constant 0 : index
    %c0_88 = arith.constant 0 : index
    %187 = vector.load %arg6[%c0_87, %c0_88] : memref<8x24xf32, #tpu.memory_space<vmem>>, vector<8x24xf32>
    %c0_89 = arith.constant 0 : index
    %c0_90 = arith.constant 0 : index
    %c0_91 = arith.constant 0 : index
    %188 = vector.load %arg7[%c0_89, %c0_90, %c0_91] : memref<1x1x24xf32, #tpu.memory_space<vmem>>, vector<1x1x24xf32>
    %189 = vector.shape_cast %188 : vector<1x1x24xf32> to vector<1x24xf32>
    %cst_92 = arith.constant 0.000000e+00 : f32
    %190 = vector.broadcast %cst_92 : f32 to vector<8x32xf32>
    %191 = vector.extract_strided_slice %183 {offsets = [0, 0], sizes = [16, 32], strides = [1, 1]} : vector<24x32xbf16> to vector<16x32xbf16>
    %192 = vector.extract_strided_slice %186 {offsets = [0, 0], sizes = [16, 32], strides = [1, 1]} : vector<24x32xbf16> to vector<16x32xbf16>
    %193 = vector.extract_strided_slice %185 {offsets = [0, 0], sizes = [16, 32], strides = [1, 1]} : vector<24x32xbf16> to vector<16x32xbf16>
    %194 = vector.extract_strided_slice %187 {offsets = [0, 0], sizes = [8, 16], strides = [1, 1]} : vector<8x24xf32> to vector<8x16xf32>
    %195 = vector.extract_strided_slice %189 {offsets = [0, 0], sizes = [1, 16], strides = [1, 1]} : vector<1x24xf32> to vector<1x16xf32>
    %196 = vector.broadcast %195 : vector<1x16xf32> to vector<8x16xf32>
    %197 = arith.addf %194, %196 : vector<8x16xf32>
    %198 = vector.extract_strided_slice %180 {offsets = [0, 0], sizes = [8, 8], strides = [1, 1]} : vector<8x32xbf16> to vector<8x8xbf16>
    %199 = vector.extract_strided_slice %191 {offsets = [0, 0], sizes = [16, 8], strides = [1, 1]} : vector<16x32xbf16> to vector<16x8xbf16>
    %cst_93 = arith.constant dense<0.000000e+00> : vector<8x16xf32>
    %200 = tpu.matmul %198, %199, %cst_93 {dimension_numbers = #tpu.dot_dimension_numbers<[1], [1], [0], [0], [0, 0, 1, 0], [], []>} : vector<8x8xbf16>, vector<16x8xbf16>, vector<8x16xf32> -> vector<8x16xf32>
    %201 = vector.extract_strided_slice %170 {offsets = [0, 0], sizes = [8, 8], strides = [1, 1]} : vector<8x32xbf16> to vector<8x8xbf16>
    %202 = vector.extract_strided_slice %192 {offsets = [0, 0], sizes = [16, 8], strides = [1, 1]} : vector<16x32xbf16> to vector<16x8xbf16>
    %cst_94 = arith.constant dense<0.000000e+00> : vector<8x16xf32>
    %203 = tpu.matmul %201, %202, %cst_94 {dimension_numbers = #tpu.dot_dimension_numbers<[1], [1], [0], [0], [0, 0, 1, 0], [], []>} : vector<8x8xbf16>, vector<16x8xbf16>, vector<8x16xf32> -> vector<8x16xf32>
    %204 = arith.addf %200, %203 : vector<8x16xf32>
    %205 = arith.addf %204, %197 : vector<8x16xf32>
    %cst_95 = arith.constant dense<0xFF800000> : vector<8xf32>
    %206 = vector.multi_reduction <maximumf>, %205, %cst_95 [1] : vector<8x16xf32> to vector<8xf32>
    %207 = vector.shape_cast %206 : vector<8xf32> to vector<8x1xf32>
    %208 = vector.broadcast %207 : vector<8x1xf32> to vector<8x16xf32>
    %209 = arith.subf %205, %208 : vector<8x16xf32>
    %210 = math.exp %209 : vector<8x16xf32>
    %cst_96 = arith.constant dense<0.000000e+00> : vector<8xf32>
    %211 = vector.multi_reduction <add>, %210, %cst_96 [1] : vector<8x16xf32> to vector<8xf32>
    %212 = vector.shape_cast %211 : vector<8xf32> to vector<8x1xf32>
    %213 = tpu.reciprocal %212 {approx = true} : vector<8x1xf32> -> vector<8x1xf32>
    %214 = vector.broadcast %213 : vector<8x1xf32> to vector<8x16xf32>
    %215 = arith.mulf %210, %214 : vector<8x16xf32>
    %cst_97 = arith.constant 2.500000e-01 : f32
    %216 = vector.broadcast %cst_97 : f32 to vector<8x16xf32>
    %217 = arith.mulf %215, %216 : vector<8x16xf32>
    %c0_98 = arith.constant 0 : index
    %c0_99 = arith.constant 0 : index
    %c0_100 = arith.constant 0 : index
    %218 = vector.load %arg22[%c0_98, %c0_99, %c0_100] : memref<1x8x16xf32, #tpu.memory_space<vmem>>, vector<1x8x16xf32>
    %219 = vector.shape_cast %218 : vector<1x8x16xf32> to vector<8x16xf32>
    %220 = vector.shape_cast %217 : vector<8x16xf32> to vector<1x8x16xf32>
    tpu.vector_store %arg22[%c0_98, %c0_99, %c0_100], %220 {strides = array<i32>} : memref<1x8x16xf32, #tpu.memory_space<vmem>>, vector<1x8x16xf32>,
    %221 = vector.extract_strided_slice %193 {offsets = [0, 0], sizes = [16, 8], strides = [1, 1]} : vector<16x32xbf16> to vector<16x8xbf16>
    %222 = arith.truncf %215 : vector<8x16xf32> to vector<8x16xbf16>
    %cst_101 = arith.constant dense<0.000000e+00> : vector<8x8xf32>
    %223 = tpu.matmul %222, %221, %cst_101 {dimension_numbers = #tpu.dot_dimension_numbers<[1], [0], [0], [1], [0, 0, 1, 1], [], []>} : vector<8x16xbf16>, vector<16x8xbf16>, vector<8x8xf32> -> vector<8x8xf32>
    %224 = vector.extract_strided_slice %180 {offsets = [0, 8], sizes = [8, 8], strides = [1, 1]} : vector<8x32xbf16> to vector<8x8xbf16>
    %225 = vector.extract_strided_slice %191 {offsets = [0, 8], sizes = [16, 8], strides = [1, 1]} : vector<16x32xbf16> to vector<16x8xbf16>
    %cst_102 = arith.constant dense<0.000000e+00> : vector<8x16xf32>
    %226 = tpu.matmul %224, %225, %cst_102 {dimension_numbers = #tpu.dot_dimension_numbers<[1], [1], [0], [0], [0, 0, 1, 0], [], []>} : vector<8x8xbf16>, vector<16x8xbf16>, vector<8x16xf32> -> vector<8x16xf32>
    %227 = vector.extract_strided_slice %170 {offsets = [0, 8], sizes = [8, 8], strides = [1, 1]} : vector<8x32xbf16> to vector<8x8xbf16>
    %228 = vector.extract_strided_slice %192 {offsets = [0, 8], sizes = [16, 8], strides = [1, 1]} : vector<16x32xbf16> to vector<16x8xbf16>
    %cst_103 = arith.constant dense<0.000000e+00> : vector<8x16xf32>
    %229 = tpu.matmul %227, %228, %cst_103 {dimension_numbers = #tpu.dot_dimension_numbers<[1], [1], [0], [0], [0, 0, 1, 0], [], []>} : vector<8x8xbf16>, vector<16x8xbf16>, vector<8x16xf32> -> vector<8x16xf32>
    %230 = arith.addf %226, %229 : vector<8x16xf32>
    %231 = arith.addf %230, %197 : vector<8x16xf32>
    %cst_104 = arith.constant dense<0xFF800000> : vector<8xf32>
    %232 = vector.multi_reduction <maximumf>, %231, %cst_104 [1] : vector<8x16xf32> to vector<8xf32>
    %233 = vector.shape_cast %232 : vector<8xf32> to vector<8x1xf32>
    %234 = vector.broadcast %233 : vector<8x1xf32> to vector<8x16xf32>
    %235 = arith.subf %231, %234 : vector<8x16xf32>
    %236 = math.exp %235 : vector<8x16xf32>
    %cst_105 = arith.constant dense<0.000000e+00> : vector<8xf32>
    %237 = vector.multi_reduction <add>, %236, %cst_105 [1] : vector<8x16xf32> to vector<8xf32>
    %238 = vector.shape_cast %237 : vector<8xf32> to vector<8x1xf32>
    %239 = tpu.reciprocal %238 {approx = true} : vector<8x1xf32> -> vector<8x1xf32>
    %240 = vector.broadcast %239 : vector<8x1xf32> to vector<8x16xf32>
    %241 = arith.mulf %236, %240 : vector<8x16xf32>
    %cst_106 = arith.constant 2.500000e-01 : f32
    %242 = vector.broadcast %cst_106 : f32 to vector<8x16xf32>
    %243 = arith.mulf %241, %242 : vector<8x16xf32>
    %c0_107 = arith.constant 0 : index
    %c0_108 = arith.constant 0 : index
    %c0_109 = arith.constant 0 : index
    %244 = vector.load %arg22[%c0_107, %c0_108, %c0_109] : memref<1x8x16xf32, #tpu.memory_space<vmem>>, vector<1x8x16xf32>
    %245 = vector.shape_cast %244 : vector<1x8x16xf32> to vector<8x16xf32>
    %246 = arith.addf %245, %243 : vector<8x16xf32>
    %c0_110 = arith.constant 0 : index
    %c0_111 = arith.constant 0 : index
    %c0_112 = arith.constant 0 : index
    %247 = vector.load %arg22[%c0_110, %c0_111, %c0_112] : memref<1x8x16xf32, #tpu.memory_space<vmem>>, vector<1x8x16xf32>
    %248 = vector.shape_cast %247 : vector<1x8x16xf32> to vector<8x16xf32>
    %249 = vector.shape_cast %246 : vector<8x16xf32> to vector<1x8x16xf32>
    tpu.vector_store %arg22[%c0_110, %c0_111, %c0_112], %249 {strides = array<i32>} : memref<1x8x16xf32, #tpu.memory_space<vmem>>, vector<1x8x16xf32>,
    %250 = vector.extract_strided_slice %193 {offsets = [0, 8], sizes = [16, 8], strides = [1, 1]} : vector<16x32xbf16> to vector<16x8xbf16>
    %251 = arith.truncf %241 : vector<8x16xf32> to vector<8x16xbf16>
    %cst_113 = arith.constant dense<0.000000e+00> : vector<8x8xf32>
    %252 = tpu.matmul %251, %250, %cst_113 {dimension_numbers = #tpu.dot_dimension_numbers<[1], [0], [0], [1], [0, 0, 1, 1], [], []>} : vector<8x16xbf16>, vector<16x8xbf16>, vector<8x8xf32> -> vector<8x8xf32>
    %253 = vector.extract_strided_slice %180 {offsets = [0, 16], sizes = [8, 8], strides = [1, 1]} : vector<8x32xbf16> to vector<8x8xbf16>
    %254 = vector.extract_strided_slice %191 {offsets = [0, 16], sizes = [16, 8], strides = [1, 1]} : vector<16x32xbf16> to vector<16x8xbf16>
    %cst_114 = arith.constant dense<0.000000e+00> : vector<8x16xf32>
    %255 = tpu.matmul %253, %254, %cst_114 {dimension_numbers = #tpu.dot_dimension_numbers<[1], [1], [0], [0], [0, 0, 1, 0], [], []>} : vector<8x8xbf16>, vector<16x8xbf16>, vector<8x16xf32> -> vector<8x16xf32>
    %256 = vector.extract_strided_slice %170 {offsets = [0, 16], sizes = [8, 8], strides = [1, 1]} : vector<8x32xbf16> to vector<8x8xbf16>
    %257 = vector.extract_strided_slice %192 {offsets = [0, 16], sizes = [16, 8], strides = [1, 1]} : vector<16x32xbf16> to vector<16x8xbf16>
    %cst_115 = arith.constant dense<0.000000e+00> : vector<8x16xf32>
    %258 = tpu.matmul %256, %257, %cst_115 {dimension_numbers = #tpu.dot_dimension_numbers<[1], [1], [0], [0], [0, 0, 1, 0], [], []>} : vector<8x8xbf16>, vector<16x8xbf16>, vector<8x16xf32> -> vector<8x16xf32>
    %259 = arith.addf %255, %258 : vector<8x16xf32>
    %260 = arith.addf %259, %197 : vector<8x16xf32>
    %cst_116 = arith.constant dense<0xFF800000> : vector<8xf32>
    %261 = vector.multi_reduction <maximumf>, %260, %cst_116 [1] : vector<8x16xf32> to vector<8xf32>
    %262 = vector.shape_cast %261 : vector<8xf32> to vector<8x1xf32>
    %263 = vector.broadcast %262 : vector<8x1xf32> to vector<8x16xf32>
    %264 = arith.subf %260, %263 : vector<8x16xf32>
    %265 = math.exp %264 : vector<8x16xf32>
    %cst_117 = arith.constant dense<0.000000e+00> : vector<8xf32>
    %266 = vector.multi_reduction <add>, %265, %cst_117 [1] : vector<8x16xf32> to vector<8xf32>
    %267 = vector.shape_cast %266 : vector<8xf32> to vector<8x1xf32>
    %268 = tpu.reciprocal %267 {approx = true} : vector<8x1xf32> -> vector<8x1xf32>
    %269 = vector.broadcast %268 : vector<8x1xf32> to vector<8x16xf32>
    %270 = arith.mulf %265, %269 : vector<8x16xf32>
    %cst_118 = arith.constant 2.500000e-01 : f32
    %271 = vector.broadcast %cst_118 : f32 to vector<8x16xf32>
    %272 = arith.mulf %270, %271 : vector<8x16xf32>
    %c0_119 = arith.constant 0 : index
    %c0_120 = arith.constant 0 : index
    %c0_121 = arith.constant 0 : index
    %273 = vector.load %arg22[%c0_119, %c0_120, %c0_121] : memref<1x8x16xf32, #tpu.memory_space<vmem>>, vector<1x8x16xf32>
    %274 = vector.shape_cast %273 : vector<1x8x16xf32> to vector<8x16xf32>
    %275 = arith.addf %274, %272 : vector<8x16xf32>
    %c0_122 = arith.constant 0 : index
    %c0_123 = arith.constant 0 : index
    %c0_124 = arith.constant 0 : index
    %276 = vector.load %arg22[%c0_122, %c0_123, %c0_124] : memref<1x8x16xf32, #tpu.memory_space<vmem>>, vector<1x8x16xf32>
    %277 = vector.shape_cast %276 : vector<1x8x16xf32> to vector<8x16xf32>
    %278 = vector.shape_cast %275 : vector<8x16xf32> to vector<1x8x16xf32>
    tpu.vector_store %arg22[%c0_122, %c0_123, %c0_124], %278 {strides = array<i32>} : memref<1x8x16xf32, #tpu.memory_space<vmem>>, vector<1x8x16xf32>,
    %279 = vector.extract_strided_slice %193 {offsets = [0, 16], sizes = [16, 8], strides = [1, 1]} : vector<16x32xbf16> to vector<16x8xbf16>
    %280 = arith.truncf %270 : vector<8x16xf32> to vector<8x16xbf16>
    %cst_125 = arith.constant dense<0.000000e+00> : vector<8x8xf32>
    %281 = tpu.matmul %280, %279, %cst_125 {dimension_numbers = #tpu.dot_dimension_numbers<[1], [0], [0], [1], [0, 0, 1, 1], [], []>} : vector<8x16xbf16>, vector<16x8xbf16>, vector<8x8xf32> -> vector<8x8xf32>
    %282 = vector.extract_strided_slice %180 {offsets = [0, 24], sizes = [8, 8], strides = [1, 1]} : vector<8x32xbf16> to vector<8x8xbf16>
    %283 = vector.extract_strided_slice %191 {offsets = [0, 24], sizes = [16, 8], strides = [1, 1]} : vector<16x32xbf16> to vector<16x8xbf16>
    %cst_126 = arith.constant dense<0.000000e+00> : vector<8x16xf32>
    %284 = tpu.matmul %282, %283, %cst_126 {dimension_numbers = #tpu.dot_dimension_numbers<[1], [1], [0], [0], [0, 0, 1, 0], [], []>} : vector<8x8xbf16>, vector<16x8xbf16>, vector<8x16xf32> -> vector<8x16xf32>
    %285 = vector.extract_strided_slice %170 {offsets = [0, 24], sizes = [8, 8], strides = [1, 1]} : vector<8x32xbf16> to vector<8x8xbf16>
    %286 = vector.extract_strided_slice %192 {offsets = [0, 24], sizes = [16, 8], strides = [1, 1]} : vector<16x32xbf16> to vector<16x8xbf16>
    %cst_127 = arith.constant dense<0.000000e+00> : vector<8x16xf32>
    %287 = tpu.matmul %285, %286, %cst_127 {dimension_numbers = #tpu.dot_dimension_numbers<[1], [1], [0], [0], [0, 0, 1, 0], [], []>} : vector<8x8xbf16>, vector<16x8xbf16>, vector<8x16xf32> -> vector<8x16xf32>
    %288 = arith.addf %284, %287 : vector<8x16xf32>
    %289 = arith.addf %288, %197 : vector<8x16xf32>
    %cst_128 = arith.constant dense<0xFF800000> : vector<8xf32>
    %290 = vector.multi_reduction <maximumf>, %289, %cst_128 [1] : vector<8x16xf32> to vector<8xf32>
    %291 = vector.shape_cast %290 : vector<8xf32> to vector<8x1xf32>
    %292 = vector.broadcast %291 : vector<8x1xf32> to vector<8x16xf32>
    %293 = arith.subf %289, %292 : vector<8x16xf32>
    %294 = math.exp %293 : vector<8x16xf32>
    %cst_129 = arith.constant dense<0.000000e+00> : vector<8xf32>
    %295 = vector.multi_reduction <add>, %294, %cst_129 [1] : vector<8x16xf32> to vector<8xf32>
    %296 = vector.shape_cast %295 : vector<8xf32> to vector<8x1xf32>
    %297 = tpu.reciprocal %296 {approx = true} : vector<8x1xf32> -> vector<8x1xf32>
    %298 = vector.broadcast %297 : vector<8x1xf32> to vector<8x16xf32>
    %299 = arith.mulf %294, %298 : vector<8x16xf32>
    %cst_130 = arith.constant 2.500000e-01 : f32
    %300 = vector.broadcast %cst_130 : f32 to vector<8x16xf32>
    %301 = arith.mulf %299, %300 : vector<8x16xf32>
    %c0_131 = arith.constant 0 : index
    %c0_132 = arith.constant 0 : index
    %c0_133 = arith.constant 0 : index
    %302 = vector.load %arg22[%c0_131, %c0_132, %c0_133] : memref<1x8x16xf32, #tpu.memory_space<vmem>>, vector<1x8x16xf32>
    %303 = vector.shape_cast %302 : vector<1x8x16xf32> to vector<8x16xf32>
    %304 = arith.addf %303, %301 : vector<8x16xf32>
    %c0_134 = arith.constant 0 : index
    %c0_135 = arith.constant 0 : index
    %c0_136 = arith.constant 0 : index
    %305 = vector.load %arg22[%c0_134, %c0_135, %c0_136] : memref<1x8x16xf32, #tpu.memory_space<vmem>>, vector<1x8x16xf32>
    %306 = vector.shape_cast %305 : vector<1x8x16xf32> to vector<8x16xf32>
    %307 = vector.shape_cast %304 : vector<8x16xf32> to vector<1x8x16xf32>
    tpu.vector_store %arg22[%c0_134, %c0_135, %c0_136], %307 {strides = array<i32>} : memref<1x8x16xf32, #tpu.memory_space<vmem>>, vector<1x8x16xf32>,
    %308 = vector.extract_strided_slice %193 {offsets = [0, 24], sizes = [16, 8], strides = [1, 1]} : vector<16x32xbf16> to vector<16x8xbf16>
    %309 = arith.truncf %299 : vector<8x16xf32> to vector<8x16xbf16>
    %cst_137 = arith.constant dense<0.000000e+00> : vector<8x8xf32>
    %310 = tpu.matmul %309, %308, %cst_137 {dimension_numbers = #tpu.dot_dimension_numbers<[1], [0], [0], [1], [0, 0, 1, 1], [], []>} : vector<8x16xbf16>, vector<16x8xbf16>, vector<8x8xf32> -> vector<8x8xf32>
    %311 = tpu.concatenate %223, %252, %281, %310 in 1 : vector<8x8xf32>, vector<8x8xf32>, vector<8x8xf32>, vector<8x8xf32> -> vector<8x32xf32>
    %312 = vector.extract_strided_slice %38 {offsets = [0, 0], sizes = [8, 1], strides = [1, 1]} : vector<8x2xf32> to vector<8x1xf32>
    %313 = vector.broadcast %312 : vector<8x1xf32> to vector<8x32xf32>
    %314 = arith.mulf %313, %311 : vector<8x32xf32>
    %315 = arith.addf %190, %314 : vector<8x32xf32>
    %316 = vector.extract_strided_slice %183 {offsets = [16, 0], sizes = [8, 32], strides = [1, 1]} : vector<24x32xbf16> to vector<8x32xbf16>
    %317 = vector.extract_strided_slice %186 {offsets = [16, 0], sizes = [8, 32], strides = [1, 1]} : vector<24x32xbf16> to vector<8x32xbf16>
    %318 = vector.extract_strided_slice %185 {offsets = [16, 0], sizes = [8, 32], strides = [1, 1]} : vector<24x32xbf16> to vector<8x32xbf16>
    %319 = vector.extract_strided_slice %187 {offsets = [0, 16], sizes = [8, 8], strides = [1, 1]} : vector<8x24xf32> to vector<8x8xf32>
    %320 = vector.extract_strided_slice %189 {offsets = [0, 16], sizes = [1, 8], strides = [1, 1]} : vector<1x24xf32> to vector<1x8xf32>
    %321 = vector.broadcast %320 : vector<1x8xf32> to vector<8x8xf32>
    %322 = arith.addf %319, %321 : vector<8x8xf32>
    %323 = vector.extract_strided_slice %180 {offsets = [0, 0], sizes = [8, 8], strides = [1, 1]} : vector<8x32xbf16> to vector<8x8xbf16>
    %324 = vector.extract_strided_slice %316 {offsets = [0, 0], sizes = [8, 8], strides = [1, 1]} : vector<8x32xbf16> to vector<8x8xbf16>
    %cst_138 = arith.constant dense<0.000000e+00> : vector<8x8xf32>
    %325 = tpu.matmul %323, %324, %cst_138 {dimension_numbers = #tpu.dot_dimension_numbers<[1], [1], [0], [0], [0, 0, 1, 0], [], []>} : vector<8x8xbf16>, vector<8x8xbf16>, vector<8x8xf32> -> vector<8x8xf32>
    %326 = vector.extract_strided_slice %170 {offsets = [0, 0], sizes = [8, 8], strides = [1, 1]} : vector<8x32xbf16> to vector<8x8xbf16>
    %327 = vector.extract_strided_slice %317 {offsets = [0, 0], sizes = [8, 8], strides = [1, 1]} : vector<8x32xbf16> to vector<8x8xbf16>
    %cst_139 = arith.constant dense<0.000000e+00> : vector<8x8xf32>
    %328 = tpu.matmul %326, %327, %cst_139 {dimension_numbers = #tpu.dot_dimension_numbers<[1], [1], [0], [0], [0, 0, 1, 0], [], []>} : vector<8x8xbf16>, vector<8x8xbf16>, vector<8x8xf32> -> vector<8x8xf32>
    %329 = arith.addf %325, %328 : vector<8x8xf32>
    %330 = arith.addf %329, %322 : vector<8x8xf32>
    %cst_140 = arith.constant dense<0xFF800000> : vector<8xf32>
    %331 = vector.multi_reduction <maximumf>, %330, %cst_140 [1] : vector<8x8xf32> to vector<8xf32>
    %332 = vector.shape_cast %331 : vector<8xf32> to vector<8x1xf32>
    %333 = vector.broadcast %332 : vector<8x1xf32> to vector<8x8xf32>
    %334 = arith.subf %330, %333 : vector<8x8xf32>
    %335 = math.exp %334 : vector<8x8xf32>
    %cst_141 = arith.constant dense<0.000000e+00> : vector<8xf32>
    %336 = vector.multi_reduction <add>, %335, %cst_141 [1] : vector<8x8xf32> to vector<8xf32>
    %337 = vector.shape_cast %336 : vector<8xf32> to vector<8x1xf32>
    %338 = tpu.reciprocal %337 {approx = true} : vector<8x1xf32> -> vector<8x1xf32>
    %339 = vector.broadcast %338 : vector<8x1xf32> to vector<8x8xf32>
    %340 = arith.mulf %335, %339 : vector<8x8xf32>
    %341 = vector.extract_strided_slice %318 {offsets = [0, 0], sizes = [8, 8], strides = [1, 1]} : vector<8x32xbf16> to vector<8x8xbf16>
    %342 = arith.truncf %340 : vector<8x8xf32> to vector<8x8xbf16>
    %cst_142 = arith.constant dense<0.000000e+00> : vector<8x8xf32>
    %343 = tpu.matmul %342, %341, %cst_142 {dimension_numbers = #tpu.dot_dimension_numbers<[1], [0], [0], [1], [0, 0, 1, 1], [], []>} : vector<8x8xbf16>, vector<8x8xbf16>, vector<8x8xf32> -> vector<8x8xf32>
    %344 = vector.extract_strided_slice %180 {offsets = [0, 8], sizes = [8, 8], strides = [1, 1]} : vector<8x32xbf16> to vector<8x8xbf16>
    %345 = vector.extract_strided_slice %316 {offsets = [0, 8], sizes = [8, 8], strides = [1, 1]} : vector<8x32xbf16> to vector<8x8xbf16>
    %cst_143 = arith.constant dense<0.000000e+00> : vector<8x8xf32>
    %346 = tpu.matmul %344, %345, %cst_143 {dimension_numbers = #tpu.dot_dimension_numbers<[1], [1], [0], [0], [0, 0, 1, 0], [], []>} : vector<8x8xbf16>, vector<8x8xbf16>, vector<8x8xf32> -> vector<8x8xf32>
    %347 = vector.extract_strided_slice %170 {offsets = [0, 8], sizes = [8, 8], strides = [1, 1]} : vector<8x32xbf16> to vector<8x8xbf16>
    %348 = vector.extract_strided_slice %317 {offsets = [0, 8], sizes = [8, 8], strides = [1, 1]} : vector<8x32xbf16> to vector<8x8xbf16>
    %cst_144 = arith.constant dense<0.000000e+00> : vector<8x8xf32>
    %349 = tpu.matmul %347, %348, %cst_144 {dimension_numbers = #tpu.dot_dimension_numbers<[1], [1], [0], [0], [0, 0, 1, 0], [], []>} : vector<8x8xbf16>, vector<8x8xbf16>, vector<8x8xf32> -> vector<8x8xf32>
    %350 = arith.addf %346, %349 : vector<8x8xf32>
    %351 = arith.addf %350, %322 : vector<8x8xf32>
    %cst_145 = arith.constant dense<0xFF800000> : vector<8xf32>
    %352 = vector.multi_reduction <maximumf>, %351, %cst_145 [1] : vector<8x8xf32> to vector<8xf32>
    %353 = vector.shape_cast %352 : vector<8xf32> to vector<8x1xf32>
    %354 = vector.broadcast %353 : vector<8x1xf32> to vector<8x8xf32>
    %355 = arith.subf %351, %354 : vector<8x8xf32>
    %356 = math.exp %355 : vector<8x8xf32>
    %cst_146 = arith.constant dense<0.000000e+00> : vector<8xf32>
    %357 = vector.multi_reduction <add>, %356, %cst_146 [1] : vector<8x8xf32> to vector<8xf32>
    %358 = vector.shape_cast %357 : vector<8xf32> to vector<8x1xf32>
    %359 = tpu.reciprocal %358 {approx = true} : vector<8x1xf32> -> vector<8x1xf32>
    %360 = vector.broadcast %359 : vector<8x1xf32> to vector<8x8xf32>
    %361 = arith.mulf %356, %360 : vector<8x8xf32>
    %362 = vector.extract_strided_slice %318 {offsets = [0, 8], sizes = [8, 8], strides = [1, 1]} : vector<8x32xbf16> to vector<8x8xbf16>
    %363 = arith.truncf %361 : vector<8x8xf32> to vector<8x8xbf16>
    %cst_147 = arith.constant dense<0.000000e+00> : vector<8x8xf32>
    %364 = tpu.matmul %363, %362, %cst_147 {dimension_numbers = #tpu.dot_dimension_numbers<[1], [0], [0], [1], [0, 0, 1, 1], [], []>} : vector<8x8xbf16>, vector<8x8xbf16>, vector<8x8xf32> -> vector<8x8xf32>
    %365 = vector.extract_strided_slice %180 {offsets = [0, 16], sizes = [8, 8], strides = [1, 1]} : vector<8x32xbf16> to vector<8x8xbf16>
    %366 = vector.extract_strided_slice %316 {offsets = [0, 16], sizes = [8, 8], strides = [1, 1]} : vector<8x32xbf16> to vector<8x8xbf16>
    %cst_148 = arith.constant dense<0.000000e+00> : vector<8x8xf32>
    %367 = tpu.matmul %365, %366, %cst_148 {dimension_numbers = #tpu.dot_dimension_numbers<[1], [1], [0], [0], [0, 0, 1, 0], [], []>} : vector<8x8xbf16>, vector<8x8xbf16>, vector<8x8xf32> -> vector<8x8xf32>
    %368 = vector.extract_strided_slice %170 {offsets = [0, 16], sizes = [8, 8], strides = [1, 1]} : vector<8x32xbf16> to vector<8x8xbf16>
    %369 = vector.extract_strided_slice %317 {offsets = [0, 16], sizes = [8, 8], strides = [1, 1]} : vector<8x32xbf16> to vector<8x8xbf16>
    %cst_149 = arith.constant dense<0.000000e+00> : vector<8x8xf32>
    %370 = tpu.matmul %368, %369, %cst_149 {dimension_numbers = #tpu.dot_dimension_numbers<[1], [1], [0], [0], [0, 0, 1, 0], [], []>} : vector<8x8xbf16>, vector<8x8xbf16>, vector<8x8xf32> -> vector<8x8xf32>
    %371 = arith.addf %367, %370 : vector<8x8xf32>
    %372 = arith.addf %371, %322 : vector<8x8xf32>
    %cst_150 = arith.constant dense<0xFF800000> : vector<8xf32>
    %373 = vector.multi_reduction <maximumf>, %372, %cst_150 [1] : vector<8x8xf32> to vector<8xf32>
    %374 = vector.shape_cast %373 : vector<8xf32> to vector<8x1xf32>
    %375 = vector.broadcast %374 : vector<8x1xf32> to vector<8x8xf32>
    %376 = arith.subf %372, %375 : vector<8x8xf32>
    %377 = math.exp %376 : vector<8x8xf32>
    %cst_151 = arith.constant dense<0.000000e+00> : vector<8xf32>
    %378 = vector.multi_reduction <add>, %377, %cst_151 [1] : vector<8x8xf32> to vector<8xf32>
    %379 = vector.shape_cast %378 : vector<8xf32> to vector<8x1xf32>
    %380 = tpu.reciprocal %379 {approx = true} : vector<8x1xf32> -> vector<8x1xf32>
    %381 = vector.broadcast %380 : vector<8x1xf32> to vector<8x8xf32>
    %382 = arith.mulf %377, %381 : vector<8x8xf32>
    %383 = vector.extract_strided_slice %318 {offsets = [0, 16], sizes = [8, 8], strides = [1, 1]} : vector<8x32xbf16> to vector<8x8xbf16>
    %384 = arith.truncf %382 : vector<8x8xf32> to vector<8x8xbf16>
    %cst_152 = arith.constant dense<0.000000e+00> : vector<8x8xf32>
    %385 = tpu.matmul %384, %383, %cst_152 {dimension_numbers = #tpu.dot_dimension_numbers<[1], [0], [0], [1], [0, 0, 1, 1], [], []>} : vector<8x8xbf16>, vector<8x8xbf16>, vector<8x8xf32> -> vector<8x8xf32>
    %386 = vector.extract_strided_slice %180 {offsets = [0, 24], sizes = [8, 8], strides = [1, 1]} : vector<8x32xbf16> to vector<8x8xbf16>
    %387 = vector.extract_strided_slice %316 {offsets = [0, 24], sizes = [8, 8], strides = [1, 1]} : vector<8x32xbf16> to vector<8x8xbf16>
    %cst_153 = arith.constant dense<0.000000e+00> : vector<8x8xf32>
    %388 = tpu.matmul %386, %387, %cst_153 {dimension_numbers = #tpu.dot_dimension_numbers<[1], [1], [0], [0], [0, 0, 1, 0], [], []>} : vector<8x8xbf16>, vector<8x8xbf16>, vector<8x8xf32> -> vector<8x8xf32>
    %389 = vector.extract_strided_slice %170 {offsets = [0, 24], sizes = [8, 8], strides = [1, 1]} : vector<8x32xbf16> to vector<8x8xbf16>
    %390 = vector.extract_strided_slice %317 {offsets = [0, 24], sizes = [8, 8], strides = [1, 1]} : vector<8x32xbf16> to vector<8x8xbf16>
    %cst_154 = arith.constant dense<0.000000e+00> : vector<8x8xf32>
    %391 = tpu.matmul %389, %390, %cst_154 {dimension_numbers = #tpu.dot_dimension_numbers<[1], [1], [0], [0], [0, 0, 1, 0], [], []>} : vector<8x8xbf16>, vector<8x8xbf16>, vector<8x8xf32> -> vector<8x8xf32>
    %392 = arith.addf %388, %391 : vector<8x8xf32>
    %393 = arith.addf %392, %322 : vector<8x8xf32>
    %cst_155 = arith.constant dense<0xFF800000> : vector<8xf32>
    %394 = vector.multi_reduction <maximumf>, %393, %cst_155 [1] : vector<8x8xf32> to vector<8xf32>
    %395 = vector.shape_cast %394 : vector<8xf32> to vector<8x1xf32>
    %396 = vector.broadcast %395 : vector<8x1xf32> to vector<8x8xf32>
    %397 = arith.subf %393, %396 : vector<8x8xf32>
    %398 = math.exp %397 : vector<8x8xf32>
    %cst_156 = arith.constant dense<0.000000e+00> : vector<8xf32>
    %399 = vector.multi_reduction <add>, %398, %cst_156 [1] : vector<8x8xf32> to vector<8xf32>
    %400 = vector.shape_cast %399 : vector<8xf32> to vector<8x1xf32>
    %401 = tpu.reciprocal %400 {approx = true} : vector<8x1xf32> -> vector<8x1xf32>
    %402 = vector.broadcast %401 : vector<8x1xf32> to vector<8x8xf32>
    %403 = arith.mulf %398, %402 : vector<8x8xf32>
    %404 = vector.extract_strided_slice %318 {offsets = [0, 24], sizes = [8, 8], strides = [1, 1]} : vector<8x32xbf16> to vector<8x8xbf16>
    %405 = arith.truncf %403 : vector<8x8xf32> to vector<8x8xbf16>
    %cst_157 = arith.constant dense<0.000000e+00> : vector<8x8xf32>
    %406 = tpu.matmul %405, %404, %cst_157 {dimension_numbers = #tpu.dot_dimension_numbers<[1], [0], [0], [1], [0, 0, 1, 1], [], []>} : vector<8x8xbf16>, vector<8x8xbf16>, vector<8x8xf32> -> vector<8x8xf32>
    %407 = tpu.concatenate %343, %364, %385, %406 in 1 : vector<8x8xf32>, vector<8x8xf32>, vector<8x8xf32>, vector<8x8xf32> -> vector<8x32xf32>
    %408 = vector.extract_strided_slice %38 {offsets = [0, 1], sizes = [8, 1], strides = [1, 1]} : vector<8x2xf32> to vector<8x1xf32>
    %409 = vector.broadcast %408 : vector<8x1xf32> to vector<8x32xf32>
    %410 = arith.mulf %409, %407 : vector<8x32xf32>
    %411 = arith.addf %315, %410 : vector<8x32xf32>
    %c5 = arith.constant 5 : index
    %c0_158 = arith.constant 0 : index
    %c0_159 = arith.constant 0 : index
    %412 = vector.load %arg8[%c5, %c0_158, %c0_159] : memref<6x32x32xbf16, #tpu.memory_space<vmem>>, vector<1x32x32xbf16>
    %413 = vector.shape_cast %412 : vector<1x32x32xbf16> to vector<32x32xbf16>
    %414 = arith.truncf %411 : vector<8x32xf32> to vector<8x32xbf16>
    %cst_160 = arith.constant dense<0.000000e+00> : vector<8x32xf32>
    %415 = tpu.matmul %414, %413, %cst_160 {dimension_numbers = #tpu.dot_dimension_numbers<[1], [0], [0], [1], [0, 0, 1, 1], [], []>} : vector<8x32xbf16>, vector<32x32xbf16>, vector<8x32xf32> -> vector<8x32xf32>
    %c5_161 = arith.constant 5 : index
    %c0_162 = arith.constant 0 : index
    %416 = vector.load %arg9[%c5_161, %c0_162] : memref<13x32xf32, #tpu.memory_space<vmem>>, vector<1x32xf32>
    %417 = vector.broadcast %416 : vector<1x32xf32> to vector<8x32xf32>
    %418 = arith.addf %415, %417 : vector<8x32xf32>
    %419 = arith.addf %137, %418 : vector<8x32xf32>
    %cst_163 = arith.constant dense<0.000000e+00> : vector<8xf32>
    %420 = vector.multi_reduction <add>, %419, %cst_163 [1] : vector<8x32xf32> to vector<8xf32>
    %421 = vector.shape_cast %420 : vector<8xf32> to vector<8x1xf32>
    %cst_164 = arith.constant 3.200000e+01 : f32
    %422 = vector.broadcast %cst_164 : f32 to vector<8x1xf32>
    %423 = arith.divf %421, %422 : vector<8x1xf32>
    %424 = vector.broadcast %423 : vector<8x1xf32> to vector<8x32xf32>
    %425 = arith.subf %419, %424 : vector<8x32xf32>
    %426 = arith.mulf %425, %425 : vector<8x32xf32>
    %cst_165 = arith.constant dense<0.000000e+00> : vector<8xf32>
    %427 = vector.multi_reduction <add>, %426, %cst_165 [1] : vector<8x32xf32> to vector<8xf32>
    %428 = vector.shape_cast %427 : vector<8xf32> to vector<8x1xf32>
    %cst_166 = arith.constant 3.200000e+01 : f32
    %429 = vector.broadcast %cst_166 : f32 to vector<8x1xf32>
    %430 = arith.divf %428, %429 : vector<8x1xf32>
    %cst_167 = arith.constant 9.99999974E-6 : f32
    %431 = vector.broadcast %cst_167 : f32 to vector<8x1xf32>
    %432 = arith.addf %430, %431 : vector<8x1xf32>
    %433 = math.rsqrt %432 : vector<8x1xf32>
    %434 = vector.broadcast %433 : vector<8x1xf32> to vector<8x32xf32>
    %435 = arith.mulf %425, %434 : vector<8x32xf32>
    %c9 = arith.constant 9 : index
    %c0_168 = arith.constant 0 : index
    %436 = vector.load %arg9[%c9, %c0_168] : memref<13x32xf32, #tpu.memory_space<vmem>>, vector<1x32xf32>
    %437 = vector.broadcast %436 : vector<1x32xf32> to vector<8x32xf32>
    %438 = arith.mulf %435, %437 : vector<8x32xf32>
    %c10 = arith.constant 10 : index
    %c0_169 = arith.constant 0 : index
    %439 = vector.load %arg9[%c10, %c0_169] : memref<13x32xf32, #tpu.memory_space<vmem>>, vector<1x32xf32>
    %440 = vector.broadcast %439 : vector<1x32xf32> to vector<8x32xf32>
    %441 = arith.addf %438, %440 : vector<8x32xf32>
    %c0_170 = arith.constant 0 : index
    %c0_171 = arith.constant 0 : index
    %442 = vector.load %arg18[%c0_170, %c0_171] : memref<32x64xbf16, #tpu.memory_space<vmem>>, vector<32x64xbf16>
    %443 = arith.truncf %441 : vector<8x32xf32> to vector<8x32xbf16>
    %cst_172 = arith.constant dense<0.000000e+00> : vector<8x64xf32>
    %444 = tpu.matmul %443, %442, %cst_172 {dimension_numbers = #tpu.dot_dimension_numbers<[1], [0], [0], [1], [0, 0, 1, 1], [], []>} : vector<8x32xbf16>, vector<32x64xbf16>, vector<8x64xf32> -> vector<8x64xf32>
    %c0_173 = arith.constant 0 : index
    %c0_174 = arith.constant 0 : index
    %445 = vector.load %arg19[%c0_173, %c0_174] : memref<1x64xf32, #tpu.memory_space<vmem>>, vector<1x64xf32>
    %446 = vector.broadcast %445 : vector<1x64xf32> to vector<8x64xf32>
    %447 = arith.addf %444, %446 : vector<8x64xf32>
    %cst_175 = arith.constant 0.000000e+00 : f32
    %448 = vector.broadcast %cst_175 : f32 to vector<8x64xf32>
    %449 = arith.maximumf %447, %448 : vector<8x64xf32>
    %c0_176 = arith.constant 0 : index
    %c0_177 = arith.constant 0 : index
    %450 = vector.load %arg20[%c0_176, %c0_177] : memref<64x32xbf16, #tpu.memory_space<vmem>>, vector<64x32xbf16>
    %451 = arith.truncf %449 : vector<8x64xf32> to vector<8x64xbf16>
    %cst_178 = arith.constant dense<0.000000e+00> : vector<8x32xf32>
    %452 = tpu.matmul %451, %450, %cst_178 {dimension_numbers = #tpu.dot_dimension_numbers<[1], [0], [0], [1], [0, 0, 1, 1], [], []>} : vector<8x64xbf16>, vector<64x32xbf16>, vector<8x32xf32> -> vector<8x32xf32>
    %c6 = arith.constant 6 : index
    %c0_179 = arith.constant 0 : index
    %453 = vector.load %arg9[%c6, %c0_179] : memref<13x32xf32, #tpu.memory_space<vmem>>, vector<1x32xf32>
    %454 = vector.broadcast %453 : vector<1x32xf32> to vector<8x32xf32>
    %455 = arith.addf %452, %454 : vector<8x32xf32>
    %456 = arith.addf %441, %455 : vector<8x32xf32>
    %cst_180 = arith.constant dense<0.000000e+00> : vector<8xf32>
    %457 = vector.multi_reduction <add>, %456, %cst_180 [1] : vector<8x32xf32> to vector<8xf32>
    %458 = vector.shape_cast %457 : vector<8xf32> to vector<8x1xf32>
    %cst_181 = arith.constant 3.200000e+01 : f32
    %459 = vector.broadcast %cst_181 : f32 to vector<8x1xf32>
    %460 = arith.divf %458, %459 : vector<8x1xf32>
    %461 = vector.broadcast %460 : vector<8x1xf32> to vector<8x32xf32>
    %462 = arith.subf %456, %461 : vector<8x32xf32>
    %463 = arith.mulf %462, %462 : vector<8x32xf32>
    %cst_182 = arith.constant dense<0.000000e+00> : vector<8xf32>
    %464 = vector.multi_reduction <add>, %463, %cst_182 [1] : vector<8x32xf32> to vector<8xf32>
    %465 = vector.shape_cast %464 : vector<8xf32> to vector<8x1xf32>
    %cst_183 = arith.constant 3.200000e+01 : f32
    %466 = vector.broadcast %cst_183 : f32 to vector<8x1xf32>
    %467 = arith.divf %465, %466 : vector<8x1xf32>
    %cst_184 = arith.constant 9.99999974E-6 : f32
    %468 = vector.broadcast %cst_184 : f32 to vector<8x1xf32>
    %469 = arith.addf %467, %468 : vector<8x1xf32>
    %470 = math.rsqrt %469 : vector<8x1xf32>
    %471 = vector.broadcast %470 : vector<8x1xf32> to vector<8x32xf32>
    %472 = arith.mulf %462, %471 : vector<8x32xf32>
    %c11 = arith.constant 11 : index
    %c0_185 = arith.constant 0 : index
    %473 = vector.load %arg9[%c11, %c0_185] : memref<13x32xf32, #tpu.memory_space<vmem>>, vector<1x32xf32>
    %474 = vector.broadcast %473 : vector<1x32xf32> to vector<8x32xf32>
    %475 = arith.mulf %472, %474 : vector<8x32xf32>
    %c12 = arith.constant 12 : index
    %c0_186 = arith.constant 0 : index
    %476 = vector.load %arg9[%c12, %c0_186] : memref<13x32xf32, #tpu.memory_space<vmem>>, vector<1x32xf32>
    %477 = vector.broadcast %476 : vector<1x32xf32> to vector<8x32xf32>
    %478 = arith.addf %475, %477 : vector<8x32xf32>
    %c0_187 = arith.constant 0 : index
    %c0_188 = arith.constant 0 : index
    %c0_189 = arith.constant 0 : index
    %479 = vector.load %arg21[%c0_187, %c0_188, %c0_189] : memref<1x8x32xf32, #tpu.memory_space<vmem>>, vector<1x8x32xf32>
    %480 = vector.shape_cast %479 : vector<1x8x32xf32> to vector<8x32xf32>
    %481 = vector.shape_cast %478 : vector<8x32xf32> to vector<1x8x32xf32>
    tpu.vector_store %arg21[%c0_187, %c0_188, %c0_189], %481 {strides = array<i32>} : memref<1x8x32xf32, #tpu.memory_space<vmem>>, vector<1x8x32xf32>,
    return
  }
  func.func @transform_0(%arg0: i32) -> (i32, i32, i32) {
    %c0_i32 = arith.constant 0 : i32
    %c0_i32_0 = arith.constant 0 : i32
    %c0_i32_1 = arith.constant 0 : i32
    return %arg0, %c0_i32, %c0_i32_0 : i32, i32, i32
  }
  func.func @transform_1(%arg0: i32) -> (i32, i32, i32) {
    %c0_i32 = arith.constant 0 : i32
    %c0_i32_0 = arith.constant 0 : i32
    %c0_i32_1 = arith.constant 0 : i32
    return %arg0, %c0_i32, %c0_i32_0 : i32, i32, i32
  }
  func.func @transform_2(%arg0: i32) -> (i32, i32, i32) {
    %c0_i32 = arith.constant 0 : i32
    %c0_i32_0 = arith.constant 0 : i32
    %c0_i32_1 = arith.constant 0 : i32
    return %arg0, %c0_i32, %c0_i32_0 : i32, i32, i32
  }
  func.func @transform_3(%arg0: i32) -> (i32, i32, i32) {
    %c0_i32 = arith.constant 0 : i32
    %c0_i32_0 = arith.constant 0 : i32
    %c0_i32_1 = arith.constant 0 : i32
    return %arg0, %c0_i32, %c0_i32_0 : i32, i32, i32
  }
  func.func @transform_4(%arg0: i32) -> (i32, i32, i32) {
    %c0_i32 = arith.constant 0 : i32
    %c0_i32_0 = arith.constant 0 : i32
    %c0_i32_1 = arith.constant 0 : i32
    return %arg0, %c0_i32, %c0_i32_0 : i32, i32, i32
  }
  func.func @transform_5(%arg0: i32) -> (i32, i32) {
    %c0_i32 = arith.constant 0 : i32
    %c0_i32_0 = arith.constant 0 : i32
    %c0_i32_1 = arith.constant 0 : i32
    return %c0_i32, %c0_i32_0 : i32, i32
  }
  func.func @transform_6(%arg0: i32) -> (i32, i32, i32) {
    %c0_i32 = arith.constant 0 : i32
    %c0_i32_0 = arith.constant 0 : i32
    %c0_i32_1 = arith.constant 0 : i32
    return %arg0, %c0_i32, %c0_i32_0 : i32, i32, i32
  }
  func.func @transform_7(%arg0: i32) -> (i32, i32, i32) {
    %c0_i32 = arith.constant 0 : i32
    %c0_i32_0 = arith.constant 0 : i32
    %c0_i32_1 = arith.constant 0 : i32
    %c0_i32_2 = arith.constant 0 : i32
    return %c0_i32, %c0_i32_0, %c0_i32_1 : i32, i32, i32
  }
  func.func @transform_8(%arg0: i32) -> (i32, i32) {
    %c0_i32 = arith.constant 0 : i32
    %c0_i32_0 = arith.constant 0 : i32
    %c0_i32_1 = arith.constant 0 : i32
    return %c0_i32, %c0_i32_0 : i32, i32
  }
  func.func @transform_9(%arg0: i32) -> (i32, i32) {
    %c0_i32 = arith.constant 0 : i32
    %c0_i32_0 = arith.constant 0 : i32
    %c0_i32_1 = arith.constant 0 : i32
    return %c0_i32, %c0_i32_0 : i32, i32
  }
  func.func @transform_10(%arg0: i32) -> (i32, i32) {
    %c0_i32 = arith.constant 0 : i32
    %c0_i32_0 = arith.constant 0 : i32
    %c0_i32_1 = arith.constant 0 : i32
    return %c0_i32, %c0_i32_0 : i32, i32
  }
  func.func @transform_11(%arg0: i32) -> (i32, i32) {
    %c0_i32 = arith.constant 0 : i32
    %c0_i32_0 = arith.constant 0 : i32
    %c0_i32_1 = arith.constant 0 : i32
    return %c0_i32, %c0_i32_0 : i32, i32
  }
  func.func @transform_12(%arg0: i32) -> (i32, i32) {
    %c0_i32 = arith.constant 0 : i32
    %c0_i32_0 = arith.constant 0 : i32
    %c0_i32_1 = arith.constant 0 : i32
    return %c0_i32, %c0_i32_0 : i32, i32
  }
  func.func @transform_13(%arg0: i32) -> (i32, i32) {
    %c0_i32 = arith.constant 0 : i32
    %c0_i32_0 = arith.constant 0 : i32
    %c0_i32_1 = arith.constant 0 : i32
    return %c0_i32, %c0_i32_0 : i32, i32
  }
  func.func @transform_14(%arg0: i32) -> (i32, i32) {
    %c0_i32 = arith.constant 0 : i32
    %c0_i32_0 = arith.constant 0 : i32
    %c0_i32_1 = arith.constant 0 : i32
    return %c0_i32, %c0_i32_0 : i32, i32
  }
  func.func @transform_15(%arg0: i32) -> (i32, i32) {
    %c0_i32 = arith.constant 0 : i32
    %c0_i32_0 = arith.constant 0 : i32
    %c0_i32_1 = arith.constant 0 : i32
    return %c0_i32, %c0_i32_0 : i32, i32
  }
  func.func @transform_16(%arg0: i32) -> (i32, i32) {
    %c0_i32 = arith.constant 0 : i32
    %c0_i32_0 = arith.constant 0 : i32
    %c0_i32_1 = arith.constant 0 : i32
    return %c0_i32, %c0_i32_0 : i32, i32
  }
  func.func @transform_17(%arg0: i32) -> (i32, i32) {
    %c0_i32 = arith.constant 0 : i32
    %c0_i32_0 = arith.constant 0 : i32
    %c0_i32_1 = arith.constant 0 : i32
    return %c0_i32, %c0_i32_0 : i32, i32
  }
  func.func @transform_18(%arg0: i32) -> (i32, i32) {
    %c0_i32 = arith.constant 0 : i32
    %c0_i32_0 = arith.constant 0 : i32
    %c0_i32_1 = arith.constant 0 : i32
    return %c0_i32, %c0_i32_0 : i32, i32
  }
  func.func @transform_19(%arg0: i32) -> (i32, i32) {
    %c0_i32 = arith.constant 0 : i32
    %c0_i32_0 = arith.constant 0 : i32
    %c0_i32_1 = arith.constant 0 : i32
    return %c0_i32, %c0_i32_0 : i32, i32
  }
  func.func @transform_20(%arg0: i32) -> (i32, i32, i32) {
    %c0_i32 = arith.constant 0 : i32
    %c0_i32_0 = arith.constant 0 : i32
    %c0_i32_1 = arith.constant 0 : i32
    return %arg0, %c0_i32, %c0_i32_0 : i32, i32, i32
  }
  func.func @transform_21(%arg0: i32) -> (i32, i32, i32) {
    %c0_i32 = arith.constant 0 : i32
    %c0_i32_0 = arith.constant 0 : i32
    %c0_i32_1 = arith.constant 0 : i32
    return %arg0, %c0_i32, %c0_i32_0 : i32, i32, i32
  }
}

</mosaic_0001>

<llo_original>
// kernel: multi_scale_decoder_layer_forward.1
$region0: #{multi_scale_decoder_layer_forward.1}
  #allocation0 [shape = 'u32[]', space=smem, size = 0x4, offset = 0x4, fixed_abs, tag = 'smem constant byte address 0x4 - core index']
  #allocation1 [shape = 'u32[72,128]{1,0:T(1,128)}', space=vmem, size = 0x9000, scoped, tag = 'internal scratch']
  %s0 = inlined_call_operand.vmem [shape: bf16[2,8,32], index: 0, kind: input, shape index: {}]
  %s1 = inlined_call_operand.vmem [shape: bf16[2,8,32], index: 1, kind: input, shape index: {}]
  %s2 = inlined_call_operand.vmem [shape: bf16[2,24,32], index: 2, kind: input, shape index: {}]
  %s3 = inlined_call_operand.vmem [shape: bf16[2,24,32], index: 3, kind: input, shape index: {}]
  %s4 = inlined_call_operand.vmem [shape: bf16[2,8,32], index: 4, kind: input, shape index: {}]
  %s5 = inlined_call_operand.vmem [shape: f32[8,24], index: 5, kind: input, shape index: {}]
  %s6 = inlined_call_operand.vmem [shape: f32[2,1,24], index: 6, kind: input, shape index: {}]
  %s7 = inlined_call_operand.vmem [shape: bf16[6,32,32], index: 7, kind: input, shape index: {}]
  %s8 = inlined_call_operand.vmem [shape: f32[13,32], index: 8, kind: input, shape index: {}]
  %s9 = inlined_call_operand.vmem [shape: bf16[32,96], index: 9, kind: input, shape index: {}]
  %s10 = inlined_call_operand.hbm [shape: f32[1,96], index: 10, kind: input, shape index: {}]
  %s11 = inlined_call_operand.vmem [shape: bf16[32,64], index: 11, kind: input, shape index: {}]
  %s12 = inlined_call_operand.hbm [shape: f32[1,64], index: 12, kind: input, shape index: {}]
  %s13 = inlined_call_operand.vmem [shape: bf16[32,64], index: 13, kind: input, shape index: {}]
  %s14 = inlined_call_operand.hbm [shape: f32[1,64], index: 14, kind: input, shape index: {}]
  %s15 = inlined_call_operand.vmem [shape: bf16[32,2], index: 15, kind: input, shape index: {}]
  %s16 = inlined_call_operand.hbm [shape: f32[1,2], index: 16, kind: input, shape index: {}]
  %s17 = inlined_call_operand.hbm [shape: bf16[32,64], index: 17, kind: input, shape index: {}]
  %s18 = inlined_call_operand.hbm [shape: f32[1,64], index: 18, kind: input, shape index: {}]
  %s19 = inlined_call_operand.vmem [shape: bf16[64,32], index: 19, kind: input, shape index: {}]
  %s20 = inlined_call_operand.vmem [shape: f32[2,8,32], index: 20, kind: output, shape index: {0}]
  %s21 = inlined_call_operand.hbm [shape: f32[2,8,16], index: 21, kind: output, shape index: {1}]
  %22 = xla_tuple %s20, %s21
  %s23 = sld [smem:[#allocation0]]
  $region145: #{multi_scale_decoder_layer_forward.1} parent=0
    _
  %s25 = ssub.s32 1, %s23
  %s26 = scalar_select 0, %s25, %s23
  $region1: #{multi_scale_decoder_layer_forward.1} parent=0
    #allocation2 [shape = 'u8[512]{0}', space=vmem, size = 0x400, scoped, tag = 'input window, operand 10, single buffered']
    #allocation3 [shape = 's32[2]{0}', space=sflag, size = 0x8, scoped, tag = 'scoped memory for multi_scale_decoder_layer_forward.1']
    #allocation4 [shape = 's32[2]{0}', space=sflag, size = 0x8, scoped, tag = 'scoped memory for multi_scale_decoder_layer_forward.1']
    #allocation5 [shape = 'u8[512]{0}', space=vmem, size = 0x400, scoped, tag = 'input window, operand 12, single buffered']
    #allocation6 [shape = 's32[1]{0}', space=sflag, size = 0x4, scoped, tag = 'scoped memory for multi_scale_decoder_layer_forward.1']
    #allocation7 [shape = 'u8[512]{0}', space=vmem, size = 0x400, scoped, tag = 'input window, operand 14, single buffered']
    #allocation8 [shape = 'u8[512]{0}', space=vmem, size = 0x400, scoped, tag = 'input window, operand 16, single buffered']
    #allocation9 [shape = 's32[1]{0}', space=sflag, size = 0x4, scoped, tag = 'scoped memory for multi_scale_decoder_layer_forward.1']
    #allocation10 [shape = 'u8[8192]{0}', space=vmem, size = 0x2000, scoped, tag = 'input window, operand 17, single buffered']
    #allocation11 [shape = 'u8[512]{0}', space=vmem, size = 0x400, scoped, tag = 'input window, operand 18, single buffered']
    #allocation12 [shape = 's32[1]{0}', space=sflag, size = 0x4, scoped, tag = 'scoped memory for multi_scale_decoder_layer_forward.1']
    #allocation13 [shape = 'u8[8192]{0}', space=vmem, size = 0x2000, scoped, tag = 'output window, operand 1']
    %27 = vsyncpa [#allocation3], 0
    %28 = vsyncpa [#allocation6], 0
    %29 = vsyncpa [#allocation9], 0
    %30 = vsyncpa [#allocation12], 0
    %31 = vsyncpa [#allocation4], 0
    %s32 = scalar_lea.sflag [#allocation4], 1
    %33 = vsyncpa %s32, 0
    loop: start=0, step=1, limit=4
    $region2: #{multi_scale_decoder_layer_forward.1} parent=1 // loop_pre_header
      _
    $region3: #{multi_scale_decoder_layer_forward.1} parent=1 // loop_header
      %s35 = sphi 0, %s39
      %p36 = scmp.ge.s32.totalorder %s35, 4
      %s45 = sphi 0, %s47
      %s48 = sphi 0, %s45
      %s49 = sphi 0, %s48
      %s65 = sphi 0, %s49
      %s71 = sphi 0, %s73
      %s74 = sphi 0, %s71
      %s75 = sphi 0, %s74
      %s91 = sphi 0, %s75
      %s97 = sphi 0, %s99
      %s100 = sphi 0, %s97
      %s101 = sphi 0, %s100
      %s117 = sphi 0, %s101
      %s123 = sphi 0, %s125
      %s126 = sphi 0, %s123
      %s127 = sphi 0, %s126
      %s143 = sphi 0, %s127
      %s149 = sphi 0, %s151
      %s152 = sphi 0, %s149
      %s153 = sphi 0, %s152
      %s169 = sphi 0, %s153
      %s173 = sphi 0, %s173
      %s175 = sphi 0, %s173
      %s176 = sphi 0, %s175
      %s190 = sphi 0, %s176
      %s196 = sphi 0, %s198
      %s199 = sphi 0, %s196
      %s200 = sphi 0, %s199
      %s216 = sphi 0, %s200
      %s220 = sphi 0, %s220
      %s222 = sphi 0, %s220
      %s223 = sphi 0, %s222
      %s237 = sphi 0, %s223
      %s241 = sphi 0, %s241
      %s243 = sphi 0, %s241
      %s244 = sphi 0, %s243
      %s258 = sphi 0, %s244
      %s262 = sphi 0, %s262
      %s264 = sphi 0, %s262
      %s265 = sphi 0, %s264
      %s279 = sphi 0, %s265
      %s283 = sphi 0, %s283
      %s285 = sphi 0, %s283
      %s286 = sphi 0, %s285
      %s300 = sphi 0, %s286
      %s304 = sphi 0, %s304
      %s306 = sphi 0, %s304
      %s307 = sphi 0, %s306
      %s321 = sphi 0, %s307
      %s325 = sphi 0, %s325
      %s327 = sphi 0, %s325
      %s328 = sphi 0, %s327
      %s342 = sphi 0, %s328
      %s346 = sphi 0, %s346
      %s348 = sphi 0, %s346
      %s349 = sphi 0, %s348
      %s363 = sphi 0, %s349
      %s367 = sphi 0, %s367
      %s369 = sphi 0, %s367
      %s370 = sphi 0, %s369
      %s384 = sphi 0, %s370
      %s388 = sphi 0, %s388
      %s390 = sphi 0, %s388
      %s391 = sphi 0, %s390
      %s405 = sphi 0, %s391
      %s409 = sphi 0, %s409
      %s411 = sphi 0, %s409
      %s412 = sphi 0, %s411
      %s426 = sphi 0, %s412
      %s430 = sphi 0, %s430
      %s432 = sphi 0, %s430
      %s433 = sphi 0, %s432
      %s447 = sphi 0, %s433
      %s451 = sphi 0, %s451
      %s453 = sphi 0, %s451
      %s454 = sphi 0, %s453
      %s468 = sphi 0, %s454
      %s472 = sphi 0, %s472
      %s474 = sphi 0, %s472
      %s475 = sphi 0, %s474
      %s489 = sphi 0, %s475
      %s495 = sphi 0, %s497
      %s498 = sphi 0, %s495
      %s499 = sphi 0, %s498
      %s515 = sphi 0, %s499
      %s521 = sphi 0, %s523
      %s524 = sphi 0, %s521
      %s525 = sphi 0, %s524
      %s541 = sphi 0, %s525
    $region4: #{multi_scale_decoder_layer_forward.1} parent=1 // loop_header_branch
      %38 = sbr.rel (%p36) target = $region8
    $region5: #{multi_scale_decoder_layer_forward.1} parent=1 // loop_body
      %s40 = ssub.s32 %s35, 1
      %s41 = ssub.s32 %s35, 2
      %s42 = sadd.s32 %s35, 1
      %s43 = ssub.s32 %s35, %s42
      %p44 = scmp.eq.s32.totalorder %s43, 0
      %s46 = sadd.s32 %s45, 1
      %s47 = scalar_select %p44, %s45, %s46
      %p50 = pneg %p44
      %p51 = scmp.eq.s32.totalorder %s35, 1
      %p52 = por %p50, %p51
      %p53 = scmp.ne.s32.totalorder %s45, %s48
      %p54 = scmp.eq.s32.totalorder %s35, 0
      %p55 = por %p53, %p54
      %p56 = scmp.ne.s32.totalorder %s45, %s48
      %p57 = scmp.eq.s32.totalorder %s40, 1
      %p58 = por %p56, %p57
      %p59 = scmp.ne.s32.totalorder %s48, %s49
      %p60 = scmp.eq.s32.totalorder %s40, 0
      %p61 = por %p59, %p60
      %p62 = scmp.ne.s32.totalorder %s48, %s49
      %p63 = scmp.eq.s32.totalorder %s41, 1
      %p64 = por %p62, %p63
      %p66 = scmp.ne.s32.totalorder %s49, %s65
      %p67 = scmp.eq.s32.totalorder %s41, 0
      %p68 = por %p66, %p67
      %s69 = ssub.s32 %s35, %s42
      %p70 = scmp.eq.s32.totalorder %s69, 0
      %s72 = sadd.s32 %s71, 1
      %s73 = scalar_select %p70, %s71, %s72
      %p76 = pneg %p70
      %p77 = scmp.eq.s32.totalorder %s35, 1
      %p78 = por %p76, %p77
      %p79 = scmp.ne.s32.totalorder %s71, %s74
      %p80 = scmp.eq.s32.totalorder %s35, 0
      %p81 = por %p79, %p80
      %p82 = scmp.ne.s32.totalorder %s71, %s74
      %p83 = scmp.eq.s32.totalorder %s40, 1
      %p84 = por %p82, %p83
      %p85 = scmp.ne.s32.totalorder %s74, %s75
      %p86 = scmp.eq.s32.totalorder %s40, 0
      %p87 = por %p85, %p86
      %p88 = scmp.ne.s32.totalorder %s74, %s75
      %p89 = scmp.eq.s32.totalorder %s41, 1
      %p90 = por %p88, %p89
      %p92 = scmp.ne.s32.totalorder %s75, %s91
      %p93 = scmp.eq.s32.totalorder %s41, 0
      %p94 = por %p92, %p93
      %s95 = ssub.s32 %s35, %s42
      %p96 = scmp.eq.s32.totalorder %s95, 0
      %s98 = sadd.s32 %s97, 1
      %s99 = scalar_select %p96, %s97, %s98
      %p102 = pneg %p96
      %p103 = scmp.eq.s32.totalorder %s35, 1
      %p104 = por %p102, %p103
      %p105 = scmp.ne.s32.totalorder %s97, %s100
      %p106 = scmp.eq.s32.totalorder %s35, 0
      %p107 = por %p105, %p106
      %p108 = scmp.ne.s32.totalorder %s97, %s100
      %p109 = scmp.eq.s32.totalorder %s40, 1
      %p110 = por %p108, %p109
      %p111 = scmp.ne.s32.totalorder %s100, %s101
      %p112 = scmp.eq.s32.totalorder %s40, 0
      %p113 = por %p111, %p112
      %p114 = scmp.ne.s32.totalorder %s100, %s101
      %p115 = scmp.eq.s32.totalorder %s41, 1
      %p116 = por %p114, %p115
      %p118 = scmp.ne.s32.totalorder %s101, %s117
      %p119 = scmp.eq.s32.totalorder %s41, 0
      %p120 = por %p118, %p119
      %s121 = ssub.s32 %s35, %s42
      %p122 = scmp.eq.s32.totalorder %s121, 0
      %s124 = sadd.s32 %s123, 1
      %s125 = scalar_select %p122, %s123, %s124
      %p128 = pneg %p122
      %p129 = scmp.eq.s32.totalorder %s35, 1
      %p130 = por %p128, %p129
      %p131 = scmp.ne.s32.totalorder %s123, %s126
      %p132 = scmp.eq.s32.totalorder %s35, 0
      %p133 = por %p131, %p132
      %p134 = scmp.ne.s32.totalorder %s123, %s126
      %p135 = scmp.eq.s32.totalorder %s40, 1
      %p136 = por %p134, %p135
      %p137 = scmp.ne.s32.totalorder %s126, %s127
      %p138 = scmp.eq.s32.totalorder %s40, 0
      %p139 = por %p137, %p138
      %p140 = scmp.ne.s32.totalorder %s126, %s127
      %p141 = scmp.eq.s32.totalorder %s41, 1
      %p142 = por %p140, %p141
      %p144 = scmp.ne.s32.totalorder %s127, %s143
      %p145 = scmp.eq.s32.totalorder %s41, 0
      %p146 = por %p144, %p145
      %s147 = ssub.s32 %s35, %s42
      %p148 = scmp.eq.s32.totalorder %s147, 0
      %s150 = sadd.s32 %s149, 1
      %s151 = scalar_select %p148, %s149, %s150
      %p154 = pneg %p148
      %p155 = scmp.eq.s32.totalorder %s35, 1
      %p156 = por %p154, %p155
      %p157 = scmp.ne.s32.totalorder %s149, %s152
      %p158 = scmp.eq.s32.totalorder %s35, 0
      %p159 = por %p157, %p158
      %p160 = scmp.ne.s32.totalorder %s149, %s152
      %p161 = scmp.eq.s32.totalorder %s40, 1
      %p162 = por %p160, %p161
      %p163 = scmp.ne.s32.totalorder %s152, %s153
      %p164 = scmp.eq.s32.totalorder %s40, 0
      %p165 = por %p163, %p164
      %p166 = scmp.ne.s32.totalorder %s152, %s153
      %p167 = scmp.eq.s32.totalorder %s41, 1
      %p168 = por %p166, %p167
      %p170 = scmp.ne.s32.totalorder %s153, %s169
      %p171 = scmp.eq.s32.totalorder %s41, 0
      %p172 = por %p170, %p171
      %s174 = sadd.s32 %s173, 1
      %p177 = scmp.eq.s32.totalorder %s35, 1
      %p178 = scmp.ne.s32.totalorder %s173, %s175
      %p179 = scmp.eq.s32.totalorder %s35, 0
      %p180 = por %p178, %p179
      %p181 = scmp.ne.s32.totalorder %s173, %s175
      %p182 = scmp.eq.s32.totalorder %s40, 1
      %p183 = por %p181, %p182
      %p184 = scmp.ne.s32.totalorder %s175, %s176
      %p185 = scmp.eq.s32.totalorder %s40, 0
      %p186 = por %p184, %p185
      %p187 = scmp.ne.s32.totalorder %s175, %s176
      %p188 = scmp.eq.s32.totalorder %s41, 1
      %p189 = por %p187, %p188
      %p191 = scmp.ne.s32.totalorder %s176, %s190
      %p192 = scmp.eq.s32.totalorder %s41, 0
      %p193 = por %p191, %p192
      %s194 = ssub.s32 %s35, %s42
      %p195 = scmp.eq.s32.totalorder %s194, 0
      %s197 = sadd.s32 %s196, 1
      %s198 = scalar_select %p195, %s196, %s197
      %p201 = pneg %p195
      %p202 = scmp.eq.s32.totalorder %s35, 1
      %p203 = por %p201, %p202
      %p204 = scmp.ne.s32.totalorder %s196, %s199
      %p205 = scmp.eq.s32.totalorder %s35, 0
      %p206 = por %p204, %p205
      %p207 = scmp.ne.s32.totalorder %s196, %s199
      %p208 = scmp.eq.s32.totalorder %s40, 1
      %p209 = por %p207, %p208
      %p210 = scmp.ne.s32.totalorder %s199, %s200
      %p211 = scmp.eq.s32.totalorder %s40, 0
      %p212 = por %p210, %p211
      %p213 = scmp.ne.s32.totalorder %s199, %s200
      %p214 = scmp.eq.s32.totalorder %s41, 1
      %p215 = por %p213, %p214
      %p217 = scmp.ne.s32.totalorder %s200, %s216
      %p218 = scmp.eq.s32.totalorder %s41, 0
      %p219 = por %p217, %p218
      %s221 = sadd.s32 %s220, 1
      %p224 = scmp.eq.s32.totalorder %s35, 1
      %p225 = scmp.ne.s32.totalorder %s220, %s222
      %p226 = scmp.eq.s32.totalorder %s35, 0
      %p227 = por %p225, %p226
      %p228 = scmp.ne.s32.totalorder %s220, %s222
      %p229 = scmp.eq.s32.totalorder %s40, 1
      %p230 = por %p228, %p229
      %p231 = scmp.ne.s32.totalorder %s222, %s223
      %p232 = scmp.eq.s32.totalorder %s40, 0
      %p233 = por %p231, %p232
      %p234 = scmp.ne.s32.totalorder %s222, %s223
      %p235 = scmp.eq.s32.totalorder %s41, 1
      %p236 = por %p234, %p235
      %p238 = scmp.ne.s32.totalorder %s223, %s237
      %p239 = scmp.eq.s32.totalorder %s41, 0
      %p240 = por %p238, %p239
      %s242 = sadd.s32 %s241, 1
      %p245 = scmp.eq.s32.totalorder %s35, 1
      %p246 = scmp.ne.s32.totalorder %s241, %s243
      %p247 = scmp.eq.s32.totalorder %s35, 0
      %p248 = por %p246, %p247
      %p249 = scmp.ne.s32.totalorder %s241, %s243
      %p250 = scmp.eq.s32.totalorder %s40, 1
      %p251 = por %p249, %p250
      %p252 = scmp.ne.s32.totalorder %s243, %s244
      %p253 = scmp.eq.s32.totalorder %s40, 0
      %p254 = por %p252, %p253
      %p255 = scmp.ne.s32.totalorder %s243, %s244
      %p256 = scmp.eq.s32.totalorder %s41, 1
      %p257 = por %p255, %p256
      %p259 = scmp.ne.s32.totalorder %s244, %s258
      %p260 = scmp.eq.s32.totalorder %s41, 0
      %p261 = por %p259, %p260
      %s263 = sadd.s32 %s262, 1
      %p266 = scmp.eq.s32.totalorder %s35, 1
      %p267 = scmp.ne.s32.totalorder %s262, %s264
      %p268 = scmp.eq.s32.totalorder %s35, 0
      %p269 = por %p267, %p268
      %p270 = scmp.ne.s32.totalorder %s262, %s264
      %p271 = scmp.eq.s32.totalorder %s40, 1
      %p272 = por %p270, %p271
      %p273 = scmp.ne.s32.totalorder %s264, %s265
      %p274 = scmp.eq.s32.totalorder %s40, 0
      %p275 = por %p273, %p274
      %p276 = scmp.ne.s32.totalorder %s264, %s265
      %p277 = scmp.eq.s32.totalorder %s41, 1
      %p278 = por %p276, %p277
      %p280 = scmp.ne.s32.totalorder %s265, %s279
      %p281 = scmp.eq.s32.totalorder %s41, 0
      %p282 = por %p280, %p281
      %s284 = sadd.s32 %s283, 1
      %p287 = scmp.eq.s32.totalorder %s35, 1
      %p288 = scmp.ne.s32.totalorder %s283, %s285
      %p289 = scmp.eq.s32.totalorder %s35, 0
      %p290 = por %p288, %p289
      %p291 = scmp.ne.s32.totalorder %s283, %s285
      %p292 = scmp.eq.s32.totalorder %s40, 1
      %p293 = por %p291, %p292
      %p294 = scmp.ne.s32.totalorder %s285, %s286
      %p295 = scmp.eq.s32.totalorder %s40, 0
      %p296 = por %p294, %p295
      %p297 = scmp.ne.s32.totalorder %s285, %s286
      %p298 = scmp.eq.s32.totalorder %s41, 1
      %p299 = por %p297, %p298
      %p301 = scmp.ne.s32.totalorder %s286, %s300
      %p302 = scmp.eq.s32.totalorder %s41, 0
      %p303 = por %p301, %p302
      %s305 = sadd.s32 %s304, 1
      %p308 = scmp.eq.s32.totalorder %s35, 1
      %p309 = scmp.ne.s32.totalorder %s304, %s306
      %p310 = scmp.eq.s32.totalorder %s35, 0
      %p311 = por %p309, %p310
      %p312 = scmp.ne.s32.totalorder %s304, %s306
      %p313 = scmp.eq.s32.totalorder %s40, 1
      %p314 = por %p312, %p313
      %p315 = scmp.ne.s32.totalorder %s306, %s307
      %p316 = scmp.eq.s32.totalorder %s40, 0
      %p317 = por %p315, %p316
      %p318 = scmp.ne.s32.totalorder %s306, %s307
      %p319 = scmp.eq.s32.totalorder %s41, 1
      %p320 = por %p318, %p319
      %p322 = scmp.ne.s32.totalorder %s307, %s321
      %p323 = scmp.eq.s32.totalorder %s41, 0
      %p324 = por %p322, %p323
      %s326 = sadd.s32 %s325, 1
      %p329 = scmp.eq.s32.totalorder %s35, 1
      %p330 = scmp.ne.s32.totalorder %s325, %s327
      %p331 = scmp.eq.s32.totalorder %s35, 0
      %p332 = por %p330, %p331
      %p333 = scmp.ne.s32.totalorder %s325, %s327
      %p334 = scmp.eq.s32.totalorder %s40, 1
      %p335 = por %p333, %p334
      %p336 = scmp.ne.s32.totalorder %s327, %s328
      %p337 = scmp.eq.s32.totalorder %s40, 0
      %p338 = por %p336, %p337
      %p339 = scmp.ne.s32.totalorder %s327, %s328
      %p340 = scmp.eq.s32.totalorder %s41, 1
      %p341 = por %p339, %p340
      %p343 = scmp.ne.s32.totalorder %s328, %s342
      %p344 = scmp.eq.s32.totalorder %s41, 0
      %p345 = por %p343, %p344
      %s347 = sadd.s32 %s346, 1
      %p350 = scmp.eq.s32.totalorder %s35, 1
      %p351 = scmp.ne.s32.totalorder %s346, %s348
      %p352 = scmp.eq.s32.totalorder %s35, 0
      %p353 = por %p351, %p352
      %p354 = scmp.ne.s32.totalorder %s346, %s348
      %p355 = scmp.eq.s32.totalorder %s40, 1
      %p356 = por %p354, %p355
      %p357 = scmp.ne.s32.totalorder %s348, %s349
      %p358 = scmp.eq.s32.totalorder %s40, 0
      %p359 = por %p357, %p358
      %p360 = scmp.ne.s32.totalorder %s348, %s349
      %p361 = scmp.eq.s32.totalorder %s41, 1
      %p362 = por %p360, %p361
      %p364 = scmp.ne.s32.totalorder %s349, %s363
      %p365 = scmp.eq.s32.totalorder %s41, 0
      %p366 = por %p364, %p365
      %s368 = sadd.s32 %s367, 1
      %p371 = scmp.eq.s32.totalorder %s35, 1
      %p372 = scmp.ne.s32.totalorder %s367, %s369
      %p373 = scmp.eq.s32.totalorder %s35, 0
      %p374 = por %p372, %p373
      %p375 = scmp.ne.s32.totalorder %s367, %s369
      %p376 = scmp.eq.s32.totalorder %s40, 1
      %p377 = por %p375, %p376
      %p378 = scmp.ne.s32.totalorder %s369, %s370
      %p379 = scmp.eq.s32.totalorder %s40, 0
      %p380 = por %p378, %p379
      %p381 = scmp.ne.s32.totalorder %s369, %s370
      %p382 = scmp.eq.s32.totalorder %s41, 1
      %p383 = por %p381, %p382
      %p385 = scmp.ne.s32.totalorder %s370, %s384
      %p386 = scmp.eq.s32.totalorder %s41, 0
      %p387 = por %p385, %p386
      %s389 = sadd.s32 %s388, 1
      %p392 = scmp.eq.s32.totalorder %s35, 1
      %p393 = scmp.ne.s32.totalorder %s388, %s390
      %p394 = scmp.eq.s32.totalorder %s35, 0
      %p395 = por %p393, %p394
      %p396 = scmp.ne.s32.totalorder %s388, %s390
      %p397 = scmp.eq.s32.totalorder %s40, 1
      %p398 = por %p396, %p397
      %p399 = scmp.ne.s32.totalorder %s390, %s391
      %p400 = scmp.eq.s32.totalorder %s40, 0
      %p401 = por %p399, %p400
      %p402 = scmp.ne.s32.totalorder %s390, %s391
      %p403 = scmp.eq.s32.totalorder %s41, 1
      %p404 = por %p402, %p403
      %p406 = scmp.ne.s32.totalorder %s391, %s405
      %p407 = scmp.eq.s32.totalorder %s41, 0
      %p408 = por %p406, %p407
      %s410 = sadd.s32 %s409, 1
      %p413 = scmp.eq.s32.totalorder %s35, 1
      %p414 = scmp.ne.s32.totalorder %s409, %s411
      %p415 = scmp.eq.s32.totalorder %s35, 0
      %p416 = por %p414, %p415
      %p417 = scmp.ne.s32.totalorder %s409, %s411
      %p418 = scmp.eq.s32.totalorder %s40, 1
      %p419 = por %p417, %p418
      %p420 = scmp.ne.s32.totalorder %s411, %s412
      %p421 = scmp.eq.s32.totalorder %s40, 0
      %p422 = por %p420, %p421
      %p423 = scmp.ne.s32.totalorder %s411, %s412
      %p424 = scmp.eq.s32.totalorder %s41, 1
      %p425 = por %p423, %p424
      %p427 = scmp.ne.s32.totalorder %s412, %s426
      %p428 = scmp.eq.s32.totalorder %s41, 0
      %p429 = por %p427, %p428
      %s431 = sadd.s32 %s430, 1
      %p434 = scmp.eq.s32.totalorder %s35, 1
      %p435 = scmp.ne.s32.totalorder %s430, %s432
      %p436 = scmp.eq.s32.totalorder %s35, 0
      %p437 = por %p435, %p436
      %p438 = scmp.ne.s32.totalorder %s430, %s432
      %p439 = scmp.eq.s32.totalorder %s40, 1
      %p440 = por %p438, %p439
      %p441 = scmp.ne.s32.totalorder %s432, %s433
      %p442 = scmp.eq.s32.totalorder %s40, 0
      %p443 = por %p441, %p442
      %p444 = scmp.ne.s32.totalorder %s432, %s433
      %p445 = scmp.eq.s32.totalorder %s41, 1
      %p446 = por %p444, %p445
      %p448 = scmp.ne.s32.totalorder %s433, %s447
      %p449 = scmp.eq.s32.totalorder %s41, 0
      %p450 = por %p448, %p449
      %s452 = sadd.s32 %s451, 1
      %p455 = scmp.eq.s32.totalorder %s35, 1
      %p456 = scmp.ne.s32.totalorder %s451, %s453
      %p457 = scmp.eq.s32.totalorder %s35, 0
      %p458 = por %p456, %p457
      %p459 = scmp.ne.s32.totalorder %s451, %s453
      %p460 = scmp.eq.s32.totalorder %s40, 1
      %p461 = por %p459, %p460
      %p462 = scmp.ne.s32.totalorder %s453, %s454
      %p463 = scmp.eq.s32.totalorder %s40, 0
      %p464 = por %p462, %p463
      %p465 = scmp.ne.s32.totalorder %s453, %s454
      %p466 = scmp.eq.s32.totalorder %s41, 1
      %p467 = por %p465, %p466
      %p469 = scmp.ne.s32.totalorder %s454, %s468
      %p470 = scmp.eq.s32.totalorder %s41, 0
      %p471 = por %p469, %p470
      %s473 = sadd.s32 %s472, 1
      %p476 = scmp.eq.s32.totalorder %s35, 1
      %p477 = scmp.ne.s32.totalorder %s472, %s474
      %p478 = scmp.eq.s32.totalorder %s35, 0
      %p479 = por %p477, %p478
      %p480 = scmp.ne.s32.totalorder %s472, %s474
      %p481 = scmp.eq.s32.totalorder %s40, 1
      %p482 = por %p480, %p481
      %p483 = scmp.ne.s32.totalorder %s474, %s475
      %p484 = scmp.eq.s32.totalorder %s40, 0
      %p485 = por %p483, %p484
      %p486 = scmp.ne.s32.totalorder %s474, %s475
      %p487 = scmp.eq.s32.totalorder %s41, 1
      %p488 = por %p486, %p487
      %p490 = scmp.ne.s32.totalorder %s475, %s489
      %p491 = scmp.eq.s32.totalorder %s41, 0
      %p492 = por %p490, %p491
      %s493 = ssub.s32 %s35, %s42
      %p494 = scmp.eq.s32.totalorder %s493, 0
      %s496 = sadd.s32 %s495, 1
      %s497 = scalar_select %p494, %s495, %s496
      %p500 = pneg %p494
      %p501 = scmp.eq.s32.totalorder %s35, 1
      %p502 = por %p500, %p501
      %p503 = scmp.ne.s32.totalorder %s495, %s498
      %p504 = scmp.eq.s32.totalorder %s35, 0
      %p505 = por %p503, %p504
      %p506 = scmp.ne.s32.totalorder %s495, %s498
      %p507 = scmp.eq.s32.totalorder %s40, 1
      %p508 = por %p506, %p507
      %p509 = scmp.ne.s32.totalorder %s498, %s499
      %p510 = scmp.eq.s32.totalorder %s40, 0
      %p511 = por %p509, %p510
      %p512 = scmp.ne.s32.totalorder %s498, %s499
      %p513 = scmp.eq.s32.totalorder %s41, 1
      %p514 = por %p512, %p513
      %p516 = scmp.ne.s32.totalorder %s499, %s515
      %p517 = scmp.eq.s32.totalorder %s41, 0
      %p518 = por %p516, %p517
      %s519 = ssub.s32 %s35, %s42
      %p520 = scmp.eq.s32.totalorder %s519, 0
      %s522 = sadd.s32 %s521, 1
      %s523 = scalar_select %p520, %s521, %s522
      %p526 = pneg %p520
      %p527 = scmp.eq.s32.totalorder %s35, 1
      %p528 = por %p526, %p527
      %p529 = scmp.ne.s32.totalorder %s521, %s524
      %p530 = scmp.eq.s32.totalorder %s35, 0
      %p531 = por %p529, %p530
      %p532 = scmp.ne.s32.totalorder %s521, %s524
      %p533 = scmp.eq.s32.totalorder %s40, 1
      %p534 = por %p532, %p533
      %p535 = scmp.ne.s32.totalorder %s524, %s525
      %p536 = scmp.eq.s32.totalorder %s40, 0
      %p537 = por %p535, %p536
      %p538 = scmp.ne.s32.totalorder %s524, %s525
      %p539 = scmp.eq.s32.totalorder %s41, 1
      %p540 = por %p538, %p539
      %p542 = scmp.ne.s32.totalorder %s525, %s541
      %p543 = scmp.eq.s32.totalorder %s41, 0
      %p544 = por %p542, %p543
      %p545 = scmp.le.s32.totalorder 1, %s35
      %p546 = scmp.lt.s32.totalorder %s35, 3
      %p547 = pnand %p545, %p546
      %p548 = pneg %p547
      // Predicated region
      $region9: #{multi_scale_decoder_layer_forward.1} parent=5 // pred_check
        _
      $region10: #{multi_scale_decoder_layer_forward.1} parent=5 // pred_check_branch
        %550 = sbr.rel (%p547) target = $region12
      $region11: #{multi_scale_decoder_layer_forward.1} parent=5 // pred_region
        %s551 = ssub.s32 %s35, 1
        // Predicated region
        $region13: #{multi_scale_decoder_layer_forward.1} parent=11 // pred_check
          %p552 = pneg %p186
        $region14: #{multi_scale_decoder_layer_forward.1} parent=11 // pred_check_branch
          %554 = sbr.rel (%p552) target = $region16
        $region15: #{multi_scale_decoder_layer_forward.1} parent=11 // pred_region
          _
        $region16: #{multi_scale_decoder_layer_forward.1} parent=11 // pred_fallthru
          _
        // Predicated region
        $region17: #{multi_scale_decoder_layer_forward.1} parent=11 // pred_check
          %p555 = pneg %p233
        $region18: #{multi_scale_decoder_layer_forward.1} parent=11 // pred_check_branch
          %557 = sbr.rel (%p555) target = $region20
        $region19: #{multi_scale_decoder_layer_forward.1} parent=11 // pred_region
          _
        $region20: #{multi_scale_decoder_layer_forward.1} parent=11 // pred_fallthru
          _
        // Predicated region
        $region21: #{multi_scale_decoder_layer_forward.1} parent=11 // pred_check
          %p558 = pneg %p254
        $region22: #{multi_scale_decoder_layer_forward.1} parent=11 // pred_check_branch
          %560 = sbr.rel (%p558) target = $region24
        $region23: #{multi_scale_decoder_layer_forward.1} parent=11 // pred_region
          _
        $region24: #{multi_scale_decoder_layer_forward.1} parent=11 // pred_fallthru
          _
        // Predicated region
        $region25: #{multi_scale_decoder_layer_forward.1} parent=11 // pred_check
          %p561 = pneg %p275
        $region26: #{multi_scale_decoder_layer_forward.1} parent=11 // pred_check_branch
          %563 = sbr.rel (%p561) target = $region28
        $region27: #{multi_scale_decoder_layer_forward.1} parent=11 // pred_region
          _
        $region28: #{multi_scale_decoder_layer_forward.1} parent=11 // pred_fallthru
          _
        // Predicated region
        $region29: #{multi_scale_decoder_layer_forward.1} parent=11 // pred_check
          %p564 = pneg %p296
        $region30: #{multi_scale_decoder_layer_forward.1} parent=11 // pred_check_branch
          %566 = sbr.rel (%p564) target = $region32
        $region31: #{multi_scale_decoder_layer_forward.1} parent=11 // pred_region
          %568 = vsyncadd [#allocation3], 0
          %s570 = sshll.u32 %s10, 4
          %s571 = int_to_ptr.hbm [resolvable:$true] %s570
          %s572 = sshll.u32 [#allocation2], 4
          %s573 = int_to_ptr.vmem [resolvable:$true] %s572
          %575 = dma.hbm_to_vmem [thread:$0]  %s571, 16, %s573, [#allocation3]
        $region32: #{multi_scale_decoder_layer_forward.1} parent=11 // pred_fallthru
          _
        // Predicated region
        $region33: #{multi_scale_decoder_layer_forward.1} parent=11 // pred_check
          %p576 = pneg %p317
        $region34: #{multi_scale_decoder_layer_forward.1} parent=11 // pred_check_branch
          %578 = sbr.rel (%p576) target = $region36
        $region35: #{multi_scale_decoder_layer_forward.1} parent=11 // pred_region
          _
        $region36: #{multi_scale_decoder_layer_forward.1} parent=11 // pred_fallthru
          _
        // Predicated region
        $region37: #{multi_scale_decoder_layer_forward.1} parent=11 // pred_check
          %p579 = pneg %p338
        $region38: #{multi_scale_decoder_layer_forward.1} parent=11 // pred_check_branch
          %581 = sbr.rel (%p579) target = $region40
        $region39: #{multi_scale_decoder_layer_forward.1} parent=11 // pred_region
          %583 = vsyncadd [#allocation6], 0
          %s585 = sshll.u32 %s12, 4
          %s586 = int_to_ptr.hbm [resolvable:$true] %s585
          %s587 = sshll.u32 [#allocation5], 4
          %s588 = int_to_ptr.vmem [resolvable:$true] %s587
          %590 = dma.hbm_to_vmem [thread:$0]  %s586, 16, %s588, [#allocation6]
        $region40: #{multi_scale_decoder_layer_forward.1} parent=11 // pred_fallthru
          _
        // Predicated region
        $region41: #{multi_scale_decoder_layer_forward.1} parent=11 // pred_check
          %p591 = pneg %p359
        $region42: #{multi_scale_decoder_layer_forward.1} parent=11 // pred_check_branch
          %593 = sbr.rel (%p591) target = $region44
        $region43: #{multi_scale_decoder_layer_forward.1} parent=11 // pred_region
          _
        $region44: #{multi_scale_decoder_layer_forward.1} parent=11 // pred_fallthru
          _
        // Predicated region
        $region45: #{multi_scale_decoder_layer_forward.1} parent=11 // pred_check
          %p594 = pneg %p380
        $region46: #{multi_scale_decoder_layer_forward.1} parent=11 // pred_check_branch
          %596 = sbr.rel (%p594) target = $region48
        $region47: #{multi_scale_decoder_layer_forward.1} parent=11 // pred_region
          %598 = vsyncadd [#allocation6], 0
          %s600 = sshll.u32 %s14, 4
          %s601 = int_to_ptr.hbm [resolvable:$true] %s600
          %s602 = sshll.u32 [#allocation7], 4
          %s603 = int_to_ptr.vmem [resolvable:$true] %s602
          %605 = dma.hbm_to_vmem [thread:$0]  %s601, 16, %s603, [#allocation6]
        $region48: #{multi_scale_decoder_layer_forward.1} parent=11 // pred_fallthru
          _
        // Predicated region
        $region49: #{multi_scale_decoder_layer_forward.1} parent=11 // pred_check
          %p606 = pneg %p401
        $region50: #{multi_scale_decoder_layer_forward.1} parent=11 // pred_check_branch
          %608 = sbr.rel (%p606) target = $region52
        $region51: #{multi_scale_decoder_layer_forward.1} parent=11 // pred_region
          _
        $region52: #{multi_scale_decoder_layer_forward.1} parent=11 // pred_fallthru
          _
        // Predicated region
        $region53: #{multi_scale_decoder_layer_forward.1} parent=11 // pred_check
          %p609 = pneg %p422
        $region54: #{multi_scale_decoder_layer_forward.1} parent=11 // pred_check_branch
          %611 = sbr.rel (%p609) target = $region56
        $region55: #{multi_scale_decoder_layer_forward.1} parent=11 // pred_region
          %613 = vsyncadd [#allocation9], 0
          %s615 = sshll.u32 %s16, 4
          %s616 = int_to_ptr.hbm [resolvable:$true] %s615
          %s617 = sshll.u32 [#allocation8], 4
          %s618 = int_to_ptr.vmem [resolvable:$true] %s617
          %620 = dma.hbm_to_vmem [thread:$0]  %s616, 16, %s618, [#allocation9]
        $region56: #{multi_scale_decoder_layer_forward.1} parent=11 // pred_fallthru
          _
        // Predicated region
        $region57: #{multi_scale_decoder_layer_forward.1} parent=11 // pred_check
          %p621 = pneg %p443
        $region58: #{multi_scale_decoder_layer_forward.1} parent=11 // pred_check_branch
          %623 = sbr.rel (%p621) target = $region60
        $region59: #{multi_scale_decoder_layer_forward.1} parent=11 // pred_region
          %625 = vsyncadd [#allocation9], 0
          %s626 = sshll.u32 %s17, 4
          %s627 = int_to_ptr.hbm [resolvable:$true] %s626
          %s628 = sshll.u32 [#allocation10], 4
          %s629 = int_to_ptr.vmem [resolvable:$true] %s628
          %634 = dma.hbm_to_vmem [thread:$0]  %s627, 256, %s629, [#allocation9], 64, 64, 4
        $region60: #{multi_scale_decoder_layer_forward.1} parent=11 // pred_fallthru
          _
        // Predicated region
        $region61: #{multi_scale_decoder_layer_forward.1} parent=11 // pred_check
          %p635 = pneg %p464
        $region62: #{multi_scale_decoder_layer_forward.1} parent=11 // pred_check_branch
          %637 = sbr.rel (%p635) target = $region64
        $region63: #{multi_scale_decoder_layer_forward.1} parent=11 // pred_region
          %639 = vsyncadd [#allocation12], 0
          %s641 = sshll.u32 %s18, 4
          %s642 = int_to_ptr.hbm [resolvable:$true] %s641
          %s643 = sshll.u32 [#allocation11], 4
          %s644 = int_to_ptr.vmem [resolvable:$true] %s643
          %646 = dma.hbm_to_vmem [thread:$0]  %s642, 16, %s644, [#allocation12]
        $region64: #{multi_scale_decoder_layer_forward.1} parent=11 // pred_fallthru
          _
        // Predicated region
        $region65: #{multi_scale_decoder_layer_forward.1} parent=11 // pred_check
          %p647 = pneg %p485
        $region66: #{multi_scale_decoder_layer_forward.1} parent=11 // pred_check_branch
          %649 = sbr.rel (%p647) target = $region68
        $region67: #{multi_scale_decoder_layer_forward.1} parent=11 // pred_region
          _
        $region68: #{multi_scale_decoder_layer_forward.1} parent=11 // pred_fallthru
          _
      $region12: #{multi_scale_decoder_layer_forward.1} parent=5 // pred_fallthru
        _
      %p650 = scmp.lt.s32.totalorder %s35, 2
      // Predicated region
      $region69: #{multi_scale_decoder_layer_forward.1} parent=5 // pred_check
        %p651 = pneg %p650
      $region70: #{multi_scale_decoder_layer_forward.1} parent=5 // pred_check_branch
        %653 = sbr.rel (%p651) target = $region72
      $region71: #{multi_scale_decoder_layer_forward.1} parent=5 // pred_region
        // Predicated region
        $region73: #{multi_scale_decoder_layer_forward.1} parent=71 // pred_check
          %p654 = pneg %p55
        $region74: #{multi_scale_decoder_layer_forward.1} parent=71 // pred_check_branch
          %656 = sbr.rel (%p654) target = $region76
        $region75: #{multi_scale_decoder_layer_forward.1} parent=71 // pred_region
          %p657 = scmp.lt.s32.totalorder %s35, 1
          %s658 = scalar_select %p657, %s35, 1
          %s659 = smul.addr %s658, 4
          %s660 = scalar_lea.vmem %s0, %s659
        $region76: #{multi_scale_decoder_layer_forward.1} parent=71 // pred_fallthru
          _
        // Predicated region
        $region77: #{multi_scale_decoder_layer_forward.1} parent=71 // pred_check
          %p661 = pneg %p81
        $region78: #{multi_scale_decoder_layer_forward.1} parent=71 // pred_check_branch
          %663 = sbr.rel (%p661) target = $region80
        $region79: #{multi_scale_decoder_layer_forward.1} parent=71 // pred_region
          %p664 = scmp.lt.s32.totalorder %s35, 1
          %s665 = scalar_select %p664, %s35, 1
          %s666 = smul.addr %s665, 4
          %s667 = scalar_lea.vmem %s1, %s666
        $region80: #{multi_scale_decoder_layer_forward.1} parent=71 // pred_fallthru
          _
        // Predicated region
        $region81: #{multi_scale_decoder_layer_forward.1} parent=71 // pred_check
          %p668 = pneg %p107
        $region82: #{multi_scale_decoder_layer_forward.1} parent=71 // pred_check_branch
          %670 = sbr.rel (%p668) target = $region84
        $region83: #{multi_scale_decoder_layer_forward.1} parent=71 // pred_region
          %p671 = scmp.lt.s32.totalorder %s35, 1
          %s672 = scalar_select %p671, %s35, 1
          %s673 = smul.addr %s672, 3
          %s674 = smul.addr %s673, 4
          %s675 = scalar_lea.vmem %s2, %s674
        $region84: #{multi_scale_decoder_layer_forward.1} parent=71 // pred_fallthru
          _
        // Predicated region
        $region85: #{multi_scale_decoder_layer_forward.1} parent=71 // pred_check
          %p676 = pneg %p133
        $region86: #{multi_scale_decoder_layer_forward.1} parent=71 // pred_check_branch
          %678 = sbr.rel (%p676) target = $region88
        $region87: #{multi_scale_decoder_layer_forward.1} parent=71 // pred_region
          %p679 = scmp.lt.s32.totalorder %s35, 1
          %s680 = scalar_select %p679, %s35, 1
          %s681 = smul.addr %s680, 3
          %s682 = smul.addr %s681, 4
          %s683 = scalar_lea.vmem %s3, %s682
        $region88: #{multi_scale_decoder_layer_forward.1} parent=71 // pred_fallthru
          _
        // Predicated region
        $region89: #{multi_scale_decoder_layer_forward.1} parent=71 // pred_check
          %p684 = pneg %p159
        $region90: #{multi_scale_decoder_layer_forward.1} parent=71 // pred_check_branch
          %686 = sbr.rel (%p684) target = $region92
        $region91: #{multi_scale_decoder_layer_forward.1} parent=71 // pred_region
          %p687 = scmp.lt.s32.totalorder %s35, 1
          %s688 = scalar_select %p687, %s35, 1
          %s689 = smul.addr %s688, 4
          %s690 = scalar_lea.vmem %s4, %s689
        $region92: #{multi_scale_decoder_layer_forward.1} parent=71 // pred_fallthru
          _
        // Predicated region
        $region93: #{multi_scale_decoder_layer_forward.1} parent=71 // pred_check
          %p691 = pneg %p206
        $region94: #{multi_scale_decoder_layer_forward.1} parent=71 // pred_check_branch
          %693 = sbr.rel (%p691) target = $region96
        $region95: #{multi_scale_decoder_layer_forward.1} parent=71 // pred_region
          %p694 = scmp.lt.s32.totalorder %s35, 1
          %s695 = scalar_select %p694, %s35, 1
          %s696 = scalar_lea.vmem %s6, %s695
        $region96: #{multi_scale_decoder_layer_forward.1} parent=71 // pred_fallthru
          _
      $region72: #{multi_scale_decoder_layer_forward.1} parent=5 // pred_fallthru
        _
      %p697 = scmp.le.s32.totalorder 1, %s35
      %p698 = scmp.lt.s32.totalorder %s35, 3
      %p699 = pnand %p697, %p698
      %p700 = pneg %p699
      // Predicated region
      $region97: #{multi_scale_decoder_layer_forward.1} parent=5 // pred_check
        _
      $region98: #{multi_scale_decoder_layer_forward.1} parent=5 // pred_check_branch
        %702 = sbr.rel (%p699) target = $region100
      $region99: #{multi_scale_decoder_layer_forward.1} parent=5 // pred_region
        %s703 = ssub.s32 %s35, 1
        // Predicated region
        $region101: #{multi_scale_decoder_layer_forward.1} parent=99 // pred_check
          %p704 = pneg %p296
        $region102: #{multi_scale_decoder_layer_forward.1} parent=99 // pred_check_branch
          %706 = sbr.rel (%p704) target = $region104
        $region103: #{multi_scale_decoder_layer_forward.1} parent=99 // pred_region
          %708 = dma.done [#allocation3], 16
        $region104: #{multi_scale_decoder_layer_forward.1} parent=99 // pred_fallthru
          _
        // Predicated region
        $region105: #{multi_scale_decoder_layer_forward.1} parent=99 // pred_check
          %p709 = pneg %p338
        $region106: #{multi_scale_decoder_layer_forward.1} parent=99 // pred_check_branch
          %711 = sbr.rel (%p709) target = $region108
        $region107: #{multi_scale_decoder_layer_forward.1} parent=99 // pred_region
          %713 = dma.done [#allocation6], 16
        $region108: #{multi_scale_decoder_layer_forward.1} parent=99 // pred_fallthru
          _
        // Predicated region
        $region109: #{multi_scale_decoder_layer_forward.1} parent=99 // pred_check
          %p714 = pneg %p380
        $region110: #{multi_scale_decoder_layer_forward.1} parent=99 // pred_check_branch
          %716 = sbr.rel (%p714) target = $region112
        $region111: #{multi_scale_decoder_layer_forward.1} parent=99 // pred_region
          %718 = dma.done [#allocation6], 16
        $region112: #{multi_scale_decoder_layer_forward.1} parent=99 // pred_fallthru
          _
        // Predicated region
        $region113: #{multi_scale_decoder_layer_forward.1} parent=99 // pred_check
          %p719 = pneg %p422
        $region114: #{multi_scale_decoder_layer_forward.1} parent=99 // pred_check_branch
          %721 = sbr.rel (%p719) target = $region116
        $region115: #{multi_scale_decoder_layer_forward.1} parent=99 // pred_region
          %723 = dma.done [#allocation9], 16
        $region116: #{multi_scale_decoder_layer_forward.1} parent=99 // pred_fallthru
          _
        // Predicated region
        $region117: #{multi_scale_decoder_layer_forward.1} parent=99 // pred_check
          %p724 = pneg %p443
        $region118: #{multi_scale_decoder_layer_forward.1} parent=99 // pred_check_branch
          %726 = sbr.rel (%p724) target = $region120
        $region119: #{multi_scale_decoder_layer_forward.1} parent=99 // pred_region
          %728 = dma.done [#allocation9], 256
        $region120: #{multi_scale_decoder_layer_forward.1} parent=99 // pred_fallthru
          _
        // Predicated region
        $region121: #{multi_scale_decoder_layer_forward.1} parent=99 // pred_check
          %p729 = pneg %p464
        $region122: #{multi_scale_decoder_layer_forward.1} parent=99 // pred_check_branch
          %731 = sbr.rel (%p729) target = $region124
        $region123: #{multi_scale_decoder_layer_forward.1} parent=99 // pred_region
          %733 = dma.done [#allocation12], 16
        $region124: #{multi_scale_decoder_layer_forward.1} parent=99 // pred_fallthru
          _
        %p734 = scmp.lt.s32.totalorder %s40, 1
        %s735 = scalar_select %p734, %s40, 1
        %s736 = smul.addr %s735, 4
        %s737 = scalar_lea.vmem %s0, %s736
        %p738 = pneg %p61
        %p739 = pneg %p58
        %p740 = scmp.lt.s32.totalorder %s40, 1
        %s741 = scalar_select %p740, %s40, 1
        %s742 = smul.addr %s741, 4
        %s743 = scalar_lea.vmem %s1, %s742
        %p744 = pneg %p87
        %p745 = pneg %p84
        %p746 = scmp.lt.s32.totalorder %s40, 1
        %s747 = scalar_select %p746, %s40, 1
        %s748 = smul.addr %s747, 3
        %s749 = smul.addr %s748, 4
        %s750 = scalar_lea.vmem %s2, %s749
        %p751 = pneg %p113
        %p752 = pneg %p110
        %p753 = scmp.lt.s32.totalorder %s40, 1
        %s754 = scalar_select %p753, %s40, 1
        %s755 = smul.addr %s754, 3
        %s756 = smul.addr %s755, 4
        %s757 = scalar_lea.vmem %s3, %s756
        %p758 = pneg %p139
        %p759 = pneg %p136
        %p760 = scmp.lt.s32.totalorder %s40, 1
        %s761 = scalar_select %p760, %s40, 1
        %s762 = smul.addr %s761, 4
        %s763 = scalar_lea.vmem %s4, %s762
        %p764 = pneg %p165
        %p765 = pneg %p162
        %p766 = pneg %p186
        %p767 = pneg %p183
        %p768 = scmp.lt.s32.totalorder %s40, 1
        %s769 = scalar_select %p768, %s40, 1
        %s770 = scalar_lea.vmem %s6, %s769
        %p771 = pneg %p212
        %p772 = pneg %p209
        %p773 = pneg %p233
        %p774 = pneg %p230
        %p775 = pneg %p254
        %p776 = pneg %p251
        %p777 = pneg %p275
        %p778 = pneg %p272
        %p779 = pneg %p296
        %p780 = pneg %p293
        %p781 = pneg %p317
        %p782 = pneg %p314
        %p783 = pneg %p338
        %p784 = pneg %p335
        %p785 = pneg %p359
        %p786 = pneg %p356
        %p787 = pneg %p380
        %p788 = pneg %p377
        %p789 = pneg %p401
        %p790 = pneg %p398
        %p791 = pneg %p422
        %p792 = pneg %p419
        %p793 = pneg %p443
        %p794 = pneg %p440
        %p795 = pneg %p464
        %p796 = pneg %p461
        %p797 = pneg %p485
        %p798 = pneg %p482
        %p799 = pneg %p511
        %p800 = pneg %p508
        %p801 = scmp.lt.s32.totalorder %s40, 1
        %s802 = scalar_select %p801, %s40, 1
        %s803 = smul.addr %s802, 8
        %s804 = scalar_lea.vmem %s20, %s803
        %p805 = pneg %p537
        %p806 = pneg %p534
        %s807 = sand.u32 %s524, 1
        %s808 = scalar_lea.sflag [#allocation4], %s807
        %s809 = sand.u32 %s524, 1
        %s810 = smul.addr %s809, 8
        %s811 = scalar_lea.vmem [#allocation13], %s810
        %p812 = scmp.lt.s32.totalorder %s40, 1
        %s813 = scalar_select %p812, %s40, 1
        %s814 = smul.addr %s813, 4
        %s815 = scalar_lea.vmem %s0, %s814
        %p816 = scmp.lt.s32.totalorder %s40, 1
        %s817 = scalar_select %p816, %s40, 1
        %s818 = smul.addr %s817, 4
        %s819 = scalar_lea.vmem %s1, %s818
        %p820 = scmp.lt.s32.totalorder %s40, 1
        %s821 = scalar_select %p820, %s40, 1
        %s822 = smul.addr %s821, 3
        %s823 = smul.addr %s822, 4
        %s824 = scalar_lea.vmem %s2, %s823
        %p825 = scmp.lt.s32.totalorder %s40, 1
        %s826 = scalar_select %p825, %s40, 1
        %s827 = smul.addr %s826, 3
        %s828 = smul.addr %s827, 4
        %s829 = scalar_lea.vmem %s3, %s828
        %p830 = scmp.lt.s32.totalorder %s40, 1
        %s831 = scalar_select %p830, %s40, 1
        %s832 = smul.addr %s831, 4
        %s833 = scalar_lea.vmem %s4, %s832
        %p834 = scmp.lt.s32.totalorder %s40, 1
        %s835 = scalar_select %p834, %s40, 1
        %s836 = scalar_lea.vmem %s6, %s835
        %p837 = scmp.lt.s32.totalorder %s40, 1
        %s838 = scalar_select %p837, %s40, 1
        %s839 = smul.addr %s838, 8
        %s840 = scalar_lea.vmem %s20, %s839
        %v842 = vld [vmem:[%s815] sm:$0xf]
        %v843 = vld [vmem:[%s819] sm:$0xf]
        %v844 = vld [vmem:[%s9] sm:$0xf]
        %v845 = vld [vmem:[%s9 + $0x4] sm:$0xf]
        %v846 = vld [vmem:[%s9 + $0x8] sm:$0xf]
        %v847 = vld [vmem:[%s9 + $0xc] sm:$0xf]
        %v848 = vld [vmem:[#allocation2] sm:$0x1]
        %v850 = vperm.slane %v848, 0
        %v856 = vunpack.c.l.b16 %v844
        %v857 = vunpack.c.l.b16 %v845
        %v858 = vunpack.c.l.b16 %v846
        %v859 = vunpack.c.l.b16 %v847
        %v860 = vpack.c.b16 %v857, %v856
        %v861 = vpack.c.b16 %v859, %v858
        %vm864 = vcmask 261120
        %v866 = vsel %vm864, %v842, 0
        %868 = vmatpush.bf16.msra.mxu0 0
        %869 = vmatpush.bf16.msra.mxu0 0
        %870 = vmatpush.bf16.msra.mxu0 0
        %871 = vmatpush.bf16.msra.mxu0 0
        %872 = vmatpush.bf16.msra.mxu0 0
        %873 = vmatpush.bf16.msra.mxu0 0
        %874 = vmatpush.bf16.msra.mxu0 %v861
        %875 = vmatpush.bf16.msra.mxu0 %v860
        %876 = vmatmul.bf16.gmra.mxu0 %v866
        %v877 = vpop.f32.mrf.mxu0
        %v878 = vadd.f32 %v850, %v877
        %v879 = vpop.f32.mrf.mxu0
        %880 = vdwg.mxu0
        %v881 = vld [vmem:[%s11] sm:$0xf]
        %v882 = vld [vmem:[%s11 + $0x4] sm:$0xf]
        %v883 = vld [vmem:[%s11 + $0x8] sm:$0xf]
        %v884 = vld [vmem:[%s11 + $0xc] sm:$0xf]
        %v885 = vld [vmem:[#allocation5] sm:$0x1]
        %v887 = vperm.slane %v885, 0
        %v893 = vunpack.c.l.b16 %v881
        %v894 = vunpack.c.l.b16 %v882
        %v895 = vunpack.c.l.b16 %v883
        %v896 = vunpack.c.l.b16 %v884
        %v897 = vpack.c.b16 %v894, %v893
        %v898 = vpack.c.b16 %v896, %v895
        %v902 = vsel %vm864, %v843, 0
        %904 = vmatpush.bf16.msra.mxu0 0
        %905 = vmatpush.bf16.msra.mxu0 0
        %906 = vmatpush.bf16.msra.mxu0 0
        %907 = vmatpush.bf16.msra.mxu0 0
        %908 = vmatpush.bf16.msra.mxu0 0
        %909 = vmatpush.bf16.msra.mxu0 0
        %910 = vmatpush.bf16.msra.mxu0 %v898
        %911 = vmatpush.bf16.msra.mxu0 %v897
        %912 = vmatmul.bf16.gmra.mxu0 %v902
        %v913 = vpop.f32.mrf.mxu0
        %v914 = vadd.f32 %v887, %v913
        %v915 = vpop.f32.mrf.mxu0
        %916 = vdwg.mxu0
        %v917 = vadd.f32 %v878, %v914
        %v918 = vpack.c.bf16 %v917, %v917
        %v919 = vpack.c.bf16 %v878, %v878
        %v920 = vld [vmem:[%s15] sm:$0xf]
        %v921 = vld [vmem:[%s15 + $0x4] sm:$0xf]
        %v922 = vld [vmem:[%s15 + $0x8] sm:$0xf]
        %v923 = vld [vmem:[%s15 + $0xc] sm:$0xf]
        %v924 = vld [vmem:[#allocation8] sm:$0x1]
        %v926 = vperm.slane %v924, 0
        %v932 = vunpack.c.l.b16 %v920
        %v933 = vunpack.c.l.b16 %v921
        %v934 = vunpack.c.l.b16 %v922
        %v935 = vunpack.c.l.b16 %v923
        %v936 = vpack.c.b16 %v933, %v932
        %v937 = vpack.c.b16 %v935, %v934
        %v941 = vsel %vm864, %v918, 0
        %943 = vmatpush.bf16.msra.mxu0 0
        %944 = vmatpush.bf16.msra.mxu0 0
        %945 = vmatpush.bf16.msra.mxu0 0
        %946 = vmatpush.bf16.msra.mxu0 0
        %947 = vmatpush.bf16.msra.mxu0 0
        %948 = vmatpush.bf16.msra.mxu0 0
        %949 = vmatpush.bf16.msra.mxu0 %v937
        %950 = vmatpush.bf16.msra.mxu0 %v936
        %951 = vmatmul.bf16.gmra.mxu0 %v941
        %v952 = vpop.f32.mrf.mxu0
        %v953 = vadd.f32 %v926, %v952
        %v954 = vpop.f32.mrf.mxu0
        %955 = vdwg.mxu0
        %vm956 = vcmask 15360
        %v957 = vsel %vm956, %v953, -inf
        %958 = vmax.xlane.f32.xlu0 %v957
        %v959 = vpop.xlane.xlu0 %958
        %v960 = vsub.f32 %v953, %v959
        %v961 = vmul.f32 %v960, 1.442695
        %v962 = vpow.pop %v961
        %v963 = vsel %vm956, %v962, 0.0
        %964 = vadd.xlane.f32.xlu0 %v963
        %v965 = vpop.xlane.xlu0 %964
        %v966 = vrcp.pop %v965
        %v967 = vmul.f32 %v962, %v966
        %v968 = vmul.f32 %v917, 0.35355338
        %v969 = vpack.c.bf16 %v968, %v968
        %v971 = vunpack.c.l.b16 %v918
        %v972 = vpack.c.b16 %v971, %v971
        %973 = vrot.lane.b32.xlu0 %v972, 96
        %v974 = vpop.permute.xlu0 %973
        %vm975 = vcmask 64512
        %v977 = vsel %vm975, %v969, 0
        %v980 = vsel %vm975, %v974, 0
        %982 = vmatpush.bf16.xpose.msra.mxu0 0
        %983 = vmatpush.bf16.xpose.msra.mxu0 0
        %984 = vmatpush.bf16.xpose.msra.mxu0 0
        %985 = vmatpush.bf16.xpose.msra.mxu0 0
        %986 = vmatpush.bf16.xpose.msra.mxu0 0
        %987 = vmatpush.bf16.xpose.msra.mxu0 0
        %988 = vmatpush.bf16.xpose.msra.mxu0 0
        %989 = vmatpush.bf16.xpose.msra.mxu0 %v980
        %990 = vmatmul.bf16.gmra.mxu0 %v977
        %v991 = vpop.f32.mrf.mxu0
        %v992 = vadd.f32 0.0, %v991
        %v993 = vpop.f32.mrf.mxu0
        %994 = vdwg.mxu0
        %v995 = vsel %vm975, %v992, -inf
        %996 = vmax.xlane.f32.xlu0 %v995
        %v997 = vpop.xlane.xlu0 %996
        %v998 = vsub.f32 %v992, %v997
        %v999 = vmul.f32 %v998, 1.442695
        %v1000 = vpow.pop %v999
        %v1001 = vsel %vm975, %v1000, 0.0
        %1002 = vadd.xlane.f32.xlu0 %v1001
        %v1003 = vpop.xlane.xlu0 %1002
        %v1004 = vrcp.pop %v1003
        %v1005 = vmul.f32 %v1000, %v1004
        %v1006 = vpack.c.bf16 %v1005, %v1005
        %v1008 = vunpack.c.l.b16 %v919
        %v1009 = vpack.c.b16 %v1008, %v1008
        %1010 = vrot.lane.b32.xlu0 %v1009, 64
        %v1011 = vpop.permute.xlu0 %1010
        %v1013 = vsel %vm975, %v1006, 0
        %vm1015 = vcmask 1043456
        %v1017 = vsel %vm1015, %v1011, 0
        %1019 = vmatpush.bf16.msra.mxu0 0
        %1020 = vmatpush.bf16.msra.mxu0 0
        %1021 = vmatpush.bf16.msra.mxu0 0
        %1022 = vmatpush.bf16.msra.mxu0 0
        %1023 = vmatpush.bf16.msra.mxu0 0
        %1024 = vmatpush.bf16.msra.mxu0 0
        %1025 = vmatpush.bf16.msra.mxu0 0
        %1026 = vmatpush.bf16.msra.mxu0 %v1017
        %1027 = vmatmul.bf16.gmra.mxu0 %v1013
        %v1028 = vpop.f32.mrf.mxu0
        %v1029 = vadd.f32 0.0, %v1028
        %v1030 = vpop.f32.mrf.mxu0
        %1031 = vdwg.mxu0
        %v1033 = vunpack.c.l.b16 %v969
        %v1034 = vpack.c.b16 %v1033, %v1033
        %1035 = vrot.lane.b32.xlu0 %v1034, 120
        %v1036 = vpop.permute.xlu0 %1035
        %1037 = vrot.lane.b32.xlu0 %v972, 88
        %v1038 = vpop.permute.xlu0 %1037
        %v1040 = vsel %vm975, %v1036, 0
        %v1043 = vsel %vm975, %v1038, 0
        %1045 = vmatpush.bf16.xpose.msra.mxu0 0
        %1046 = vmatpush.bf16.xpose.msra.mxu0 0
        %1047 = vmatpush.bf16.xpose.msra.mxu0 0
        %1048 = vmatpush.bf16.xpose.msra.mxu0 0
        %1049 = vmatpush.bf16.xpose.msra.mxu0 0
        %1050 = vmatpush.bf16.xpose.msra.mxu0 0
        %1051 = vmatpush.bf16.xpose.msra.mxu0 0
        %1052 = vmatpush.bf16.xpose.msra.mxu0 %v1043
        %1053 = vmatmul.bf16.gmra.mxu0 %v1040
        %v1054 = vpop.f32.mrf.mxu0
        %v1055 = vadd.f32 0.0, %v1054
        %v1056 = vpop.f32.mrf.mxu0
        %1057 = vdwg.mxu0
        %v1058 = vsel %vm975, %v1055, -inf
        %1059 = vmax.xlane.f32.xlu0 %v1058
        %v1060 = vpop.xlane.xlu0 %1059
        %v1061 = vsub.f32 %v1055, %v1060
        %v1062 = vmul.f32 %v1061, 1.442695
        %v1063 = vpow.pop %v1062
        %v1064 = vsel %vm975, %v1063, 0.0
        %1065 = vadd.xlane.f32.xlu0 %v1064
        %v1066 = vpop.xlane.xlu0 %1065
        %v1067 = vrcp.pop %v1066
        %v1068 = vmul.f32 %v1063, %v1067
        %v1069 = vpack.c.bf16 %v1068, %v1068
        %1070 = vrot.lane.b32.xlu0 %v1009, 56
        %v1071 = vpop.permute.xlu0 %1070
        %v1073 = vsel %vm975, %v1069, 0
        %v1076 = vsel %vm1015, %v1071, 0
        %1078 = vmatpush.bf16.msra.mxu0 0
        %1079 = vmatpush.bf16.msra.mxu0 0
        %1080 = vmatpush.bf16.msra.mxu0 0
        %1081 = vmatpush.bf16.msra.mxu0 0
        %1082 = vmatpush.bf16.msra.mxu0 0
        %1083 = vmatpush.bf16.msra.mxu0 0
        %1084 = vmatpush.bf16.msra.mxu0 0
        %1085 = vmatpush.bf16.msra.mxu0 %v1076
        %1086 = vmatmul.bf16.gmra.mxu0 %v1073
        %v1087 = vpop.f32.mrf.mxu0
        %v1088 = vadd.f32 0.0, %v1087
        %v1089 = vpop.f32.mrf.mxu0
        %1090 = vdwg.mxu0
        %1091 = vrot.lane.b32.xlu0 %v1034, 112
        %v1092 = vpop.permute.xlu0 %1091
        %1093 = vrot.lane.b32.xlu0 %v972, 80
        %v1094 = vpop.permute.xlu0 %1093
        %v1096 = vsel %vm975, %v1092, 0
        %v1099 = vsel %vm975, %v1094, 0
        %1101 = vmatpush.bf16.xpose.msra.mxu0 0
        %1102 = vmatpush.bf16.xpose.msra.mxu0 0
        %1103 = vmatpush.bf16.xpose.msra.mxu0 0
        %1104 = vmatpush.bf16.xpose.msra.mxu0 0
        %1105 = vmatpush.bf16.xpose.msra.mxu0 0
        %1106 = vmatpush.bf16.xpose.msra.mxu0 0
        %1107 = vmatpush.bf16.xpose.msra.mxu0 0
        %1108 = vmatpush.bf16.xpose.msra.mxu0 %v1099
        %1109 = vmatmul.bf16.gmra.mxu0 %v1096
        %v1110 = vpop.f32.mrf.mxu0
        %v1111 = vadd.f32 0.0, %v1110
        %v1112 = vpop.f32.mrf.mxu0
        %1113 = vdwg.mxu0
        %v1114 = vsel %vm975, %v1111, -inf
        %1115 = vmax.xlane.f32.xlu0 %v1114
        %v1116 = vpop.xlane.xlu0 %1115
        %v1117 = vsub.f32 %v1111, %v1116
        %v1118 = vmul.f32 %v1117, 1.442695
        %v1119 = vpow.pop %v1118
        %v1120 = vsel %vm975, %v1119, 0.0
        %1121 = vadd.xlane.f32.xlu0 %v1120
        %v1122 = vpop.xlane.xlu0 %1121
        %v1123 = vrcp.pop %v1122
        %v1124 = vmul.f32 %v1119, %v1123
        %v1125 = vpack.c.bf16 %v1124, %v1124
        %1126 = vrot.lane.b32.xlu0 %v1009, 48
        %v1127 = vpop.permute.xlu0 %1126
        %v1129 = vsel %vm975, %v1125, 0
        %v1132 = vsel %vm1015, %v1127, 0
        %1134 = vmatpush.bf16.msra.mxu0 0
        %1135 = vmatpush.bf16.msra.mxu0 0
        %1136 = vmatpush.bf16.msra.mxu0 0
        %1137 = vmatpush.bf16.msra.mxu0 0
        %1138 = vmatpush.bf16.msra.mxu0 0
        %1139 = vmatpush.bf16.msra.mxu0 0
        %1140 = vmatpush.bf16.msra.mxu0 0
        %1141 = vmatpush.bf16.msra.mxu0 %v1132
        %1142 = vmatmul.bf16.gmra.mxu0 %v1129
        %v1143 = vpop.f32.mrf.mxu0
        %v1144 = vadd.f32 0.0, %v1143
        %v1145 = vpop.f32.mrf.mxu0
        %1146 = vdwg.mxu0
        %1147 = vrot.lane.b32.xlu0 %v1034, 104
        %v1148 = vpop.permute.xlu0 %1147
        %1149 = vrot.lane.b32.xlu0 %v972, 72
        %v1150 = vpop.permute.xlu0 %1149
        %v1152 = vsel %vm975, %v1148, 0
        %v1155 = vsel %vm975, %v1150, 0
        %1157 = vmatpush.bf16.xpose.msra.mxu0 0
        %1158 = vmatpush.bf16.xpose.msra.mxu0 0
        %1159 = vmatpush.bf16.xpose.msra.mxu0 0
        %1160 = vmatpush.bf16.xpose.msra.mxu0 0
        %1161 = vmatpush.bf16.xpose.msra.mxu0 0
        %1162 = vmatpush.bf16.xpose.msra.mxu0 0
        %1163 = vmatpush.bf16.xpose.msra.mxu0 0
        %1164 = vmatpush.bf16.xpose.msra.mxu0 %v1155
        %1165 = vmatmul.bf16.gmra.mxu0 %v1152
        %v1166 = vpop.f32.mrf.mxu0
        %v1167 = vadd.f32 0.0, %v1166
        %v1168 = vpop.f32.mrf.mxu0
        %1169 = vdwg.mxu0
        %v1170 = vsel %vm975, %v1167, -inf
        %1171 = vmax.xlane.f32.xlu0 %v1170
        %v1172 = vpop.xlane.xlu0 %1171
        %v1173 = vsub.f32 %v1167, %v1172
        %v1174 = vmul.f32 %v1173, 1.442695
        %v1175 = vpow.pop %v1174
        %v1176 = vsel %vm975, %v1175, 0.0
        %1177 = vadd.xlane.f32.xlu0 %v1176
        %v1178 = vpop.xlane.xlu0 %1177
        %v1179 = vrcp.pop %v1178
        %v1180 = vmul.f32 %v1175, %v1179
        %v1181 = vpack.c.bf16 %v1180, %v1180
        %1182 = vrot.lane.b32.xlu0 %v1009, 40
        %v1183 = vpop.permute.xlu0 %1182
        %v1185 = vsel %vm975, %v1181, 0
        %v1188 = vsel %vm1015, %v1183, 0
        %1190 = vmatpush.bf16.msra.mxu0 0
        %1191 = vmatpush.bf16.msra.mxu0 0
        %1192 = vmatpush.bf16.msra.mxu0 0
        %1193 = vmatpush.bf16.msra.mxu0 0
        %1194 = vmatpush.bf16.msra.mxu0 0
        %1195 = vmatpush.bf16.msra.mxu0 0
        %1196 = vmatpush.bf16.msra.mxu0 0
        %1197 = vmatpush.bf16.msra.mxu0 %v1188
        %1198 = vmatmul.bf16.gmra.mxu0 %v1185
        %v1199 = vpop.f32.mrf.mxu0
        %v1200 = vadd.f32 0.0, %v1199
        %v1201 = vpop.f32.mrf.mxu0
        %1202 = vdwg.mxu0
        %1204 = vrot.lane.b32.xlu0 %v1088, 8
        %v1205 = vpop.permute.xlu0 %1204
        %1208 = vrot.lane.b32.xlu0 %v1144, 16
        %v1209 = vpop.permute.xlu0 %1208
        %1212 = vrot.lane.b32.xlu0 %v1200, 24
        %v1213 = vpop.permute.xlu0 %1212
        %v1215 = vsel %vm975, %v1029, %v1205
        %vm1216 = vcmask 130048
        %v1217 = vsel %vm1216, %v1215, %v1209
        %vm1218 = vcmask 195584
        %v1219 = vsel %vm1218, %v1217, %v1213
        %v1220 = vld [vmem:[%s7] sm:$0xf]
        %v1221 = vld [vmem:[%s7 + $0x4] sm:$0xf]
        %v1222 = vld [vmem:[%s7 + $0x8] sm:$0xf]
        %v1223 = vld [vmem:[%s7 + $0xc] sm:$0xf]
        %v1224 = vpack.c.bf16 %v1219, %v1219
        %v1225 = vld [vmem:[%s8] sm:$0x1]
        %v1226 = vperm.slane %v1225, 0
        %v1231 = vunpack.c.l.b16 %v1220
        %v1232 = vunpack.c.l.b16 %v1221
        %v1233 = vunpack.c.l.b16 %v1222
        %v1234 = vunpack.c.l.b16 %v1223
        %v1235 = vpack.c.b16 %v1232, %v1231
        %v1236 = vpack.c.b16 %v1234, %v1233
        %v1240 = vsel %vm864, %v1224, 0
        %1242 = vmatpush.bf16.msra.mxu0 0
        %1243 = vmatpush.bf16.msra.mxu0 0
        %1244 = vmatpush.bf16.msra.mxu0 0
        %1245 = vmatpush.bf16.msra.mxu0 0
        %1246 = vmatpush.bf16.msra.mxu0 0
        %1247 = vmatpush.bf16.msra.mxu0 0
        %1248 = vmatpush.bf16.msra.mxu0 %v1236
        %1249 = vmatpush.bf16.msra.mxu0 %v1235
        %1250 = vmatmul.bf16.gmra.mxu0 %v1240
        %v1251 = vpop.f32.mrf.mxu0
        %v1252 = vadd.f32 %v1226, %v1251
        %v1253 = vpop.f32.mrf.mxu0
        %1254 = vdwg.mxu0
        %v1255 = vunpack.c.l.bf16 %v842
        %v1256 = vadd.f32 %v1255, %v1252
        %v1257 = vsel %vm864, %v1256, 0.0
        %1258 = vadd.xlane.f32.xlu0 %v1257
        %v1259 = vpop.xlane.xlu0 %1258
        %v1260 = vrcp.pop 32.0
        %v1261 = vmul.f32 32.0, %v1260
        %v1262 = vsub.f32 1.0, %v1261
        %v1263 = vmul.f32 %v1260, %v1262
        %v1264 = vadd.f32 %v1260, %v1263
        %vm1265 = vweird.f32 %v1260
        %v1266 = vsel %vm1265, %v1260, %v1264
        %v1267 = vmul.f32 %v1259, %v1266
        %v1268 = vsub.f32 %v1256, %v1267
        %v1269 = vmul.f32 %v1268, %v1268
        %v1270 = vsel %vm864, %v1269, 0.0
        %1271 = vadd.xlane.f32.xlu0 %v1270
        %v1272 = vpop.xlane.xlu0 %1271
        %v1273 = vmul.f32 %v1272, %v1266
        %v1274 = vadd.f32 %v1273, 1e-05
        %v1275 = vrsqrt.pop %v1274
        %v1276 = vmul.f32 %v1275, %v1274
        %v1277 = vmul.f32 %v1276, %v1275
        %v1278 = vmul.f32 0.5, %v1277
        %v1279 = vsub.f32 1.5, %v1278
        %v1280 = vmul.f32 %v1275, %v1279
        %vm1281 = vweird.f32 %v1274
        %vm1282 = vweird.f32 %v1275
        %vm1283 = vmor %vm1281, %vm1282
        %v1284 = vsel %vm1283, %v1275, %v1280
        %v1285 = vmul.f32 %v1268, %v1284
        %v1286 = vld [vmem:[%s8 + $0x7] sm:$0x1]
        %v1287 = vperm.slane %v1286, 0
        %v1288 = vmul.f32 %v1285, %v1287
        %v1289 = vld [vmem:[%s8 + $0x8] sm:$0x1]
        %v1290 = vperm.slane %v1289, 0
        %v1291 = vadd.f32 %v1288, %v1290
        %s1292 = scalar_lea.vmem %s7, 16
        %v1293 = vld [vmem:[%s1292] sm:$0xf]
        %v1294 = vld [vmem:[%s1292 + $0x4] sm:$0xf]
        %v1295 = vld [vmem:[%s1292 + $0x8] sm:$0xf]
        %v1296 = vld [vmem:[%s1292 + $0xc] sm:$0xf]
        %v1297 = vpack.c.bf16 %v1291, %v1291
        %v1298 = vld [vmem:[%s8 + $0x1] sm:$0x1]
        %v1299 = vperm.slane %v1298, 0
        %v1304 = vunpack.c.l.b16 %v1293
        %v1305 = vunpack.c.l.b16 %v1294
        %v1306 = vunpack.c.l.b16 %v1295
        %v1307 = vunpack.c.l.b16 %v1296
        %v1308 = vpack.c.b16 %v1305, %v1304
        %v1309 = vpack.c.b16 %v1307, %v1306
        %v1313 = vsel %vm864, %v1297, 0
        %1315 = vmatpush.bf16.msra.mxu0 0
        %1316 = vmatpush.bf16.msra.mxu0 0
        %1317 = vmatpush.bf16.msra.mxu0 0
        %1318 = vmatpush.bf16.msra.mxu0 0
        %1319 = vmatpush.bf16.msra.mxu0 0
        %1320 = vmatpush.bf16.msra.mxu0 0
        %1321 = vmatpush.bf16.msra.mxu0 %v1309
        %1322 = vmatpush.bf16.msra.mxu0 %v1308
        %1323 = vmatmul.bf16.gmra.mxu0 %v1313
        %v1324 = vpop.f32.mrf.mxu0
        %v1325 = vadd.f32 %v1299, %v1324
        %v1326 = vpop.f32.mrf.mxu0
        %1327 = vdwg.mxu0
        %v1328 = vld [vmem:[%s824] sm:$0xf]
        %v1329 = vld [vmem:[%s824 + $0x4] sm:$0xf]
        %v1330 = vld [vmem:[%s824 + $0x8] sm:$0xf]
        %v1331 = vld [vmem:[%s13] sm:$0xf]
        %v1332 = vld [vmem:[%s13 + $0x4] sm:$0xf]
        %v1333 = vld [vmem:[%s13 + $0x8] sm:$0xf]
        %v1334 = vld [vmem:[%s13 + $0xc] sm:$0xf]
        %v1335 = vld [vmem:[#allocation7] sm:$0x1]
        %v1337 = vperm.slane %v1335, 0
        %v1342 = vunpack.c.l.b16 %v1328
        %v1343 = vunpack.c.l.b16 %v1329
        %v1344 = vunpack.c.l.b16 %v1330
        %v1345 = vpack.c.b16 %v1343, %v1342
        %v1346 = vpack.c.b16 %v1344, %v1344
        %v1351 = vunpack.c.l.b16 %v1331
        %v1352 = vunpack.c.l.b16 %v1332
        %v1353 = vunpack.c.l.b16 %v1333
        %v1354 = vunpack.c.l.b16 %v1334
        %v1355 = vpack.c.b16 %v1352, %v1351
        %v1356 = vpack.c.b16 %v1354, %v1353
        %v1360 = vsel %vm864, %v1345, 0
        %v1363 = vsel %vm864, %v1346, 0
        %1365 = vmatpush.bf16.msra.mxu0 0
        %1366 = vmatpush.bf16.msra.mxu0 0
        %1367 = vmatpush.bf16.msra.mxu0 0
        %1368 = vmatpush.bf16.msra.mxu0 0
        %1369 = vmatpush.bf16.msra.mxu0 0
        %1370 = vmatpush.bf16.msra.mxu0 0
        %1371 = vmatpush.bf16.msra.mxu0 %v1356
        %1372 = vmatpush.bf16.msra.mxu0 %v1355
        %1373 = vmatmul.bf16.gmra.mxu0 %v1360
        %v1374 = vpop.f32.mrf.mxu0
        %v1375 = vadd.f32 %v1337, %v1374
        %v1376 = vpop.f32.mrf.mxu0
        %v1377 = vadd.f32 %v1337, %v1376
        %1378 = vmatmul.bf16.gmra.mxu0 %v1363
        %v1379 = vpop.f32.mrf.mxu0
        %v1380 = vadd.f32 %v1337, %v1379
        %v1381 = vpop.f32.mrf.mxu0
        %1382 = vdwg.mxu0
        %v1383 = vld [vmem:[%s829] sm:$0xf]
        %v1384 = vld [vmem:[%s829 + $0x4] sm:$0xf]
        %v1385 = vld [vmem:[%s829 + $0x8] sm:$0xf]
        %s1386 = scalar_lea.vmem %s7, 48
        %v1387 = vld [vmem:[%s1386] sm:$0xf]
        %v1388 = vld [vmem:[%s1386 + $0x4] sm:$0xf]
        %v1389 = vld [vmem:[%s1386 + $0x8] sm:$0xf]
        %v1390 = vld [vmem:[%s1386 + $0xc] sm:$0xf]
        %v1391 = vld [vmem:[%s8 + $0x3] sm:$0x1]
        %v1392 = vperm.slane %v1391, 0
        %v1396 = vunpack.c.l.b16 %v1383
        %v1397 = vunpack.c.l.b16 %v1384
        %v1398 = vunpack.c.l.b16 %v1385
        %v1399 = vpack.c.b16 %v1397, %v1396
        %v1400 = vpack.c.b16 %v1398, %v1398
        %v1405 = vunpack.c.l.b16 %v1387
        %v1406 = vunpack.c.l.b16 %v1388
        %v1407 = vunpack.c.l.b16 %v1389
        %v1408 = vunpack.c.l.b16 %v1390
        %v1409 = vpack.c.b16 %v1406, %v1405
        %v1410 = vpack.c.b16 %v1408, %v1407
        %v1414 = vsel %vm864, %v1399, 0
        %v1417 = vsel %vm864, %v1400, 0
        %1419 = vmatpush.bf16.msra.mxu0 0
        %1420 = vmatpush.bf16.msra.mxu0 0
        %1421 = vmatpush.bf16.msra.mxu0 0
        %1422 = vmatpush.bf16.msra.mxu0 0
        %1423 = vmatpush.bf16.msra.mxu0 0
        %1424 = vmatpush.bf16.msra.mxu0 0
        %1425 = vmatpush.bf16.msra.mxu0 %v1410
        %1426 = vmatpush.bf16.msra.mxu0 %v1409
        %1427 = vmatmul.bf16.gmra.mxu0 %v1414
        %v1428 = vpop.f32.mrf.mxu0
        %v1429 = vadd.f32 %v1392, %v1428
        %v1430 = vpop.f32.mrf.mxu0
        %v1431 = vadd.f32 %v1392, %v1430
        %1432 = vmatmul.bf16.gmra.mxu0 %v1417
        %v1433 = vpop.f32.mrf.mxu0
        %v1434 = vadd.f32 %v1392, %v1433
        %v1435 = vpop.f32.mrf.mxu0
        %1436 = vdwg.mxu0
        %v1437 = vld [vmem:[%s833] sm:$0xf]
        %s1438 = scalar_lea.vmem %s7, 64
        %v1439 = vld [vmem:[%s1438] sm:$0xf]
        %v1440 = vld [vmem:[%s1438 + $0x4] sm:$0xf]
        %v1441 = vld [vmem:[%s1438 + $0x8] sm:$0xf]
        %v1442 = vld [vmem:[%s1438 + $0xc] sm:$0xf]
        %v1443 = vld [vmem:[%s8 + $0x4] sm:$0x1]
        %v1444 = vperm.slane %v1443, 0
        %v1449 = vunpack.c.l.b16 %v1439
        %v1450 = vunpack.c.l.b16 %v1440
        %v1451 = vunpack.c.l.b16 %v1441
        %v1452 = vunpack.c.l.b16 %v1442
        %v1453 = vpack.c.b16 %v1450, %v1449
        %v1454 = vpack.c.b16 %v1452, %v1451
        %v1458 = vsel %vm864, %v1437, 0
        %1460 = vmatpush.bf16.msra.mxu0 0
        %1461 = vmatpush.bf16.msra.mxu0 0
        %1462 = vmatpush.bf16.msra.mxu0 0
        %1463 = vmatpush.bf16.msra.mxu0 0
        %1464 = vmatpush.bf16.msra.mxu0 0
        %1465 = vmatpush.bf16.msra.mxu0 0
        %1466 = vmatpush.bf16.msra.mxu0 %v1454
        %1467 = vmatpush.bf16.msra.mxu0 %v1453
        %1468 = vmatmul.bf16.gmra.mxu0 %v1458
        %v1469 = vpop.f32.mrf.mxu0
        %v1470 = vadd.f32 %v1444, %v1469
        %v1471 = vpop.f32.mrf.mxu0
        %1472 = vdwg.mxu0
        %v1473 = vmul.f32 %v1470, 0.25
        %v1474 = vpack.c.bf16 %v1473, %v1473
        %s1475 = scalar_lea.vmem %s7, 32
        %v1476 = vld [vmem:[%s1475] sm:$0xf]
        %v1477 = vld [vmem:[%s1475 + $0x4] sm:$0xf]
        %v1478 = vld [vmem:[%s1475 + $0x8] sm:$0xf]
        %v1479 = vld [vmem:[%s1475 + $0xc] sm:$0xf]
        %v1480 = vld [vmem:[%s8 + $0x2] sm:$0x1]
        %v1481 = vperm.slane %v1480, 0
        %v1486 = vunpack.c.l.b16 %v1476
        %v1487 = vunpack.c.l.b16 %v1477
        %v1488 = vunpack.c.l.b16 %v1478
        %v1489 = vunpack.c.l.b16 %v1479
        %v1490 = vpack.c.b16 %v1487, %v1486
        %v1491 = vpack.c.b16 %v1489, %v1488
        %1494 = vmatpush.bf16.msra.mxu0 0
        %1495 = vmatpush.bf16.msra.mxu0 0
        %1496 = vmatpush.bf16.msra.mxu0 0
        %1497 = vmatpush.bf16.msra.mxu0 0
        %1498 = vmatpush.bf16.msra.mxu0 0
        %1499 = vmatpush.bf16.msra.mxu0 0
        %1500 = vmatpush.bf16.msra.mxu0 %v1491
        %1501 = vmatpush.bf16.msra.mxu0 %v1490
        %1502 = vmatmul.bf16.gmra.mxu0 %v902
        %v1503 = vpop.f32.mrf.mxu0
        %v1504 = vadd.f32 %v1481, %v1503
        %v1505 = vpop.f32.mrf.mxu0
        %1506 = vdwg.mxu0
        %v1507 = vadd.f32 %v1325, %v1504
        %v1508 = vmul.f32 %v1507, 0.25
        %v1509 = vpack.c.bf16 %v1508, %v1508
        %v1510 = vadd.f32 %v1375, %v1429
        %v1511 = vadd.f32 %v1377, %v1431
        %v1512 = vadd.f32 %v1380, %v1434
        %v1513 = vpack.c.bf16 %v1510, %v1510
        %v1514 = vpack.c.bf16 %v1511, %v1511
        %v1515 = vpack.c.bf16 %v1512, %v1512
        %v1516 = vpack.c.bf16 %v1375, %v1375
        %v1517 = vpack.c.bf16 %v1377, %v1377
        %v1518 = vpack.c.bf16 %v1380, %v1380
        %v1519 = vpack.c.bf16 %v1429, %v1429
        %v1520 = vpack.c.bf16 %v1431, %v1431
        %v1521 = vpack.c.bf16 %v1434, %v1434
        %v1522 = vld [vmem:[%s5] sm:$0xff]
        %v1523 = vld [vmem:[%s836] sm:$0x1]
        %v1525 = vperm.slane %v1523, 0
        %v1527 = vadd.f32 %v1522, %v1525
        %v1530 = vunpack.c.l.b16 %v1519
        %v1531 = vunpack.c.l.b16 %v1520
        %v1532 = vpack.c.b16 %v1531, %v1530
        %v1534 = vsel %vm975, %v1474, 0
        %v1537 = vsel %vm975, %v1532, 0
        %1539 = vmatpush.bf16.xpose.msra.mxu0 0
        %1540 = vmatpush.bf16.xpose.msra.mxu0 0
        %1541 = vmatpush.bf16.xpose.msra.mxu0 0
        %1542 = vmatpush.bf16.xpose.msra.mxu0 0
        %1543 = vmatpush.bf16.xpose.msra.mxu0 0
        %1544 = vmatpush.bf16.xpose.msra.mxu0 0
        %1545 = vmatpush.bf16.xpose.msra.mxu0 0
        %1546 = vmatpush.bf16.xpose.msra.mxu0 %v1537
        %1547 = vmatmul.bf16.gmra.mxu0 %v1534
        %v1548 = vpop.f32.mrf.mxu0
        %v1549 = vadd.f32 0.0, %v1548
        %v1550 = vpop.f32.mrf.mxu0
        %1551 = vdwg.mxu0
        %v1554 = vunpack.c.l.b16 %v1513
        %v1555 = vunpack.c.l.b16 %v1514
        %v1556 = vpack.c.b16 %v1555, %v1554
        %v1558 = vsel %vm975, %v1509, 0
        %v1561 = vsel %vm975, %v1556, 0
        %1563 = vmatpush.bf16.xpose.msra.mxu0 0
        %1564 = vmatpush.bf16.xpose.msra.mxu0 0
        %1565 = vmatpush.bf16.xpose.msra.mxu0 0
        %1566 = vmatpush.bf16.xpose.msra.mxu0 0
        %1567 = vmatpush.bf16.xpose.msra.mxu0 0
        %1568 = vmatpush.bf16.xpose.msra.mxu0 0
        %1569 = vmatpush.bf16.xpose.msra.mxu0 0
        %1570 = vmatpush.bf16.xpose.msra.mxu0 %v1561
        %1571 = vmatmul.bf16.gmra.mxu0 %v1558
        %v1572 = vpop.f32.mrf.mxu0
        %v1573 = vadd.f32 %v1549, %v1572
        %v1574 = vpop.f32.mrf.mxu0
        %1575 = vdwg.mxu0
        %v1576 = vadd.f32 %v1573, %v1527
        %v1577 = vsel %vm1216, %v1576, -inf
        %1578 = vmax.xlane.f32.xlu0 %v1577
        %v1579 = vpop.xlane.xlu0 %1578
        %v1580 = vsub.f32 %v1576, %v1579
        %v1581 = vmul.f32 %v1580, 1.442695
        %v1582 = vpow.pop %v1581
        %v1583 = vsel %vm1216, %v1582, 0.0
        %1584 = vadd.xlane.f32.xlu0 %v1583
        %v1585 = vpop.xlane.xlu0 %1584
        %v1586 = vrcp.pop %v1585
        %v1587 = vmul.f32 %v1582, %v1586
        %v1588 = vmul.f32 %v1587, 0.25
        %1589 = vst.msk [vmem:[%s811] sm:$0xff] %vm1216, %v1588
        %v1590 = vpack.c.bf16 %v1587, %v1587
        %v1593 = vunpack.c.l.b16 %v1516
        %v1594 = vunpack.c.l.b16 %v1517
        %v1595 = vpack.c.b16 %v1594, %v1593
        %1596 = vrot.lane.b32.xlu0 %v1595, 96
        %v1597 = vpop.permute.xlu0 %1596
        %v1600 = vsel %vm1216, %v1590, 0
        %1602 = vmatpush.bf16.msra.mxu0 0
        %1603 = vmatpush.bf16.msra.mxu0 0
        %1604 = vmatpush.bf16.msra.mxu0 0
        %1605 = vmatpush.bf16.msra.mxu0 0
        %1606 = vmatpush.bf16.msra.mxu0 0
        %1607 = vmatpush.bf16.msra.mxu0 0
        %1608 = vmatpush.bf16.msra.mxu0 0
        %1609 = vmatpush.bf16.msra.mxu0 %v1597
        %1610 = vmatmul.bf16.gmra.mxu0 %v1600
        %v1611 = vpop.f32.mrf.mxu0
        %v1612 = vadd.f32 0.0, %v1611
        %v1613 = vpop.f32.mrf.mxu0
        %1614 = vdwg.mxu0
        %v1616 = vunpack.c.l.b16 %v1474
        %v1617 = vpack.c.b16 %v1616, %v1616
        %1618 = vrot.lane.b32.xlu0 %v1617, 120
        %v1619 = vpop.permute.xlu0 %1618
        %1620 = vrot.lane.b32.xlu0 %v1532, 120
        %v1621 = vpop.permute.xlu0 %1620
        %v1623 = vsel %vm975, %v1619, 0
        %v1626 = vsel %vm975, %v1621, 0
        %1628 = vmatpush.bf16.xpose.msra.mxu0 0
        %1629 = vmatpush.bf16.xpose.msra.mxu0 0
        %1630 = vmatpush.bf16.xpose.msra.mxu0 0
        %1631 = vmatpush.bf16.xpose.msra.mxu0 0
        %1632 = vmatpush.bf16.xpose.msra.mxu0 0
        %1633 = vmatpush.bf16.xpose.msra.mxu0 0
        %1634 = vmatpush.bf16.xpose.msra.mxu0 0
        %1635 = vmatpush.bf16.xpose.msra.mxu0 %v1626
        %1636 = vmatmul.bf16.gmra.mxu0 %v1623
        %v1637 = vpop.f32.mrf.mxu0
        %v1638 = vadd.f32 0.0, %v1637
        %v1639 = vpop.f32.mrf.mxu0
        %1640 = vdwg.mxu0
        %v1642 = vunpack.c.l.b16 %v1509
        %v1643 = vpack.c.b16 %v1642, %v1642
        %1644 = vrot.lane.b32.xlu0 %v1643, 120
        %v1645 = vpop.permute.xlu0 %1644
        %1646 = vrot.lane.b32.xlu0 %v1556, 120
        %v1647 = vpop.permute.xlu0 %1646
        %v1649 = vsel %vm975, %v1645, 0
        %v1652 = vsel %vm975, %v1647, 0
        %1654 = vmatpush.bf16.xpose.msra.mxu0 0
        %1655 = vmatpush.bf16.xpose.msra.mxu0 0
        %1656 = vmatpush.bf16.xpose.msra.mxu0 0
        %1657 = vmatpush.bf16.xpose.msra.mxu0 0
        %1658 = vmatpush.bf16.xpose.msra.mxu0 0
        %1659 = vmatpush.bf16.xpose.msra.mxu0 0
        %1660 = vmatpush.bf16.xpose.msra.mxu0 0
        %1661 = vmatpush.bf16.xpose.msra.mxu0 %v1652
        %1662 = vmatmul.bf16.gmra.mxu0 %v1649
        %v1663 = vpop.f32.mrf.mxu0
        %v1664 = vadd.f32 %v1638, %v1663
        %v1665 = vpop.f32.mrf.mxu0
        %1666 = vdwg.mxu0
        %v1667 = vadd.f32 %v1664, %v1527
        %v1668 = vsel %vm1216, %v1667, -inf
        %1669 = vmax.xlane.f32.xlu0 %v1668
        %v1670 = vpop.xlane.xlu0 %1669
        %v1671 = vsub.f32 %v1667, %v1670
        %v1672 = vmul.f32 %v1671, 1.442695
        %v1673 = vpow.pop %v1672
        %v1674 = vsel %vm1216, %v1673, 0.0
        %1675 = vadd.xlane.f32.xlu0 %v1674
        %v1676 = vpop.xlane.xlu0 %1675
        %v1677 = vrcp.pop %v1676
        %v1678 = vmul.f32 %v1673, %v1677
        %v1679 = vmul.f32 %v1678, 0.25
        %v1680 = vld [vmem:[%s811] sm:$0xff]
        %v1681 = vadd.f32 %v1680, %v1679
        %1682 = vst.msk [vmem:[%s811] sm:$0xff] %vm1216, %v1681
        %v1683 = vpack.c.bf16 %v1678, %v1678
        %1684 = vrot.lane.b32.xlu0 %v1595, 88
        %v1685 = vpop.permute.xlu0 %1684
        %v1688 = vsel %vm1216, %v1683, 0
        %1690 = vmatpush.bf16.msra.mxu0 0
        %1691 = vmatpush.bf16.msra.mxu0 0
        %1692 = vmatpush.bf16.msra.mxu0 0
        %1693 = vmatpush.bf16.msra.mxu0 0
        %1694 = vmatpush.bf16.msra.mxu0 0
        %1695 = vmatpush.bf16.msra.mxu0 0
        %1696 = vmatpush.bf16.msra.mxu0 0
        %1697 = vmatpush.bf16.msra.mxu0 %v1685
        %1698 = vmatmul.bf16.gmra.mxu0 %v1688
        %v1699 = vpop.f32.mrf.mxu0
        %v1700 = vadd.f32 0.0, %v1699
        %v1701 = vpop.f32.mrf.mxu0
        %1702 = vdwg.mxu0
        %1703 = vrot.lane.b32.xlu0 %v1617, 112
        %v1704 = vpop.permute.xlu0 %1703
        %1705 = vrot.lane.b32.xlu0 %v1532, 112
        %v1706 = vpop.permute.xlu0 %1705
        %v1708 = vsel %vm975, %v1704, 0
        %v1711 = vsel %vm975, %v1706, 0
        %1713 = vmatpush.bf16.xpose.msra.mxu0 0
        %1714 = vmatpush.bf16.xpose.msra.mxu0 0
        %1715 = vmatpush.bf16.xpose.msra.mxu0 0
        %1716 = vmatpush.bf16.xpose.msra.mxu0 0
        %1717 = vmatpush.bf16.xpose.msra.mxu0 0
        %1718 = vmatpush.bf16.xpose.msra.mxu0 0
        %1719 = vmatpush.bf16.xpose.msra.mxu0 0
        %1720 = vmatpush.bf16.xpose.msra.mxu0 %v1711
        %1721 = vmatmul.bf16.gmra.mxu0 %v1708
        %v1722 = vpop.f32.mrf.mxu0
        %v1723 = vadd.f32 0.0, %v1722
        %v1724 = vpop.f32.mrf.mxu0
        %1725 = vdwg.mxu0
        %1726 = vrot.lane.b32.xlu0 %v1643, 112
        %v1727 = vpop.permute.xlu0 %1726
        %1728 = vrot.lane.b32.xlu0 %v1556, 112
        %v1729 = vpop.permute.xlu0 %1728
        %v1731 = vsel %vm975, %v1727, 0
        %v1734 = vsel %vm975, %v1729, 0
        %1736 = vmatpush.bf16.xpose.msra.mxu0 0
        %1737 = vmatpush.bf16.xpose.msra.mxu0 0
        %1738 = vmatpush.bf16.xpose.msra.mxu0 0
        %1739 = vmatpush.bf16.xpose.msra.mxu0 0
        %1740 = vmatpush.bf16.xpose.msra.mxu0 0
        %1741 = vmatpush.bf16.xpose.msra.mxu0 0
        %1742 = vmatpush.bf16.xpose.msra.mxu0 0
        %1743 = vmatpush.bf16.xpose.msra.mxu0 %v1734
        %1744 = vmatmul.bf16.gmra.mxu0 %v1731
        %v1745 = vpop.f32.mrf.mxu0
        %v1746 = vadd.f32 %v1723, %v1745
        %v1747 = vpop.f32.mrf.mxu0
        %1748 = vdwg.mxu0
        %v1749 = vadd.f32 %v1746, %v1527
        %v1750 = vsel %vm1216, %v1749, -inf
        %1751 = vmax.xlane.f32.xlu0 %v1750
        %v1752 = vpop.xlane.xlu0 %1751
        %v1753 = vsub.f32 %v1749, %v1752
        %v1754 = vmul.f32 %v1753, 1.442695
        %v1755 = vpow.pop %v1754
        %v1756 = vsel %vm1216, %v1755, 0.0
        %1757 = vadd.xlane.f32.xlu0 %v1756
        %v1758 = vpop.xlane.xlu0 %1757
        %v1759 = vrcp.pop %v1758
        %v1760 = vmul.f32 %v1755, %v1759
        %v1761 = vmul.f32 %v1760, 0.25
        %v1762 = vld [vmem:[%s811] sm:$0xff]
        %v1763 = vadd.f32 %v1762, %v1761
        %1764 = vst.msk [vmem:[%s811] sm:$0xff] %vm1216, %v1763
        %v1765 = vpack.c.bf16 %v1760, %v1760
        %1766 = vrot.lane.b32.xlu0 %v1595, 80
        %v1767 = vpop.permute.xlu0 %1766
        %v1770 = vsel %vm1216, %v1765, 0
        %1772 = vmatpush.bf16.msra.mxu0 0
        %1773 = vmatpush.bf16.msra.mxu0 0
        %1774 = vmatpush.bf16.msra.mxu0 0
        %1775 = vmatpush.bf16.msra.mxu0 0
        %1776 = vmatpush.bf16.msra.mxu0 0
        %1777 = vmatpush.bf16.msra.mxu0 0
        %1778 = vmatpush.bf16.msra.mxu0 0
        %1779 = vmatpush.bf16.msra.mxu0 %v1767
        %1780 = vmatmul.bf16.gmra.mxu0 %v1770
        %v1781 = vpop.f32.mrf.mxu0
        %v1782 = vadd.f32 0.0, %v1781
        %v1783 = vpop.f32.mrf.mxu0
        %1784 = vdwg.mxu0
        %1785 = vrot.lane.b32.xlu0 %v1617, 104
        %v1786 = vpop.permute.xlu0 %1785
        %1787 = vrot.lane.b32.xlu0 %v1532, 104
        %v1788 = vpop.permute.xlu0 %1787
        %v1790 = vsel %vm975, %v1786, 0
        %v1793 = vsel %vm975, %v1788, 0
        %1795 = vmatpush.bf16.xpose.msra.mxu0 0
        %1796 = vmatpush.bf16.xpose.msra.mxu0 0
        %1797 = vmatpush.bf16.xpose.msra.mxu0 0
        %1798 = vmatpush.bf16.xpose.msra.mxu0 0
        %1799 = vmatpush.bf16.xpose.msra.mxu0 0
        %1800 = vmatpush.bf16.xpose.msra.mxu0 0
        %1801 = vmatpush.bf16.xpose.msra.mxu0 0
        %1802 = vmatpush.bf16.xpose.msra.mxu0 %v1793
        %1803 = vmatmul.bf16.gmra.mxu0 %v1790
        %v1804 = vpop.f32.mrf.mxu0
        %v1805 = vadd.f32 0.0, %v1804
        %v1806 = vpop.f32.mrf.mxu0
        %1807 = vdwg.mxu0
        %1808 = vrot.lane.b32.xlu0 %v1643, 104
        %v1809 = vpop.permute.xlu0 %1808
        %1810 = vrot.lane.b32.xlu0 %v1556, 104
        %v1811 = vpop.permute.xlu0 %1810
        %v1813 = vsel %vm975, %v1809, 0
        %v1816 = vsel %vm975, %v1811, 0
        %1818 = vmatpush.bf16.xpose.msra.mxu0 0
        %1819 = vmatpush.bf16.xpose.msra.mxu0 0
        %1820 = vmatpush.bf16.xpose.msra.mxu0 0
        %1821 = vmatpush.bf16.xpose.msra.mxu0 0
        %1822 = vmatpush.bf16.xpose.msra.mxu0 0
        %1823 = vmatpush.bf16.xpose.msra.mxu0 0
        %1824 = vmatpush.bf16.xpose.msra.mxu0 0
        %1825 = vmatpush.bf16.xpose.msra.mxu0 %v1816
        %1826 = vmatmul.bf16.gmra.mxu0 %v1813
        %v1827 = vpop.f32.mrf.mxu0
        %v1828 = vadd.f32 %v1805, %v1827
        %v1829 = vpop.f32.mrf.mxu0
        %1830 = vdwg.mxu0
        %v1831 = vadd.f32 %v1828, %v1527
        %v1832 = vsel %vm1216, %v1831, -inf
        %1833 = vmax.xlane.f32.xlu0 %v1832
        %v1834 = vpop.xlane.xlu0 %1833
        %v1835 = vsub.f32 %v1831, %v1834
        %v1836 = vmul.f32 %v1835, 1.442695
        %v1837 = vpow.pop %v1836
        %v1838 = vsel %vm1216, %v1837, 0.0
        %1839 = vadd.xlane.f32.xlu0 %v1838
        %v1840 = vpop.xlane.xlu0 %1839
        %v1841 = vrcp.pop %v1840
        %v1842 = vmul.f32 %v1837, %v1841
        %v1843 = vmul.f32 %v1842, 0.25
        %v1844 = vld [vmem:[%s811] sm:$0xff]
        %v1845 = vadd.f32 %v1844, %v1843
        %1846 = vst.msk [vmem:[%s811] sm:$0xff] %vm1216, %v1845
        %v1847 = vpack.c.bf16 %v1842, %v1842
        %1848 = vrot.lane.b32.xlu0 %v1595, 72
        %v1849 = vpop.permute.xlu0 %1848
        %v1852 = vsel %vm1216, %v1847, 0
        %1854 = vmatpush.bf16.msra.mxu0 0
        %1855 = vmatpush.bf16.msra.mxu0 0
        %1856 = vmatpush.bf16.msra.mxu0 0
        %1857 = vmatpush.bf16.msra.mxu0 0
        %1858 = vmatpush.bf16.msra.mxu0 0
        %1859 = vmatpush.bf16.msra.mxu0 0
        %1860 = vmatpush.bf16.msra.mxu0 0
        %1861 = vmatpush.bf16.msra.mxu0 %v1849
        %1862 = vmatmul.bf16.gmra.mxu0 %v1852
        %v1863 = vpop.f32.mrf.mxu0
        %v1864 = vadd.f32 0.0, %v1863
        %v1865 = vpop.f32.mrf.mxu0
        %1866 = vdwg.mxu0
        %1868 = vrot.lane.b32.xlu0 %v1700, 8
        %v1869 = vpop.permute.xlu0 %1868
        %1872 = vrot.lane.b32.xlu0 %v1782, 16
        %v1873 = vpop.permute.xlu0 %1872
        %1876 = vrot.lane.b32.xlu0 %v1864, 24
        %v1877 = vpop.permute.xlu0 %1876
        %v1879 = vsel %vm975, %v1612, %v1869
        %v1880 = vsel %vm1216, %v1879, %v1873
        %v1881 = vsel %vm1218, %v1880, %v1877
        %1883 = vset.pattern.permute.xlu0 0
        %1884 = vperm.xlu0 %1883, %v967
        %v1885 = vpop.permute.xlu0 %1884
        %v1887 = vmul.f32 %v1885, %v1881
        %v1888 = vadd.f32 %v1887, 0.0
        %v1890 = vsel %vm975, %v1521, 0
        %1892 = vmatpush.bf16.xpose.msra.mxu0 0
        %1893 = vmatpush.bf16.xpose.msra.mxu0 0
        %1894 = vmatpush.bf16.xpose.msra.mxu0 0
        %1895 = vmatpush.bf16.xpose.msra.mxu0 0
        %1896 = vmatpush.bf16.xpose.msra.mxu0 0
        %1897 = vmatpush.bf16.xpose.msra.mxu0 0
        %1898 = vmatpush.bf16.xpose.msra.mxu0 0
        %1899 = vmatpush.bf16.xpose.msra.mxu0 %v1890
        %1900 = vmatmul.bf16.gmra.mxu0 %v1534
        %v1901 = vpop.f32.mrf.mxu0
        %v1902 = vadd.f32 0.0, %v1901
        %v1903 = vpop.f32.mrf.mxu0
        %1904 = vdwg.mxu0
        %v1906 = vsel %vm975, %v1515, 0
        %1908 = vmatpush.bf16.xpose.msra.mxu0 0
        %1909 = vmatpush.bf16.xpose.msra.mxu0 0
        %1910 = vmatpush.bf16.xpose.msra.mxu0 0
        %1911 = vmatpush.bf16.xpose.msra.mxu0 0
        %1912 = vmatpush.bf16.xpose.msra.mxu0 0
        %1913 = vmatpush.bf16.xpose.msra.mxu0 0
        %1914 = vmatpush.bf16.xpose.msra.mxu0 0
        %1915 = vmatpush.bf16.xpose.msra.mxu0 %v1906
        %1916 = vmatmul.bf16.gmra.mxu0 %v1558
        %v1917 = vpop.f32.mrf.mxu0
        %v1918 = vadd.f32 %v1902, %v1917
        %v1919 = vpop.f32.mrf.mxu0
        %1920 = vdwg.mxu0
        %1922 = vrot.lane.b32.xlu0 %v1527, 112
        %v1923 = vpop.permute.xlu0 %1922
        %v1925 = vadd.f32 %v1918, %v1923
        %v1926 = vsel %vm975, %v1925, -inf
        %1927 = vmax.xlane.f32.xlu0 %v1926
        %v1928 = vpop.xlane.xlu0 %1927
        %v1929 = vsub.f32 %v1925, %v1928
        %v1930 = vmul.f32 %v1929, 1.442695
        %v1931 = vpow.pop %v1930
        %v1932 = vsel %vm975, %v1931, 0.0
        %1933 = vadd.xlane.f32.xlu0 %v1932
        %v1934 = vpop.xlane.xlu0 %1933
        %v1935 = vrcp.pop %v1934
        %v1936 = vmul.f32 %v1931, %v1935
        %v1937 = vpack.c.bf16 %v1936, %v1936
        %v1939 = vunpack.c.l.b16 %v1518
        %v1940 = vpack.c.b16 %v1939, %v1939
        %1941 = vrot.lane.b32.xlu0 %v1940, 96
        %v1942 = vpop.permute.xlu0 %1941
        %v1944 = vsel %vm975, %v1937, 0
        %v1947 = vsel %vm1015, %v1942, 0
        %1949 = vmatpush.bf16.msra.mxu0 0
        %1950 = vmatpush.bf16.msra.mxu0 0
        %1951 = vmatpush.bf16.msra.mxu0 0
        %1952 = vmatpush.bf16.msra.mxu0 0
        %1953 = vmatpush.bf16.msra.mxu0 0
        %1954 = vmatpush.bf16.msra.mxu0 0
        %1955 = vmatpush.bf16.msra.mxu0 0
        %1956 = vmatpush.bf16.msra.mxu0 %v1947
        %1957 = vmatmul.bf16.gmra.mxu0 %v1944
        %v1958 = vpop.f32.mrf.mxu0
        %v1959 = vadd.f32 0.0, %v1958
        %v1960 = vpop.f32.mrf.mxu0
        %1961 = vdwg.mxu0
        %v1963 = vunpack.c.l.b16 %v1521
        %v1964 = vpack.c.b16 %v1963, %v1963
        %1965 = vrot.lane.b32.xlu0 %v1964, 120
        %v1966 = vpop.permute.xlu0 %1965
        %v1968 = vsel %vm975, %v1966, 0
        %1970 = vmatpush.bf16.xpose.msra.mxu0 0
        %1971 = vmatpush.bf16.xpose.msra.mxu0 0
        %1972 = vmatpush.bf16.xpose.msra.mxu0 0
        %1973 = vmatpush.bf16.xpose.msra.mxu0 0
        %1974 = vmatpush.bf16.xpose.msra.mxu0 0
        %1975 = vmatpush.bf16.xpose.msra.mxu0 0
        %1976 = vmatpush.bf16.xpose.msra.mxu0 0
        %1977 = vmatpush.bf16.xpose.msra.mxu0 %v1968
        %1978 = vmatmul.bf16.gmra.mxu0 %v1623
        %v1979 = vpop.f32.mrf.mxu0
        %v1980 = vadd.f32 0.0, %v1979
        %v1981 = vpop.f32.mrf.mxu0
        %1982 = vdwg.mxu0
        %v1984 = vunpack.c.l.b16 %v1515
        %v1985 = vpack.c.b16 %v1984, %v1984
        %1986 = vrot.lane.b32.xlu0 %v1985, 120
        %v1987 = vpop.permute.xlu0 %1986
        %v1989 = vsel %vm975, %v1987, 0
        %1991 = vmatpush.bf16.xpose.msra.mxu0 0
        %1992 = vmatpush.bf16.xpose.msra.mxu0 0
        %1993 = vmatpush.bf16.xpose.msra.mxu0 0
        %1994 = vmatpush.bf16.xpose.msra.mxu0 0
        %1995 = vmatpush.bf16.xpose.msra.mxu0 0
        %1996 = vmatpush.bf16.xpose.msra.mxu0 0
        %1997 = vmatpush.bf16.xpose.msra.mxu0 0
        %1998 = vmatpush.bf16.xpose.msra.mxu0 %v1989
        %1999 = vmatmul.bf16.gmra.mxu0 %v1649
        %v2000 = vpop.f32.mrf.mxu0
        %v2001 = vadd.f32 %v1980, %v2000
        %v2002 = vpop.f32.mrf.mxu0
        %2003 = vdwg.mxu0
        %v2004 = vadd.f32 %v2001, %v1923
        %v2005 = vsel %vm975, %v2004, -inf
        %2006 = vmax.xlane.f32.xlu0 %v2005
        %v2007 = vpop.xlane.xlu0 %2006
        %v2008 = vsub.f32 %v2004, %v2007
        %v2009 = vmul.f32 %v2008, 1.442695
        %v2010 = vpow.pop %v2009
        %v2011 = vsel %vm975, %v2010, 0.0
        %2012 = vadd.xlane.f32.xlu0 %v2011
        %v2013 = vpop.xlane.xlu0 %2012
        %v2014 = vrcp.pop %v2013
        %v2015 = vmul.f32 %v2010, %v2014
        %v2016 = vpack.c.bf16 %v2015, %v2015
        %2017 = vrot.lane.b32.xlu0 %v1940, 88
        %v2018 = vpop.permute.xlu0 %2017
        %v2020 = vsel %vm975, %v2016, 0
        %v2023 = vsel %vm1015, %v2018, 0
        %2025 = vmatpush.bf16.msra.mxu0 0
        %2026 = vmatpush.bf16.msra.mxu0 0
        %2027 = vmatpush.bf16.msra.mxu0 0
        %2028 = vmatpush.bf16.msra.mxu0 0
        %2029 = vmatpush.bf16.msra.mxu0 0
        %2030 = vmatpush.bf16.msra.mxu0 0
        %2031 = vmatpush.bf16.msra.mxu0 0
        %2032 = vmatpush.bf16.msra.mxu0 %v2023
        %2033 = vmatmul.bf16.gmra.mxu0 %v2020
        %v2034 = vpop.f32.mrf.mxu0
        %v2035 = vadd.f32 0.0, %v2034
        %v2036 = vpop.f32.mrf.mxu0
        %2037 = vdwg.mxu0
        %2038 = vrot.lane.b32.xlu0 %v1964, 112
        %v2039 = vpop.permute.xlu0 %2038
        %v2041 = vsel %vm975, %v2039, 0
        %2043 = vmatpush.bf16.xpose.msra.mxu0 0
        %2044 = vmatpush.bf16.xpose.msra.mxu0 0
        %2045 = vmatpush.bf16.xpose.msra.mxu0 0
        %2046 = vmatpush.bf16.xpose.msra.mxu0 0
        %2047 = vmatpush.bf16.xpose.msra.mxu0 0
        %2048 = vmatpush.bf16.xpose.msra.mxu0 0
        %2049 = vmatpush.bf16.xpose.msra.mxu0 0
        %2050 = vmatpush.bf16.xpose.msra.mxu0 %v2041
        %2051 = vmatmul.bf16.gmra.mxu0 %v1708
        %v2052 = vpop.f32.mrf.mxu0
        %v2053 = vadd.f32 0.0, %v2052
        %v2054 = vpop.f32.mrf.mxu0
        %2055 = vdwg.mxu0
        %2056 = vrot.lane.b32.xlu0 %v1985, 112
        %v2057 = vpop.permute.xlu0 %2056
        %v2059 = vsel %vm975, %v2057, 0
        %2061 = vmatpush.bf16.xpose.msra.mxu0 0
        %2062 = vmatpush.bf16.xpose.msra.mxu0 0
        %2063 = vmatpush.bf16.xpose.msra.mxu0 0
        %2064 = vmatpush.bf16.xpose.msra.mxu0 0
        %2065 = vmatpush.bf16.xpose.msra.mxu0 0
        %2066 = vmatpush.bf16.xpose.msra.mxu0 0
        %2067 = vmatpush.bf16.xpose.msra.mxu0 0
        %2068 = vmatpush.bf16.xpose.msra.mxu0 %v2059
        %2069 = vmatmul.bf16.gmra.mxu0 %v1731
        %v2070 = vpop.f32.mrf.mxu0
        %v2071 = vadd.f32 %v2053, %v2070
        %v2072 = vpop.f32.mrf.mxu0
        %2073 = vdwg.mxu0
        %v2074 = vadd.f32 %v2071, %v1923
        %v2075 = vsel %vm975, %v2074, -inf
        %2076 = vmax.xlane.f32.xlu0 %v2075
        %v2077 = vpop.xlane.xlu0 %2076
        %v2078 = vsub.f32 %v2074, %v2077
        %v2079 = vmul.f32 %v2078, 1.442695
        %v2080 = vpow.pop %v2079
        %v2081 = vsel %vm975, %v2080, 0.0
        %2082 = vadd.xlane.f32.xlu0 %v2081
        %v2083 = vpop.xlane.xlu0 %2082
        %v2084 = vrcp.pop %v2083
        %v2085 = vmul.f32 %v2080, %v2084
        %v2086 = vpack.c.bf16 %v2085, %v2085
        %2087 = vrot.lane.b32.xlu0 %v1940, 80
        %v2088 = vpop.permute.xlu0 %2087
        %v2090 = vsel %vm975, %v2086, 0
        %v2093 = vsel %vm1015, %v2088, 0
        %2095 = vmatpush.bf16.msra.mxu0 0
        %2096 = vmatpush.bf16.msra.mxu0 0
        %2097 = vmatpush.bf16.msra.mxu0 0
        %2098 = vmatpush.bf16.msra.mxu0 0
        %2099 = vmatpush.bf16.msra.mxu0 0
        %2100 = vmatpush.bf16.msra.mxu0 0
        %2101 = vmatpush.bf16.msra.mxu0 0
        %2102 = vmatpush.bf16.msra.mxu0 %v2093
        %2103 = vmatmul.bf16.gmra.mxu0 %v2090
        %v2104 = vpop.f32.mrf.mxu0
        %v2105 = vadd.f32 0.0, %v2104
        %v2106 = vpop.f32.mrf.mxu0
        %2107 = vdwg.mxu0
        %2108 = vrot.lane.b32.xlu0 %v1964, 104
        %v2109 = vpop.permute.xlu0 %2108
        %v2111 = vsel %vm975, %v2109, 0
        %2113 = vmatpush.bf16.xpose.msra.mxu0 0
        %2114 = vmatpush.bf16.xpose.msra.mxu0 0
        %2115 = vmatpush.bf16.xpose.msra.mxu0 0
        %2116 = vmatpush.bf16.xpose.msra.mxu0 0
        %2117 = vmatpush.bf16.xpose.msra.mxu0 0
        %2118 = vmatpush.bf16.xpose.msra.mxu0 0
        %2119 = vmatpush.bf16.xpose.msra.mxu0 0
        %2120 = vmatpush.bf16.xpose.msra.mxu0 %v2111
        %2121 = vmatmul.bf16.gmra.mxu0 %v1790
        %v2122 = vpop.f32.mrf.mxu0
        %v2123 = vadd.f32 0.0, %v2122
        %v2124 = vpop.f32.mrf.mxu0
        %2125 = vdwg.mxu0
        %2126 = vrot.lane.b32.xlu0 %v1985, 104
        %v2127 = vpop.permute.xlu0 %2126
        %v2129 = vsel %vm975, %v2127, 0
        %2131 = vmatpush.bf16.xpose.msra.mxu0 0
        %2132 = vmatpush.bf16.xpose.msra.mxu0 0
        %2133 = vmatpush.bf16.xpose.msra.mxu0 0
        %2134 = vmatpush.bf16.xpose.msra.mxu0 0
        %2135 = vmatpush.bf16.xpose.msra.mxu0 0
        %2136 = vmatpush.bf16.xpose.msra.mxu0 0
        %2137 = vmatpush.bf16.xpose.msra.mxu0 0
        %2138 = vmatpush.bf16.xpose.msra.mxu0 %v2129
        %2139 = vmatmul.bf16.gmra.mxu0 %v1813
        %v2140 = vpop.f32.mrf.mxu0
        %v2141 = vadd.f32 %v2123, %v2140
        %v2142 = vpop.f32.mrf.mxu0
        %2143 = vdwg.mxu0
        %v2144 = vadd.f32 %v2141, %v1923
        %v2145 = vsel %vm975, %v2144, -inf
        %2146 = vmax.xlane.f32.xlu0 %v2145
        %v2147 = vpop.xlane.xlu0 %2146
        %v2148 = vsub.f32 %v2144, %v2147
        %v2149 = vmul.f32 %v2148, 1.442695
        %v2150 = vpow.pop %v2149
        %v2151 = vsel %vm975, %v2150, 0.0
        %2152 = vadd.xlane.f32.xlu0 %v2151
        %v2153 = vpop.xlane.xlu0 %2152
        %v2154 = vrcp.pop %v2153
        %v2155 = vmul.f32 %v2150, %v2154
        %v2156 = vpack.c.bf16 %v2155, %v2155
        %2157 = vrot.lane.b32.xlu0 %v1940, 72
        %v2158 = vpop.permute.xlu0 %2157
        %v2160 = vsel %vm975, %v2156, 0
        %v2163 = vsel %vm1015, %v2158, 0
        %2165 = vmatpush.bf16.msra.mxu0 0
        %2166 = vmatpush.bf16.msra.mxu0 0
        %2167 = vmatpush.bf16.msra.mxu0 0
        %2168 = vmatpush.bf16.msra.mxu0 0
        %2169 = vmatpush.bf16.msra.mxu0 0
        %2170 = vmatpush.bf16.msra.mxu0 0
        %2171 = vmatpush.bf16.msra.mxu0 0
        %2172 = vmatpush.bf16.msra.mxu0 %v2163
        %2173 = vmatmul.bf16.gmra.mxu0 %v2160
        %v2174 = vpop.f32.mrf.mxu0
        %v2175 = vadd.f32 0.0, %v2174
        %v2176 = vpop.f32.mrf.mxu0
        %2177 = vdwg.mxu0
        %2179 = vrot.lane.b32.xlu0 %v2035, 8
        %v2180 = vpop.permute.xlu0 %2179
        %2183 = vrot.lane.b32.xlu0 %v2105, 16
        %v2184 = vpop.permute.xlu0 %2183
        %2187 = vrot.lane.b32.xlu0 %v2175, 24
        %v2188 = vpop.permute.xlu0 %2187
        %v2190 = vsel %vm975, %v1959, %v2180
        %v2191 = vsel %vm1216, %v2190, %v2184
        %v2192 = vsel %vm1218, %v2191, %v2188
        %2193 = vset.pattern.permute.xlu0 1
        %2194 = vperm.xlu0 %2193, %v967
        %v2195 = vpop.permute.xlu0 %2194
        %v2197 = vmul.f32 %v2195, %v2192
        %v2198 = vadd.f32 %v1888, %v2197
        %s2199 = scalar_lea.vmem %s7, 80
        %v2200 = vld [vmem:[%s2199] sm:$0xf]
        %v2201 = vld [vmem:[%s2199 + $0x4] sm:$0xf]
        %v2202 = vld [vmem:[%s2199 + $0x8] sm:$0xf]
        %v2203 = vld [vmem:[%s2199 + $0xc] sm:$0xf]
        %v2204 = vpack.c.bf16 %v2198, %v2198
        %v2205 = vld [vmem:[%s8 + $0x5] sm:$0x1]
        %v2206 = vperm.slane %v2205, 0
        %v2211 = vunpack.c.l.b16 %v2200
        %v2212 = vunpack.c.l.b16 %v2201
        %v2213 = vunpack.c.l.b16 %v2202
        %v2214 = vunpack.c.l.b16 %v2203
        %v2215 = vpack.c.b16 %v2212, %v2211
        %v2216 = vpack.c.b16 %v2214, %v2213
        %v2220 = vsel %vm864, %v2204, 0
        %2222 = vmatpush.bf16.msra.mxu0 0
        %2223 = vmatpush.bf16.msra.mxu0 0
        %2224 = vmatpush.bf16.msra.mxu0 0
        %2225 = vmatpush.bf16.msra.mxu0 0
        %2226 = vmatpush.bf16.msra.mxu0 0
        %2227 = vmatpush.bf16.msra.mxu0 0
        %2228 = vmatpush.bf16.msra.mxu0 %v2216
        %2229 = vmatpush.bf16.msra.mxu0 %v2215
        %2230 = vmatmul.bf16.gmra.mxu0 %v2220
        %v2231 = vpop.f32.mrf.mxu0
        %v2232 = vadd.f32 %v2206, %v2231
        %v2233 = vpop.f32.mrf.mxu0
        %2234 = vdwg.mxu0
        %v2235 = vadd.f32 %v1291, %v2232
        %v2236 = vsel %vm864, %v2235, 0.0
        %2237 = vadd.xlane.f32.xlu0 %v2236
        %v2238 = vpop.xlane.xlu0 %2237
        %v2239 = vmul.f32 %v2238, %v1266
        %v2240 = vsub.f32 %v2235, %v2239
        %v2241 = vmul.f32 %v2240, %v2240
        %v2242 = vsel %vm864, %v2241, 0.0
        %2243 = vadd.xlane.f32.xlu0 %v2242
        %v2244 = vpop.xlane.xlu0 %2243
        %v2245 = vmul.f32 %v2244, %v1266
        %v2246 = vadd.f32 %v2245, 1e-05
        %v2247 = vrsqrt.pop %v2246
        %v2248 = vmul.f32 %v2247, %v2246
        %v2249 = vmul.f32 %v2248, %v2247
        %v2250 = vmul.f32 0.5, %v2249
        %v2251 = vsub.f32 1.5, %v2250
        %v2252 = vmul.f32 %v2247, %v2251
        %vm2253 = vweird.f32 %v2246
        %vm2254 = vweird.f32 %v2247
        %vm2255 = vmor %vm2253, %vm2254
        %v2256 = vsel %vm2255, %v2247, %v2252
        %v2257 = vmul.f32 %v2240, %v2256
        %v2258 = vld [vmem:[%s8 + $0x9] sm:$0x1]
        %v2259 = vperm.slane %v2258, 0
        %v2260 = vmul.f32 %v2257, %v2259
        %v2261 = vld [vmem:[%s8 + $0xa] sm:$0x1]
        %v2262 = vperm.slane %v2261, 0
        %v2263 = vadd.f32 %v2260, %v2262
        %v2264 = vld [vmem:[#allocation10] sm:$0xf]
        %v2265 = vld [vmem:[#allocation10 + $0x4] sm:$0xf]
        %v2266 = vld [vmem:[#allocation10 + $0x8] sm:$0xf]
        %v2267 = vld [vmem:[#allocation10 + $0xc] sm:$0xf]
        %v2268 = vpack.c.bf16 %v2263, %v2263
        %v2269 = vld [vmem:[#allocation11] sm:$0x1]
        %v2271 = vperm.slane %v2269, 0
        %v2277 = vunpack.c.l.b16 %v2264
        %v2278 = vunpack.c.l.b16 %v2265
        %v2279 = vunpack.c.l.b16 %v2266
        %v2280 = vunpack.c.l.b16 %v2267
        %v2281 = vpack.c.b16 %v2278, %v2277
        %v2282 = vpack.c.b16 %v2280, %v2279
        %v2286 = vsel %vm864, %v2268, 0
        %2288 = vmatpush.bf16.msra.mxu0 0
        %2289 = vmatpush.bf16.msra.mxu0 0
        %2290 = vmatpush.bf16.msra.mxu0 0
        %2291 = vmatpush.bf16.msra.mxu0 0
        %2292 = vmatpush.bf16.msra.mxu0 0
        %2293 = vmatpush.bf16.msra.mxu0 0
        %2294 = vmatpush.bf16.msra.mxu0 %v2282
        %2295 = vmatpush.bf16.msra.mxu0 %v2281
        %2296 = vmatmul.bf16.gmra.mxu0 %v2286
        %v2297 = vpop.f32.mrf.mxu0
        %v2298 = vadd.f32 %v2271, %v2297
        %v2299 = vpop.f32.mrf.mxu0
        %2300 = vdwg.mxu0
        %v2301 = vmax.f32 %v2298, 0.0
        %v2302 = vld [vmem:[%s19] sm:$0xf]
        %v2303 = vld [vmem:[%s19 + $0x4] sm:$0xf]
        %v2304 = vld [vmem:[%s19 + $0x8] sm:$0xf]
        %v2305 = vld [vmem:[%s19 + $0xc] sm:$0xf]
        %v2306 = vld [vmem:[%s19 + $0x10] sm:$0xf]
        %v2307 = vld [vmem:[%s19 + $0x14] sm:$0xf]
        %v2308 = vld [vmem:[%s19 + $0x18] sm:$0xf]
        %v2309 = vld [vmem:[%s19 + $0x1c] sm:$0xf]
        %v2310 = vpack.c.bf16 %v2301, %v2301
        %v2311 = vld [vmem:[%s8 + $0x6] sm:$0x1]
        %v2312 = vperm.slane %v2311, 0
        %v2321 = vunpack.c.l.b16 %v2302
        %v2322 = vunpack.c.l.b16 %v2303
        %v2323 = vunpack.c.l.b16 %v2304
        %v2324 = vunpack.c.l.b16 %v2305
        %v2325 = vunpack.c.l.b16 %v2306
        %v2326 = vunpack.c.l.b16 %v2307
        %v2327 = vunpack.c.l.b16 %v2308
        %v2328 = vunpack.c.l.b16 %v2309
        %v2329 = vpack.c.b16 %v2322, %v2321
        %v2330 = vpack.c.b16 %v2324, %v2323
        %v2331 = vpack.c.b16 %v2326, %v2325
        %v2332 = vpack.c.b16 %v2328, %v2327
        %vm2337 = vcmask 523264
        %v2339 = vsel %vm2337, %v2310, 0
        %2341 = vmatpush.bf16.msra.mxu0 0
        %2342 = vmatpush.bf16.msra.mxu0 0
        %2343 = vmatpush.bf16.msra.mxu0 0
        %2344 = vmatpush.bf16.msra.mxu0 0
        %2345 = vmatpush.bf16.msra.mxu0 %v2332
        %2346 = vmatpush.bf16.msra.mxu0 %v2331
        %2347 = vmatpush.bf16.msra.mxu0 %v2330
        %2348 = vmatpush.bf16.msra.mxu0 %v2329
        %2349 = vmatmul.bf16.gmra.mxu0 %v2339
        %v2350 = vpop.f32.mrf.mxu0
        %v2351 = vadd.f32 %v2312, %v2350
        %v2352 = vpop.f32.mrf.mxu0
        %2353 = vdwg.mxu0
        %v2354 = vadd.f32 %v2263, %v2351
        %v2355 = vsel %vm864, %v2354, 0.0
        %2356 = vadd.xlane.f32.xlu0 %v2355
        %v2357 = vpop.xlane.xlu0 %2356
        %v2358 = vmul.f32 %v2357, %v1266
        %v2359 = vsub.f32 %v2354, %v2358
        %v2360 = vmul.f32 %v2359, %v2359
        %v2361 = vsel %vm864, %v2360, 0.0
        %2362 = vadd.xlane.f32.xlu0 %v2361
        %v2363 = vpop.xlane.xlu0 %2362
        %v2364 = vmul.f32 %v2363, %v1266
        %v2365 = vadd.f32 %v2364, 1e-05
        %v2366 = vrsqrt.pop %v2365
        %v2367 = vmul.f32 %v2366, %v2365
        %v2368 = vmul.f32 %v2367, %v2366
        %v2369 = vmul.f32 0.5, %v2368
        %v2370 = vsub.f32 1.5, %v2369
        %v2371 = vmul.f32 %v2366, %v2370
        %vm2372 = vweird.f32 %v2365
        %vm2373 = vweird.f32 %v2366
        %vm2374 = vmor %vm2372, %vm2373
        %v2375 = vsel %vm2374, %v2366, %v2371
        %v2376 = vmul.f32 %v2359, %v2375
        %v2377 = vld [vmem:[%s8 + $0xb] sm:$0x1]
        %v2378 = vperm.slane %v2377, 0
        %v2379 = vmul.f32 %v2376, %v2378
        %v2380 = vld [vmem:[%s8 + $0xc] sm:$0x1]
        %v2381 = vperm.slane %v2380, 0
        %v2382 = vadd.f32 %v2379, %v2381
        %2383 = vst.msk [vmem:[%s840] sm:$0xff] %vm864, %v2382
        %p2384 = scmp.lt.s32.totalorder %s40, 1
        %s2385 = scalar_select %p2384, %s40, 1
        %s2386 = smul.addr %s2385, 8
        %s2387 = scalar_lea.vmem %s20, %s2386
        %s2388 = sand.u32 %s524, 1
        %s2389 = scalar_lea.sflag [#allocation4], %s2388
        %s2390 = sand.u32 %s524, 1
        %s2391 = smul.addr %s2390, 8
        %s2392 = scalar_lea.vmem [#allocation13], %s2391
        // Predicated region
        $region125: #{multi_scale_decoder_layer_forward.1} parent=99 // pred_check
          %p2393 = pneg %p508
        $region126: #{multi_scale_decoder_layer_forward.1} parent=99 // pred_check_branch
          %2395 = sbr.rel (%p2393) target = $region128
        $region127: #{multi_scale_decoder_layer_forward.1} parent=99 // pred_region
          _
        $region128: #{multi_scale_decoder_layer_forward.1} parent=99 // pred_fallthru
          _
        // Predicated region
        $region129: #{multi_scale_decoder_layer_forward.1} parent=99 // pred_check
          %p2396 = pneg %p534
        $region130: #{multi_scale_decoder_layer_forward.1} parent=99 // pred_check_branch
          %2398 = sbr.rel (%p2396) target = $region132
        $region131: #{multi_scale_decoder_layer_forward.1} parent=99 // pred_region
          %2400 = vsyncadd %s2389, 0
          %s2401 = smul.addr %s40, 8
          %s2402 = scalar_lea.hbm %s21, %s2401
          %s2404 = sshll.u32 %s2392, 4
          %s2405 = int_to_ptr.vmem [resolvable:$true] %s2404
          %s2406 = sshll.u32 %s2402, 4
          %s2407 = int_to_ptr.hbm [resolvable:$true] %s2406
          %2409 = dma.vmem_to_hbm [thread:$0]  %s2405, 128, %s2407, %s2389
        $region132: #{multi_scale_decoder_layer_forward.1} parent=99 // pred_fallthru
          _
      $region100: #{multi_scale_decoder_layer_forward.1} parent=5 // pred_fallthru
        _
      %p2410 = scmp.le.s32.totalorder 2, %s35
      // Predicated region
      $region133: #{multi_scale_decoder_layer_forward.1} parent=5 // pred_check
        %p2411 = pneg %p2410
      $region134: #{multi_scale_decoder_layer_forward.1} parent=5 // pred_check_branch
        %2413 = sbr.rel (%p2411) target = $region136
      $region135: #{multi_scale_decoder_layer_forward.1} parent=5 // pred_region
        %s2414 = ssub.s32 %s35, 2
        // Predicated region
        $region137: #{multi_scale_decoder_layer_forward.1} parent=135 // pred_check
          %p2415 = pneg %p514
        $region138: #{multi_scale_decoder_layer_forward.1} parent=135 // pred_check_branch
          %2417 = sbr.rel (%p2415) target = $region140
        $region139: #{multi_scale_decoder_layer_forward.1} parent=135 // pred_region
          %p2418 = scmp.lt.s32.totalorder %s41, 1
          %s2419 = scalar_select %p2418, %s41, 1
          %s2420 = smul.addr %s2419, 8
          %s2421 = scalar_lea.vmem %s20, %s2420
        $region140: #{multi_scale_decoder_layer_forward.1} parent=135 // pred_fallthru
          _
        // Predicated region
        $region141: #{multi_scale_decoder_layer_forward.1} parent=135 // pred_check
          %p2422 = pneg %p540
        $region142: #{multi_scale_decoder_layer_forward.1} parent=135 // pred_check_branch
          %2424 = sbr.rel (%p2422) target = $region144
        $region143: #{multi_scale_decoder_layer_forward.1} parent=135 // pred_region
          %s2425 = sand.u32 %s525, 1
          %s2426 = scalar_lea.sflag [#allocation4], %s2425
          %s2427 = sand.u32 %s525, 1
          %s2428 = smul.addr %s2427, 8
          %s2429 = scalar_lea.vmem [#allocation13], %s2428
          %2431 = dma.done %s2426, 128
        $region144: #{multi_scale_decoder_layer_forward.1} parent=135 // pred_fallthru
          _
      $region136: #{multi_scale_decoder_layer_forward.1} parent=5 // pred_fallthru
        _
    $region6: #{multi_scale_decoder_layer_forward.1} parent=1 // loop_footer
      %s39 = sadd.s32 1, %s35
    $region7: #{multi_scale_decoder_layer_forward.1} parent=1 // loop_footer_branch
      %34 = sbr.rel target = $region3
    $region8: #{multi_scale_decoder_layer_forward.1} parent=1 // loop_exit
      _
    %2432 = vsyncpa [#allocation3], 1
    %s2433 = scalar_lea.sflag [#allocation3], 1
    %2434 = vsyncpa %s2433, 1
    %2435 = vsyncpa [#allocation6], 1
    %2436 = vsyncpa [#allocation9], 1
    %2437 = vsyncpa [#allocation12], 1
    %2438 = vsyncpa [#allocation4], 1
    %s2439 = scalar_lea.sflag [#allocation4], 1
    %2440 = vsyncpa %s2439, 1

</llo_original>
